<compile_context>
chip_gen: v6e
topology: v6e:2x2x1
jax: 0.10.0
libtpu: 0.0.40
codegen_flags: <defaults>
</compile_context>

<pallas_src>
import functools

import numpy as np
import jax
import jax.numpy as jnp
from jax.experimental import pallas as pl
from jax.experimental.pallas import tpu as pltpu


# ----------------- synthetic config (stands in for cfg[cfg_key]) -------------
FEAT_STRIDE   = 8
SCALES        = np.array([2, 4, 8])
PRE_NMS_TOPN  = 32
POST_NMS_TOPN = 16
NMS_THRESH    = 0.7
MIN_SIZE      = 8.0

LANE = 128            # TPU lane width; NMS candidate axis is padded to this


def generate_anchors(base_size, scales):
    """1-D 'twin' anchors, identical to R-C3D's generate_anchors."""
    base = np.array([1.0, float(base_size)]) - 1.0          # [0, base_size-1]
    l = base[1] - base[0] + 1.0
    ctr = base[0] + 0.5 * (l - 1.0)
    ls = l * scales.astype(np.float64)
    anchors = np.stack([ctr - 0.5 * (ls - 1.0), ctr + 0.5 * (ls - 1.0)], axis=1)
    return anchors.astype(np.float32)                        # (A, 2)


# --------------------------- Pallas kernel -----------------------------------
# Batched greedy 1-D NMS over score-sorted proposals + post-NMS compaction.
#   se_ref  : (B, 2, T)  sublane 0 = start, sublane 1 = end; T lanes = sorted
#                        candidates (lanes >= n_valid are zero padding).
#   out_ref : (B, 8, T)  sublane 0 = batch index, 1 = start, 2 = end of the
#                        rank-p kept proposal at lane p (zeros past the kept
#                        count / past post_n); sublanes 3..7 zero padding.
def _nms_compact_kernel(se_ref, out_ref, *, thresh, n_valid, post_n):
    B, _, T = se_ref.shape
    se = se_ref[...]                                        # single input load
    s = se[:, 0, :]                                         # (B, T)
    e = se[:, 1, :]
    l = e - s + 1.0

    lane = jax.lax.broadcasted_iota(jnp.int32, (B, T), 1)

    # ---- greedy sweep: suppression row i rebuilt on the fly (pure VPU work,
    # divide-free IoU test).  Only `supp` is loop-carried; everything else is
    # independent per step, so the unrolled schedule hides it.
    supp = jnp.zeros((B, T), jnp.float32)
    for i in range(n_valid):                                # static unroll
        s_i = s[:, i:i + 1]                                 # (B, 1) static slice
        e_i = e[:, i:i + 1]
        l_i = e_i - s_i + 1.0
        inter = jnp.maximum(0.0,
                            jnp.minimum(e, e_i) - jnp.maximum(s, s_i) + 1.0)
        # inter/union > thresh  <=>  inter > thresh*union   (union >= 1 here)
        over = (inter > thresh * (l + l_i - inter)) & (lane > i)
        row = jnp.where(over, 1.0, 0.0)                     # who i would kill
        supp_i = supp[:, i:i + 1]                           # was i itself killed?
        supp = jnp.maximum(supp, row * (1.0 - supp_i))

    valid = jnp.where(lane < n_valid, 1.0, 0.0)
    keep = (1.0 - supp) * valid                             # (B, T) in {0, 1}

    # ---- rank of every kept candidate: inclusive prefix-sum via one MXU
    # matmul against a lower-triangular constant (no cumsum primitive needed).
    ik = jax.lax.broadcasted_iota(jnp.int32, (T, T), 0)
    jk = jax.lax.broadcasted_iota(jnp.int32, (T, T), 1)
    tri = jnp.where(ik <= jk, 1.0, 0.0)                     # tri[k, j] = [k <= j]
    cum = jnp.dot(keep, tri, preferred_element_type=jnp.float32)   # (B, T)
    rank = cum - 1.0                                        # 0-based among kept
    sel = keep * jnp.where(rank < post_n, 1.0, 0.0)         # first post_n kept

    # ---- compaction: output slot p <- candidate whose rank is p
    # (one-hot build + lane reduce; empty slots stay exactly 0 as in the ref).
    p_iota = jax.lax.broadcasted_iota(jnp.int32, (B, T, T), 1).astype(jnp.float32)
    onehot = jnp.where((rank[:, None, :] == p_iota) & (sel[:, None, :] > 0.5),
                       1.0, 0.0)                            # (B, p, t)
    comp_s = jnp.sum(onehot * s[:, None, :], axis=-1)       # (B, T)
    comp_e = jnp.sum(onehot * e[:, None, :], axis=-1)

    b_row = jax.lax.broadcasted_iota(jnp.int32, (B, T), 0).astype(jnp.float32)

    pad = jnp.zeros((B, out_ref.shape[1] - 3, T), jnp.float32)
    out_ref[...] = jnp.concatenate(                         # one unmasked store
        [b_row[:, None, :], comp_s[:, None, :], comp_e[:, None, :], pad], axis=1)


# ------------------------------ wrapper ---------------------------------------
@jax.jit
def proposal_layer_forward(cls_prob, twin_pred, anchors):
    B, C2, L, H, W = twin_pred.shape
    A = anchors.shape[0]
    assert C2 == 2 * A and cls_prob.shape[1] == 2 * A
    assert H == 1 and W == 1, "anchor bookkeeping of _ProposalLayer assumes H=W=1"
    N = L * H * W * A

    # ---- repack NCLHW conv outputs into (B, N) slabs (n = l*A + a) -----------
    tp = twin_pred[:, :, :, 0, 0]                            # (B, 2A, L)
    cp = cls_prob[:, :, :, 0, 0]                             # (B, 2A, L)
    dx = jnp.transpose(tp[:, 0::2, :], (0, 2, 1)).reshape(B, N)
    dl = jnp.transpose(tp[:, 1::2, :], (0, 2, 1)).reshape(B, N)
    sc = jnp.transpose(cp[:, A:, :], (0, 2, 1)).reshape(B, N)

    # ---- shifted anchors (constant-folded by XLA) ----------------------------
    shifts = jnp.arange(L, dtype=jnp.float32) * FEAT_STRIDE
    anc = (jnp.asarray(anchors)[None, :, :] + shifts[:, None, None]).reshape(N, 2)
    anc_s = anc[:, 0][None, :]                               # (1, N)
    anc_e = anc[:, 1][None, :]

    # ---- twin_transform_inv + clip_twins + min-size filtering ----------------
    # Intentionally plain jnp (perf review item 4): this is ~B*5*N elementwise
    # flops and fuses with the repack/top_k; a pallas_call boundary + HBM round
    # trip would dominate it.
    lengths  = anc_e - anc_s + 1.0
    ctr      = anc_s + 0.5 * lengths
    pred_ctr = dx * lengths + ctr
    pred_l   = jnp.exp(dl) * lengths
    clip_max = float(L * FEAT_STRIDE - 1)
    start = jnp.clip(pred_ctr - 0.5 * pred_l, 0.0, clip_max)
    end   = jnp.clip(pred_ctr + 0.5 * pred_l, 0.0, clip_max)
    ls    = end - start + 1.0
    sc_f  = jnp.where(ls < MIN_SIZE, 0.0, sc)                # scores[no_keep] = 0

    # ---- descending sort, truncated to what NMS actually consumes ------------
    # TODO(synk): sort / top-k stays in XLA -- no clean Pallas TPU sort primitive.
    if PRE_NMS_TOPN > 0 and PRE_NMS_TOPN < B * N:
        t_eff = min(PRE_NMS_TOPN, N)
    else:
        t_eff = N
    T_pad = max(LANE, ((t_eff + LANE - 1) // LANE) * LANE)
    assert POST_NMS_TOPN <= T_pad
    _, order = jax.lax.top_k(sc_f, t_eff)                    # (B, t_eff)
    s_sorted = jnp.take_along_axis(start, order, axis=1)     # (B, t_eff)
    e_sorted = jnp.take_along_axis(end, order, axis=1)

    se = jnp.stack([s_sorted, e_sorted], axis=1)             # (B, 2, t_eff)
    se = jnp.pad(se, ((0, 0), (0, 0), (0, T_pad - t_eff)))   # lane-pad to 128

    # ---- single pallas_call: batched greedy NMS + in-kernel compaction -------
    out = pl.pallas_call(
        functools.partial(_nms_compact_kernel, thresh=float(NMS_THRESH),
                          n_valid=t_eff, post_n=POST_NMS_TOPN),
        grid=(1,),
        in_specs=[pl.BlockSpec((B, 2, T_pad), lambda i: (0, 0, 0))],
        out_specs=pl.BlockSpec((B, 8, T_pad), lambda i: (0, 0, 0)),
        out_shape=jax.ShapeDtypeStruct((B, 8, T_pad), jnp.float32),
        compiler_params=pltpu.CompilerParams(dimension_semantics=("arbitrary",)),
    )(se)

    # ---- unpack lane-dense slab to the reference (B, post_nms_topN, 3) -------
    out3 = out[:, 0:3, :POST_NMS_TOPN]                       # (B, 3, P)
    return jnp.transpose(out3, (0, 2, 1))                    # (B, P, 3)


# -------------------------------- main ----------------------------------------
if __name__ == "__main__":
    B, L, H, W = 2, 16, 1, 1
    anchors = generate_anchors(FEAT_STRIDE, SCALES)          # (3, 2)
    A = anchors.shape[0]

    key = jax.random.PRNGKey(0)
    k1, k2 = jax.random.split(key)
    rpn_cls_prob = jax.random.uniform(k1, (B, 2 * A, L, H, W), dtype=jnp.float32)
    rpn_twin_pred = 0.1 * jax.random.normal(k2, (B, 2 * A, L, H, W), dtype=jnp.float32)

    out = proposal_layer_forward(rpn_cls_prob, rpn_twin_pred, jnp.asarray(anchors))
    out = jax.block_until_ready(out)
    assert out.shape == (B, POST_NMS_TOPN, 3)
    assert bool(jnp.all(jnp.isfinite(out)))
    print("KERNEL_OK")
</pallas_src>

<mosaic_0001>
module attributes {stable_mosaic.version = 11 : i64} {
  func.func @_nms_compact_kernel(%arg0: i32, %arg1: memref<2x2x128xf32, #tpu.memory_space<vmem>>, %arg2: memref<2x8x128xf32, #tpu.memory_space<vmem>>) attributes {dimension_semantics = [#tpu.dimension_semantics<arbitrary>], iteration_bounds = array<i64: 1>, scalar_prefetch = 0 : i64, scratch_operands = 0 : i64, tpu.core_type = #tpu.core_type<tc>, window_params = [{pipeline_mode = #tpu.pipeline_mode<synchronous>, transform_indices = @transform_0, window_bounds = array<i64: 2, 2, 128>}, {pipeline_mode = #tpu.pipeline_mode<synchronous>, transform_indices = @transform_1, window_bounds = array<i64: 2, 8, 128>}]} {
    %c0 = arith.constant 0 : index
    %c0_0 = arith.constant 0 : index
    %c0_1 = arith.constant 0 : index
    %0 = vector.load %arg1[%c0, %c0_0, %c0_1] : memref<2x2x128xf32, #tpu.memory_space<vmem>>, vector<2x2x128xf32>
    %1 = vector.extract_strided_slice %0 {offsets = [0, 0, 0], sizes = [2, 1, 128], strides = [1, 1, 1]} : vector<2x2x128xf32> to vector<2x1x128xf32>
    %2 = vector.shape_cast %1 : vector<2x1x128xf32> to vector<2x128xf32>
    %3 = vector.extract_strided_slice %0 {offsets = [0, 1, 0], sizes = [2, 1, 128], strides = [1, 1, 1]} : vector<2x2x128xf32> to vector<2x1x128xf32>
    %4 = vector.shape_cast %3 : vector<2x1x128xf32> to vector<2x128xf32>
    %5 = arith.subf %4, %2 : vector<2x128xf32>
    %cst = arith.constant 1.000000e+00 : f32
    %6 = vector.broadcast %cst : f32 to vector<2x128xf32>
    %7 = arith.addf %5, %6 : vector<2x128xf32>
    %8 = tpu.iota {dimensions = array<i32: 1>} : vector<2x128xi32>
    %cst_2 = arith.constant 0.000000e+00 : f32
    %9 = vector.broadcast %cst_2 : f32 to vector<2x128xf32>
    %10 = vector.extract_strided_slice %2 {offsets = [0, 0], sizes = [2, 1], strides = [1, 1]} : vector<2x128xf32> to vector<2x1xf32>
    %11 = vector.extract_strided_slice %4 {offsets = [0, 0], sizes = [2, 1], strides = [1, 1]} : vector<2x128xf32> to vector<2x1xf32>
    %12 = arith.subf %11, %10 : vector<2x1xf32>
    %cst_3 = arith.constant 1.000000e+00 : f32
    %13 = vector.broadcast %cst_3 : f32 to vector<2x1xf32>
    %14 = arith.addf %12, %13 : vector<2x1xf32>
    %15 = vector.broadcast %11 : vector<2x1xf32> to vector<2x128xf32>
    %16 = arith.minimumf %4, %15 : vector<2x128xf32>
    %17 = vector.broadcast %10 : vector<2x1xf32> to vector<2x128xf32>
    %18 = arith.maximumf %2, %17 : vector<2x128xf32>
    %19 = arith.subf %16, %18 : vector<2x128xf32>
    %cst_4 = arith.constant 1.000000e+00 : f32
    %20 = vector.broadcast %cst_4 : f32 to vector<2x128xf32>
    %21 = arith.addf %19, %20 : vector<2x128xf32>
    %cst_5 = arith.constant 0.000000e+00 : f32
    %22 = vector.broadcast %cst_5 : f32 to vector<2x128xf32>
    %23 = arith.maximumf %22, %21 : vector<2x128xf32>
    %24 = vector.broadcast %14 : vector<2x1xf32> to vector<2x128xf32>
    %25 = arith.addf %7, %24 : vector<2x128xf32>
    %26 = arith.subf %25, %23 : vector<2x128xf32>
    %cst_6 = arith.constant 0.699999988 : f32
    %27 = vector.broadcast %cst_6 : f32 to vector<2x128xf32>
    %28 = arith.mulf %27, %26 : vector<2x128xf32>
    %29 = arith.cmpf ogt, %23, %28 : vector<2x128xf32>
    %c0_i32 = arith.constant 0 : i32
    %30 = vector.broadcast %c0_i32 : i32 to vector<2x128xi32>
    %31 = arith.cmpi sgt, %8, %30 : vector<2x128xi32>
    %32 = arith.andi %29, %31 : vector<2x128xi1>
    %cst_7 = arith.constant 1.000000e+00 : f32
    %cst_8 = arith.constant 0.000000e+00 : f32
    %33 = vector.broadcast %cst_7 : f32 to vector<2x128xf32>
    %34 = vector.broadcast %cst_8 : f32 to vector<2x128xf32>
    %35 = arith.select %32, %33, %34 : vector<2x128xi1>, vector<2x128xf32>
    %36 = vector.extract_strided_slice %9 {offsets = [0, 0], sizes = [2, 1], strides = [1, 1]} : vector<2x128xf32> to vector<2x1xf32>
    %cst_9 = arith.constant 1.000000e+00 : f32
    %37 = vector.broadcast %cst_9 : f32 to vector<2x1xf32>
    %38 = arith.subf %37, %36 : vector<2x1xf32>
    %39 = vector.broadcast %38 : vector<2x1xf32> to vector<2x128xf32>
    %40 = arith.mulf %35, %39 : vector<2x128xf32>
    %41 = arith.maximumf %9, %40 : vector<2x128xf32>
    %42 = vector.extract_strided_slice %2 {offsets = [0, 1], sizes = [2, 1], strides = [1, 1]} : vector<2x128xf32> to vector<2x1xf32>
    %43 = vector.extract_strided_slice %4 {offsets = [0, 1], sizes = [2, 1], strides = [1, 1]} : vector<2x128xf32> to vector<2x1xf32>
    %44 = arith.subf %43, %42 : vector<2x1xf32>
    %cst_10 = arith.constant 1.000000e+00 : f32
    %45 = vector.broadcast %cst_10 : f32 to vector<2x1xf32>
    %46 = arith.addf %44, %45 : vector<2x1xf32>
    %47 = vector.broadcast %43 : vector<2x1xf32> to vector<2x128xf32>
    %48 = arith.minimumf %4, %47 : vector<2x128xf32>
    %49 = vector.broadcast %42 : vector<2x1xf32> to vector<2x128xf32>
    %50 = arith.maximumf %2, %49 : vector<2x128xf32>
    %51 = arith.subf %48, %50 : vector<2x128xf32>
    %cst_11 = arith.constant 1.000000e+00 : f32
    %52 = vector.broadcast %cst_11 : f32 to vector<2x128xf32>
    %53 = arith.addf %51, %52 : vector<2x128xf32>
    %cst_12 = arith.constant 0.000000e+00 : f32
    %54 = vector.broadcast %cst_12 : f32 to vector<2x128xf32>
    %55 = arith.maximumf %54, %53 : vector<2x128xf32>
    %56 = vector.broadcast %46 : vector<2x1xf32> to vector<2x128xf32>
    %57 = arith.addf %7, %56 : vector<2x128xf32>
    %58 = arith.subf %57, %55 : vector<2x128xf32>
    %cst_13 = arith.constant 0.699999988 : f32
    %59 = vector.broadcast %cst_13 : f32 to vector<2x128xf32>
    %60 = arith.mulf %59, %58 : vector<2x128xf32>
    %61 = arith.cmpf ogt, %55, %60 : vector<2x128xf32>
    %c1_i32 = arith.constant 1 : i32
    %62 = vector.broadcast %c1_i32 : i32 to vector<2x128xi32>
    %63 = arith.cmpi sgt, %8, %62 : vector<2x128xi32>
    %64 = arith.andi %61, %63 : vector<2x128xi1>
    %cst_14 = arith.constant 1.000000e+00 : f32
    %cst_15 = arith.constant 0.000000e+00 : f32
    %65 = vector.broadcast %cst_14 : f32 to vector<2x128xf32>
    %66 = vector.broadcast %cst_15 : f32 to vector<2x128xf32>
    %67 = arith.select %64, %65, %66 : vector<2x128xi1>, vector<2x128xf32>
    %68 = vector.extract_strided_slice %41 {offsets = [0, 1], sizes = [2, 1], strides = [1, 1]} : vector<2x128xf32> to vector<2x1xf32>
    %cst_16 = arith.constant 1.000000e+00 : f32
    %69 = vector.broadcast %cst_16 : f32 to vector<2x1xf32>
    %70 = arith.subf %69, %68 : vector<2x1xf32>
    %71 = vector.broadcast %70 : vector<2x1xf32> to vector<2x128xf32>
    %72 = arith.mulf %67, %71 : vector<2x128xf32>
    %73 = arith.maximumf %41, %72 : vector<2x128xf32>
    %74 = vector.extract_strided_slice %2 {offsets = [0, 2], sizes = [2, 1], strides = [1, 1]} : vector<2x128xf32> to vector<2x1xf32>
    %75 = vector.extract_strided_slice %4 {offsets = [0, 2], sizes = [2, 1], strides = [1, 1]} : vector<2x128xf32> to vector<2x1xf32>
    %76 = arith.subf %75, %74 : vector<2x1xf32>
    %cst_17 = arith.constant 1.000000e+00 : f32
    %77 = vector.broadcast %cst_17 : f32 to vector<2x1xf32>
    %78 = arith.addf %76, %77 : vector<2x1xf32>
    %79 = vector.broadcast %75 : vector<2x1xf32> to vector<2x128xf32>
    %80 = arith.minimumf %4, %79 : vector<2x128xf32>
    %81 = vector.broadcast %74 : vector<2x1xf32> to vector<2x128xf32>
    %82 = arith.maximumf %2, %81 : vector<2x128xf32>
    %83 = arith.subf %80, %82 : vector<2x128xf32>
    %cst_18 = arith.constant 1.000000e+00 : f32
    %84 = vector.broadcast %cst_18 : f32 to vector<2x128xf32>
    %85 = arith.addf %83, %84 : vector<2x128xf32>
    %cst_19 = arith.constant 0.000000e+00 : f32
    %86 = vector.broadcast %cst_19 : f32 to vector<2x128xf32>
    %87 = arith.maximumf %86, %85 : vector<2x128xf32>
    %88 = vector.broadcast %78 : vector<2x1xf32> to vector<2x128xf32>
    %89 = arith.addf %7, %88 : vector<2x128xf32>
    %90 = arith.subf %89, %87 : vector<2x128xf32>
    %cst_20 = arith.constant 0.699999988 : f32
    %91 = vector.broadcast %cst_20 : f32 to vector<2x128xf32>
    %92 = arith.mulf %91, %90 : vector<2x128xf32>
    %93 = arith.cmpf ogt, %87, %92 : vector<2x128xf32>
    %c2_i32 = arith.constant 2 : i32
    %94 = vector.broadcast %c2_i32 : i32 to vector<2x128xi32>
    %95 = arith.cmpi sgt, %8, %94 : vector<2x128xi32>
    %96 = arith.andi %93, %95 : vector<2x128xi1>
    %cst_21 = arith.constant 1.000000e+00 : f32
    %cst_22 = arith.constant 0.000000e+00 : f32
    %97 = vector.broadcast %cst_21 : f32 to vector<2x128xf32>
    %98 = vector.broadcast %cst_22 : f32 to vector<2x128xf32>
    %99 = arith.select %96, %97, %98 : vector<2x128xi1>, vector<2x128xf32>
    %100 = vector.extract_strided_slice %73 {offsets = [0, 2], sizes = [2, 1], strides = [1, 1]} : vector<2x128xf32> to vector<2x1xf32>
    %cst_23 = arith.constant 1.000000e+00 : f32
    %101 = vector.broadcast %cst_23 : f32 to vector<2x1xf32>
    %102 = arith.subf %101, %100 : vector<2x1xf32>
    %103 = vector.broadcast %102 : vector<2x1xf32> to vector<2x128xf32>
    %104 = arith.mulf %99, %103 : vector<2x128xf32>
    %105 = arith.maximumf %73, %104 : vector<2x128xf32>
    %106 = vector.extract_strided_slice %2 {offsets = [0, 3], sizes = [2, 1], strides = [1, 1]} : vector<2x128xf32> to vector<2x1xf32>
    %107 = vector.extract_strided_slice %4 {offsets = [0, 3], sizes = [2, 1], strides = [1, 1]} : vector<2x128xf32> to vector<2x1xf32>
    %108 = arith.subf %107, %106 : vector<2x1xf32>
    %cst_24 = arith.constant 1.000000e+00 : f32
    %109 = vector.broadcast %cst_24 : f32 to vector<2x1xf32>
    %110 = arith.addf %108, %109 : vector<2x1xf32>
    %111 = vector.broadcast %107 : vector<2x1xf32> to vector<2x128xf32>
    %112 = arith.minimumf %4, %111 : vector<2x128xf32>
    %113 = vector.broadcast %106 : vector<2x1xf32> to vector<2x128xf32>
    %114 = arith.maximumf %2, %113 : vector<2x128xf32>
    %115 = arith.subf %112, %114 : vector<2x128xf32>
    %cst_25 = arith.constant 1.000000e+00 : f32
    %116 = vector.broadcast %cst_25 : f32 to vector<2x128xf32>
    %117 = arith.addf %115, %116 : vector<2x128xf32>
    %cst_26 = arith.constant 0.000000e+00 : f32
    %118 = vector.broadcast %cst_26 : f32 to vector<2x128xf32>
    %119 = arith.maximumf %118, %117 : vector<2x128xf32>
    %120 = vector.broadcast %110 : vector<2x1xf32> to vector<2x128xf32>
    %121 = arith.addf %7, %120 : vector<2x128xf32>
    %122 = arith.subf %121, %119 : vector<2x128xf32>
    %cst_27 = arith.constant 0.699999988 : f32
    %123 = vector.broadcast %cst_27 : f32 to vector<2x128xf32>
    %124 = arith.mulf %123, %122 : vector<2x128xf32>
    %125 = arith.cmpf ogt, %119, %124 : vector<2x128xf32>
    %c3_i32 = arith.constant 3 : i32
    %126 = vector.broadcast %c3_i32 : i32 to vector<2x128xi32>
    %127 = arith.cmpi sgt, %8, %126 : vector<2x128xi32>
    %128 = arith.andi %125, %127 : vector<2x128xi1>
    %cst_28 = arith.constant 1.000000e+00 : f32
    %cst_29 = arith.constant 0.000000e+00 : f32
    %129 = vector.broadcast %cst_28 : f32 to vector<2x128xf32>
    %130 = vector.broadcast %cst_29 : f32 to vector<2x128xf32>
    %131 = arith.select %128, %129, %130 : vector<2x128xi1>, vector<2x128xf32>
    %132 = vector.extract_strided_slice %105 {offsets = [0, 3], sizes = [2, 1], strides = [1, 1]} : vector<2x128xf32> to vector<2x1xf32>
    %cst_30 = arith.constant 1.000000e+00 : f32
    %133 = vector.broadcast %cst_30 : f32 to vector<2x1xf32>
    %134 = arith.subf %133, %132 : vector<2x1xf32>
    %135 = vector.broadcast %134 : vector<2x1xf32> to vector<2x128xf32>
    %136 = arith.mulf %131, %135 : vector<2x128xf32>
    %137 = arith.maximumf %105, %136 : vector<2x128xf32>
    %138 = vector.extract_strided_slice %2 {offsets = [0, 4], sizes = [2, 1], strides = [1, 1]} : vector<2x128xf32> to vector<2x1xf32>
    %139 = vector.extract_strided_slice %4 {offsets = [0, 4], sizes = [2, 1], strides = [1, 1]} : vector<2x128xf32> to vector<2x1xf32>
    %140 = arith.subf %139, %138 : vector<2x1xf32>
    %cst_31 = arith.constant 1.000000e+00 : f32
    %141 = vector.broadcast %cst_31 : f32 to vector<2x1xf32>
    %142 = arith.addf %140, %141 : vector<2x1xf32>
    %143 = vector.broadcast %139 : vector<2x1xf32> to vector<2x128xf32>
    %144 = arith.minimumf %4, %143 : vector<2x128xf32>
    %145 = vector.broadcast %138 : vector<2x1xf32> to vector<2x128xf32>
    %146 = arith.maximumf %2, %145 : vector<2x128xf32>
    %147 = arith.subf %144, %146 : vector<2x128xf32>
    %cst_32 = arith.constant 1.000000e+00 : f32
    %148 = vector.broadcast %cst_32 : f32 to vector<2x128xf32>
    %149 = arith.addf %147, %148 : vector<2x128xf32>
    %cst_33 = arith.constant 0.000000e+00 : f32
    %150 = vector.broadcast %cst_33 : f32 to vector<2x128xf32>
    %151 = arith.maximumf %150, %149 : vector<2x128xf32>
    %152 = vector.broadcast %142 : vector<2x1xf32> to vector<2x128xf32>
    %153 = arith.addf %7, %152 : vector<2x128xf32>
    %154 = arith.subf %153, %151 : vector<2x128xf32>
    %cst_34 = arith.constant 0.699999988 : f32
    %155 = vector.broadcast %cst_34 : f32 to vector<2x128xf32>
    %156 = arith.mulf %155, %154 : vector<2x128xf32>
    %157 = arith.cmpf ogt, %151, %156 : vector<2x128xf32>
    %c4_i32 = arith.constant 4 : i32
    %158 = vector.broadcast %c4_i32 : i32 to vector<2x128xi32>
    %159 = arith.cmpi sgt, %8, %158 : vector<2x128xi32>
    %160 = arith.andi %157, %159 : vector<2x128xi1>
    %cst_35 = arith.constant 1.000000e+00 : f32
    %cst_36 = arith.constant 0.000000e+00 : f32
    %161 = vector.broadcast %cst_35 : f32 to vector<2x128xf32>
    %162 = vector.broadcast %cst_36 : f32 to vector<2x128xf32>
    %163 = arith.select %160, %161, %162 : vector<2x128xi1>, vector<2x128xf32>
    %164 = vector.extract_strided_slice %137 {offsets = [0, 4], sizes = [2, 1], strides = [1, 1]} : vector<2x128xf32> to vector<2x1xf32>
    %cst_37 = arith.constant 1.000000e+00 : f32
    %165 = vector.broadcast %cst_37 : f32 to vector<2x1xf32>
    %166 = arith.subf %165, %164 : vector<2x1xf32>
    %167 = vector.broadcast %166 : vector<2x1xf32> to vector<2x128xf32>
    %168 = arith.mulf %163, %167 : vector<2x128xf32>
    %169 = arith.maximumf %137, %168 : vector<2x128xf32>
    %170 = vector.extract_strided_slice %2 {offsets = [0, 5], sizes = [2, 1], strides = [1, 1]} : vector<2x128xf32> to vector<2x1xf32>
    %171 = vector.extract_strided_slice %4 {offsets = [0, 5], sizes = [2, 1], strides = [1, 1]} : vector<2x128xf32> to vector<2x1xf32>
    %172 = arith.subf %171, %170 : vector<2x1xf32>
    %cst_38 = arith.constant 1.000000e+00 : f32
    %173 = vector.broadcast %cst_38 : f32 to vector<2x1xf32>
    %174 = arith.addf %172, %173 : vector<2x1xf32>
    %175 = vector.broadcast %171 : vector<2x1xf32> to vector<2x128xf32>
    %176 = arith.minimumf %4, %175 : vector<2x128xf32>
    %177 = vector.broadcast %170 : vector<2x1xf32> to vector<2x128xf32>
    %178 = arith.maximumf %2, %177 : vector<2x128xf32>
    %179 = arith.subf %176, %178 : vector<2x128xf32>
    %cst_39 = arith.constant 1.000000e+00 : f32
    %180 = vector.broadcast %cst_39 : f32 to vector<2x128xf32>
    %181 = arith.addf %179, %180 : vector<2x128xf32>
    %cst_40 = arith.constant 0.000000e+00 : f32
    %182 = vector.broadcast %cst_40 : f32 to vector<2x128xf32>
    %183 = arith.maximumf %182, %181 : vector<2x128xf32>
    %184 = vector.broadcast %174 : vector<2x1xf32> to vector<2x128xf32>
    %185 = arith.addf %7, %184 : vector<2x128xf32>
    %186 = arith.subf %185, %183 : vector<2x128xf32>
    %cst_41 = arith.constant 0.699999988 : f32
    %187 = vector.broadcast %cst_41 : f32 to vector<2x128xf32>
    %188 = arith.mulf %187, %186 : vector<2x128xf32>
    %189 = arith.cmpf ogt, %183, %188 : vector<2x128xf32>
    %c5_i32 = arith.constant 5 : i32
    %190 = vector.broadcast %c5_i32 : i32 to vector<2x128xi32>
    %191 = arith.cmpi sgt, %8, %190 : vector<2x128xi32>
    %192 = arith.andi %189, %191 : vector<2x128xi1>
    %cst_42 = arith.constant 1.000000e+00 : f32
    %cst_43 = arith.constant 0.000000e+00 : f32
    %193 = vector.broadcast %cst_42 : f32 to vector<2x128xf32>
    %194 = vector.broadcast %cst_43 : f32 to vector<2x128xf32>
    %195 = arith.select %192, %193, %194 : vector<2x128xi1>, vector<2x128xf32>
    %196 = vector.extract_strided_slice %169 {offsets = [0, 5], sizes = [2, 1], strides = [1, 1]} : vector<2x128xf32> to vector<2x1xf32>
    %cst_44 = arith.constant 1.000000e+00 : f32
    %197 = vector.broadcast %cst_44 : f32 to vector<2x1xf32>
    %198 = arith.subf %197, %196 : vector<2x1xf32>
    %199 = vector.broadcast %198 : vector<2x1xf32> to vector<2x128xf32>
    %200 = arith.mulf %195, %199 : vector<2x128xf32>
    %201 = arith.maximumf %169, %200 : vector<2x128xf32>
    %202 = vector.extract_strided_slice %2 {offsets = [0, 6], sizes = [2, 1], strides = [1, 1]} : vector<2x128xf32> to vector<2x1xf32>
    %203 = vector.extract_strided_slice %4 {offsets = [0, 6], sizes = [2, 1], strides = [1, 1]} : vector<2x128xf32> to vector<2x1xf32>
    %204 = arith.subf %203, %202 : vector<2x1xf32>
    %cst_45 = arith.constant 1.000000e+00 : f32
    %205 = vector.broadcast %cst_45 : f32 to vector<2x1xf32>
    %206 = arith.addf %204, %205 : vector<2x1xf32>
    %207 = vector.broadcast %203 : vector<2x1xf32> to vector<2x128xf32>
    %208 = arith.minimumf %4, %207 : vector<2x128xf32>
    %209 = vector.broadcast %202 : vector<2x1xf32> to vector<2x128xf32>
    %210 = arith.maximumf %2, %209 : vector<2x128xf32>
    %211 = arith.subf %208, %210 : vector<2x128xf32>
    %cst_46 = arith.constant 1.000000e+00 : f32
    %212 = vector.broadcast %cst_46 : f32 to vector<2x128xf32>
    %213 = arith.addf %211, %212 : vector<2x128xf32>
    %cst_47 = arith.constant 0.000000e+00 : f32
    %214 = vector.broadcast %cst_47 : f32 to vector<2x128xf32>
    %215 = arith.maximumf %214, %213 : vector<2x128xf32>
    %216 = vector.broadcast %206 : vector<2x1xf32> to vector<2x128xf32>
    %217 = arith.addf %7, %216 : vector<2x128xf32>
    %218 = arith.subf %217, %215 : vector<2x128xf32>
    %cst_48 = arith.constant 0.699999988 : f32
    %219 = vector.broadcast %cst_48 : f32 to vector<2x128xf32>
    %220 = arith.mulf %219, %218 : vector<2x128xf32>
    %221 = arith.cmpf ogt, %215, %220 : vector<2x128xf32>
    %c6_i32 = arith.constant 6 : i32
    %222 = vector.broadcast %c6_i32 : i32 to vector<2x128xi32>
    %223 = arith.cmpi sgt, %8, %222 : vector<2x128xi32>
    %224 = arith.andi %221, %223 : vector<2x128xi1>
    %cst_49 = arith.constant 1.000000e+00 : f32
    %cst_50 = arith.constant 0.000000e+00 : f32
    %225 = vector.broadcast %cst_49 : f32 to vector<2x128xf32>
    %226 = vector.broadcast %cst_50 : f32 to vector<2x128xf32>
    %227 = arith.select %224, %225, %226 : vector<2x128xi1>, vector<2x128xf32>
    %228 = vector.extract_strided_slice %201 {offsets = [0, 6], sizes = [2, 1], strides = [1, 1]} : vector<2x128xf32> to vector<2x1xf32>
    %cst_51 = arith.constant 1.000000e+00 : f32
    %229 = vector.broadcast %cst_51 : f32 to vector<2x1xf32>
    %230 = arith.subf %229, %228 : vector<2x1xf32>
    %231 = vector.broadcast %230 : vector<2x1xf32> to vector<2x128xf32>
    %232 = arith.mulf %227, %231 : vector<2x128xf32>
    %233 = arith.maximumf %201, %232 : vector<2x128xf32>
    %234 = vector.extract_strided_slice %2 {offsets = [0, 7], sizes = [2, 1], strides = [1, 1]} : vector<2x128xf32> to vector<2x1xf32>
    %235 = vector.extract_strided_slice %4 {offsets = [0, 7], sizes = [2, 1], strides = [1, 1]} : vector<2x128xf32> to vector<2x1xf32>
    %236 = arith.subf %235, %234 : vector<2x1xf32>
    %cst_52 = arith.constant 1.000000e+00 : f32
    %237 = vector.broadcast %cst_52 : f32 to vector<2x1xf32>
    %238 = arith.addf %236, %237 : vector<2x1xf32>
    %239 = vector.broadcast %235 : vector<2x1xf32> to vector<2x128xf32>
    %240 = arith.minimumf %4, %239 : vector<2x128xf32>
    %241 = vector.broadcast %234 : vector<2x1xf32> to vector<2x128xf32>
    %242 = arith.maximumf %2, %241 : vector<2x128xf32>
    %243 = arith.subf %240, %242 : vector<2x128xf32>
    %cst_53 = arith.constant 1.000000e+00 : f32
    %244 = vector.broadcast %cst_53 : f32 to vector<2x128xf32>
    %245 = arith.addf %243, %244 : vector<2x128xf32>
    %cst_54 = arith.constant 0.000000e+00 : f32
    %246 = vector.broadcast %cst_54 : f32 to vector<2x128xf32>
    %247 = arith.maximumf %246, %245 : vector<2x128xf32>
    %248 = vector.broadcast %238 : vector<2x1xf32> to vector<2x128xf32>
    %249 = arith.addf %7, %248 : vector<2x128xf32>
    %250 = arith.subf %249, %247 : vector<2x128xf32>
    %cst_55 = arith.constant 0.699999988 : f32
    %251 = vector.broadcast %cst_55 : f32 to vector<2x128xf32>
    %252 = arith.mulf %251, %250 : vector<2x128xf32>
    %253 = arith.cmpf ogt, %247, %252 : vector<2x128xf32>
    %c7_i32 = arith.constant 7 : i32
    %254 = vector.broadcast %c7_i32 : i32 to vector<2x128xi32>
    %255 = arith.cmpi sgt, %8, %254 : vector<2x128xi32>
    %256 = arith.andi %253, %255 : vector<2x128xi1>
    %cst_56 = arith.constant 1.000000e+00 : f32
    %cst_57 = arith.constant 0.000000e+00 : f32
    %257 = vector.broadcast %cst_56 : f32 to vector<2x128xf32>
    %258 = vector.broadcast %cst_57 : f32 to vector<2x128xf32>
    %259 = arith.select %256, %257, %258 : vector<2x128xi1>, vector<2x128xf32>
    %260 = vector.extract_strided_slice %233 {offsets = [0, 7], sizes = [2, 1], strides = [1, 1]} : vector<2x128xf32> to vector<2x1xf32>
    %cst_58 = arith.constant 1.000000e+00 : f32
    %261 = vector.broadcast %cst_58 : f32 to vector<2x1xf32>
    %262 = arith.subf %261, %260 : vector<2x1xf32>
    %263 = vector.broadcast %262 : vector<2x1xf32> to vector<2x128xf32>
    %264 = arith.mulf %259, %263 : vector<2x128xf32>
    %265 = arith.maximumf %233, %264 : vector<2x128xf32>
    %266 = vector.extract_strided_slice %2 {offsets = [0, 8], sizes = [2, 1], strides = [1, 1]} : vector<2x128xf32> to vector<2x1xf32>
    %267 = vector.extract_strided_slice %4 {offsets = [0, 8], sizes = [2, 1], strides = [1, 1]} : vector<2x128xf32> to vector<2x1xf32>
    %268 = arith.subf %267, %266 : vector<2x1xf32>
    %cst_59 = arith.constant 1.000000e+00 : f32
    %269 = vector.broadcast %cst_59 : f32 to vector<2x1xf32>
    %270 = arith.addf %268, %269 : vector<2x1xf32>
    %271 = vector.broadcast %267 : vector<2x1xf32> to vector<2x128xf32>
    %272 = arith.minimumf %4, %271 : vector<2x128xf32>
    %273 = vector.broadcast %266 : vector<2x1xf32> to vector<2x128xf32>
    %274 = arith.maximumf %2, %273 : vector<2x128xf32>
    %275 = arith.subf %272, %274 : vector<2x128xf32>
    %cst_60 = arith.constant 1.000000e+00 : f32
    %276 = vector.broadcast %cst_60 : f32 to vector<2x128xf32>
    %277 = arith.addf %275, %276 : vector<2x128xf32>
    %cst_61 = arith.constant 0.000000e+00 : f32
    %278 = vector.broadcast %cst_61 : f32 to vector<2x128xf32>
    %279 = arith.maximumf %278, %277 : vector<2x128xf32>
    %280 = vector.broadcast %270 : vector<2x1xf32> to vector<2x128xf32>
    %281 = arith.addf %7, %280 : vector<2x128xf32>
    %282 = arith.subf %281, %279 : vector<2x128xf32>
    %cst_62 = arith.constant 0.699999988 : f32
    %283 = vector.broadcast %cst_62 : f32 to vector<2x128xf32>
    %284 = arith.mulf %283, %282 : vector<2x128xf32>
    %285 = arith.cmpf ogt, %279, %284 : vector<2x128xf32>
    %c8_i32 = arith.constant 8 : i32
    %286 = vector.broadcast %c8_i32 : i32 to vector<2x128xi32>
    %287 = arith.cmpi sgt, %8, %286 : vector<2x128xi32>
    %288 = arith.andi %285, %287 : vector<2x128xi1>
    %cst_63 = arith.constant 1.000000e+00 : f32
    %cst_64 = arith.constant 0.000000e+00 : f32
    %289 = vector.broadcast %cst_63 : f32 to vector<2x128xf32>
    %290 = vector.broadcast %cst_64 : f32 to vector<2x128xf32>
    %291 = arith.select %288, %289, %290 : vector<2x128xi1>, vector<2x128xf32>
    %292 = vector.extract_strided_slice %265 {offsets = [0, 8], sizes = [2, 1], strides = [1, 1]} : vector<2x128xf32> to vector<2x1xf32>
    %cst_65 = arith.constant 1.000000e+00 : f32
    %293 = vector.broadcast %cst_65 : f32 to vector<2x1xf32>
    %294 = arith.subf %293, %292 : vector<2x1xf32>
    %295 = vector.broadcast %294 : vector<2x1xf32> to vector<2x128xf32>
    %296 = arith.mulf %291, %295 : vector<2x128xf32>
    %297 = arith.maximumf %265, %296 : vector<2x128xf32>
    %298 = vector.extract_strided_slice %2 {offsets = [0, 9], sizes = [2, 1], strides = [1, 1]} : vector<2x128xf32> to vector<2x1xf32>
    %299 = vector.extract_strided_slice %4 {offsets = [0, 9], sizes = [2, 1], strides = [1, 1]} : vector<2x128xf32> to vector<2x1xf32>
    %300 = arith.subf %299, %298 : vector<2x1xf32>
    %cst_66 = arith.constant 1.000000e+00 : f32
    %301 = vector.broadcast %cst_66 : f32 to vector<2x1xf32>
    %302 = arith.addf %300, %301 : vector<2x1xf32>
    %303 = vector.broadcast %299 : vector<2x1xf32> to vector<2x128xf32>
    %304 = arith.minimumf %4, %303 : vector<2x128xf32>
    %305 = vector.broadcast %298 : vector<2x1xf32> to vector<2x128xf32>
    %306 = arith.maximumf %2, %305 : vector<2x128xf32>
    %307 = arith.subf %304, %306 : vector<2x128xf32>
    %cst_67 = arith.constant 1.000000e+00 : f32
    %308 = vector.broadcast %cst_67 : f32 to vector<2x128xf32>
    %309 = arith.addf %307, %308 : vector<2x128xf32>
    %cst_68 = arith.constant 0.000000e+00 : f32
    %310 = vector.broadcast %cst_68 : f32 to vector<2x128xf32>
    %311 = arith.maximumf %310, %309 : vector<2x128xf32>
    %312 = vector.broadcast %302 : vector<2x1xf32> to vector<2x128xf32>
    %313 = arith.addf %7, %312 : vector<2x128xf32>
    %314 = arith.subf %313, %311 : vector<2x128xf32>
    %cst_69 = arith.constant 0.699999988 : f32
    %315 = vector.broadcast %cst_69 : f32 to vector<2x128xf32>
    %316 = arith.mulf %315, %314 : vector<2x128xf32>
    %317 = arith.cmpf ogt, %311, %316 : vector<2x128xf32>
    %c9_i32 = arith.constant 9 : i32
    %318 = vector.broadcast %c9_i32 : i32 to vector<2x128xi32>
    %319 = arith.cmpi sgt, %8, %318 : vector<2x128xi32>
    %320 = arith.andi %317, %319 : vector<2x128xi1>
    %cst_70 = arith.constant 1.000000e+00 : f32
    %cst_71 = arith.constant 0.000000e+00 : f32
    %321 = vector.broadcast %cst_70 : f32 to vector<2x128xf32>
    %322 = vector.broadcast %cst_71 : f32 to vector<2x128xf32>
    %323 = arith.select %320, %321, %322 : vector<2x128xi1>, vector<2x128xf32>
    %324 = vector.extract_strided_slice %297 {offsets = [0, 9], sizes = [2, 1], strides = [1, 1]} : vector<2x128xf32> to vector<2x1xf32>
    %cst_72 = arith.constant 1.000000e+00 : f32
    %325 = vector.broadcast %cst_72 : f32 to vector<2x1xf32>
    %326 = arith.subf %325, %324 : vector<2x1xf32>
    %327 = vector.broadcast %326 : vector<2x1xf32> to vector<2x128xf32>
    %328 = arith.mulf %323, %327 : vector<2x128xf32>
    %329 = arith.maximumf %297, %328 : vector<2x128xf32>
    %330 = vector.extract_strided_slice %2 {offsets = [0, 10], sizes = [2, 1], strides = [1, 1]} : vector<2x128xf32> to vector<2x1xf32>
    %331 = vector.extract_strided_slice %4 {offsets = [0, 10], sizes = [2, 1], strides = [1, 1]} : vector<2x128xf32> to vector<2x1xf32>
    %332 = arith.subf %331, %330 : vector<2x1xf32>
    %cst_73 = arith.constant 1.000000e+00 : f32
    %333 = vector.broadcast %cst_73 : f32 to vector<2x1xf32>
    %334 = arith.addf %332, %333 : vector<2x1xf32>
    %335 = vector.broadcast %331 : vector<2x1xf32> to vector<2x128xf32>
    %336 = arith.minimumf %4, %335 : vector<2x128xf32>
    %337 = vector.broadcast %330 : vector<2x1xf32> to vector<2x128xf32>
    %338 = arith.maximumf %2, %337 : vector<2x128xf32>
    %339 = arith.subf %336, %338 : vector<2x128xf32>
    %cst_74 = arith.constant 1.000000e+00 : f32
    %340 = vector.broadcast %cst_74 : f32 to vector<2x128xf32>
    %341 = arith.addf %339, %340 : vector<2x128xf32>
    %cst_75 = arith.constant 0.000000e+00 : f32
    %342 = vector.broadcast %cst_75 : f32 to vector<2x128xf32>
    %343 = arith.maximumf %342, %341 : vector<2x128xf32>
    %344 = vector.broadcast %334 : vector<2x1xf32> to vector<2x128xf32>
    %345 = arith.addf %7, %344 : vector<2x128xf32>
    %346 = arith.subf %345, %343 : vector<2x128xf32>
    %cst_76 = arith.constant 0.699999988 : f32
    %347 = vector.broadcast %cst_76 : f32 to vector<2x128xf32>
    %348 = arith.mulf %347, %346 : vector<2x128xf32>
    %349 = arith.cmpf ogt, %343, %348 : vector<2x128xf32>
    %c10_i32 = arith.constant 10 : i32
    %350 = vector.broadcast %c10_i32 : i32 to vector<2x128xi32>
    %351 = arith.cmpi sgt, %8, %350 : vector<2x128xi32>
    %352 = arith.andi %349, %351 : vector<2x128xi1>
    %cst_77 = arith.constant 1.000000e+00 : f32
    %cst_78 = arith.constant 0.000000e+00 : f32
    %353 = vector.broadcast %cst_77 : f32 to vector<2x128xf32>
    %354 = vector.broadcast %cst_78 : f32 to vector<2x128xf32>
    %355 = arith.select %352, %353, %354 : vector<2x128xi1>, vector<2x128xf32>
    %356 = vector.extract_strided_slice %329 {offsets = [0, 10], sizes = [2, 1], strides = [1, 1]} : vector<2x128xf32> to vector<2x1xf32>
    %cst_79 = arith.constant 1.000000e+00 : f32
    %357 = vector.broadcast %cst_79 : f32 to vector<2x1xf32>
    %358 = arith.subf %357, %356 : vector<2x1xf32>
    %359 = vector.broadcast %358 : vector<2x1xf32> to vector<2x128xf32>
    %360 = arith.mulf %355, %359 : vector<2x128xf32>
    %361 = arith.maximumf %329, %360 : vector<2x128xf32>
    %362 = vector.extract_strided_slice %2 {offsets = [0, 11], sizes = [2, 1], strides = [1, 1]} : vector<2x128xf32> to vector<2x1xf32>
    %363 = vector.extract_strided_slice %4 {offsets = [0, 11], sizes = [2, 1], strides = [1, 1]} : vector<2x128xf32> to vector<2x1xf32>
    %364 = arith.subf %363, %362 : vector<2x1xf32>
    %cst_80 = arith.constant 1.000000e+00 : f32
    %365 = vector.broadcast %cst_80 : f32 to vector<2x1xf32>
    %366 = arith.addf %364, %365 : vector<2x1xf32>
    %367 = vector.broadcast %363 : vector<2x1xf32> to vector<2x128xf32>
    %368 = arith.minimumf %4, %367 : vector<2x128xf32>
    %369 = vector.broadcast %362 : vector<2x1xf32> to vector<2x128xf32>
    %370 = arith.maximumf %2, %369 : vector<2x128xf32>
    %371 = arith.subf %368, %370 : vector<2x128xf32>
    %cst_81 = arith.constant 1.000000e+00 : f32
    %372 = vector.broadcast %cst_81 : f32 to vector<2x128xf32>
    %373 = arith.addf %371, %372 : vector<2x128xf32>
    %cst_82 = arith.constant 0.000000e+00 : f32
    %374 = vector.broadcast %cst_82 : f32 to vector<2x128xf32>
    %375 = arith.maximumf %374, %373 : vector<2x128xf32>
    %376 = vector.broadcast %366 : vector<2x1xf32> to vector<2x128xf32>
    %377 = arith.addf %7, %376 : vector<2x128xf32>
    %378 = arith.subf %377, %375 : vector<2x128xf32>
    %cst_83 = arith.constant 0.699999988 : f32
    %379 = vector.broadcast %cst_83 : f32 to vector<2x128xf32>
    %380 = arith.mulf %379, %378 : vector<2x128xf32>
    %381 = arith.cmpf ogt, %375, %380 : vector<2x128xf32>
    %c11_i32 = arith.constant 11 : i32
    %382 = vector.broadcast %c11_i32 : i32 to vector<2x128xi32>
    %383 = arith.cmpi sgt, %8, %382 : vector<2x128xi32>
    %384 = arith.andi %381, %383 : vector<2x128xi1>
    %cst_84 = arith.constant 1.000000e+00 : f32
    %cst_85 = arith.constant 0.000000e+00 : f32
    %385 = vector.broadcast %cst_84 : f32 to vector<2x128xf32>
    %386 = vector.broadcast %cst_85 : f32 to vector<2x128xf32>
    %387 = arith.select %384, %385, %386 : vector<2x128xi1>, vector<2x128xf32>
    %388 = vector.extract_strided_slice %361 {offsets = [0, 11], sizes = [2, 1], strides = [1, 1]} : vector<2x128xf32> to vector<2x1xf32>
    %cst_86 = arith.constant 1.000000e+00 : f32
    %389 = vector.broadcast %cst_86 : f32 to vector<2x1xf32>
    %390 = arith.subf %389, %388 : vector<2x1xf32>
    %391 = vector.broadcast %390 : vector<2x1xf32> to vector<2x128xf32>
    %392 = arith.mulf %387, %391 : vector<2x128xf32>
    %393 = arith.maximumf %361, %392 : vector<2x128xf32>
    %394 = vector.extract_strided_slice %2 {offsets = [0, 12], sizes = [2, 1], strides = [1, 1]} : vector<2x128xf32> to vector<2x1xf32>
    %395 = vector.extract_strided_slice %4 {offsets = [0, 12], sizes = [2, 1], strides = [1, 1]} : vector<2x128xf32> to vector<2x1xf32>
    %396 = arith.subf %395, %394 : vector<2x1xf32>
    %cst_87 = arith.constant 1.000000e+00 : f32
    %397 = vector.broadcast %cst_87 : f32 to vector<2x1xf32>
    %398 = arith.addf %396, %397 : vector<2x1xf32>
    %399 = vector.broadcast %395 : vector<2x1xf32> to vector<2x128xf32>
    %400 = arith.minimumf %4, %399 : vector<2x128xf32>
    %401 = vector.broadcast %394 : vector<2x1xf32> to vector<2x128xf32>
    %402 = arith.maximumf %2, %401 : vector<2x128xf32>
    %403 = arith.subf %400, %402 : vector<2x128xf32>
    %cst_88 = arith.constant 1.000000e+00 : f32
    %404 = vector.broadcast %cst_88 : f32 to vector<2x128xf32>
    %405 = arith.addf %403, %404 : vector<2x128xf32>
    %cst_89 = arith.constant 0.000000e+00 : f32
    %406 = vector.broadcast %cst_89 : f32 to vector<2x128xf32>
    %407 = arith.maximumf %406, %405 : vector<2x128xf32>
    %408 = vector.broadcast %398 : vector<2x1xf32> to vector<2x128xf32>
    %409 = arith.addf %7, %408 : vector<2x128xf32>
    %410 = arith.subf %409, %407 : vector<2x128xf32>
    %cst_90 = arith.constant 0.699999988 : f32
    %411 = vector.broadcast %cst_90 : f32 to vector<2x128xf32>
    %412 = arith.mulf %411, %410 : vector<2x128xf32>
    %413 = arith.cmpf ogt, %407, %412 : vector<2x128xf32>
    %c12_i32 = arith.constant 12 : i32
    %414 = vector.broadcast %c12_i32 : i32 to vector<2x128xi32>
    %415 = arith.cmpi sgt, %8, %414 : vector<2x128xi32>
    %416 = arith.andi %413, %415 : vector<2x128xi1>
    %cst_91 = arith.constant 1.000000e+00 : f32
    %cst_92 = arith.constant 0.000000e+00 : f32
    %417 = vector.broadcast %cst_91 : f32 to vector<2x128xf32>
    %418 = vector.broadcast %cst_92 : f32 to vector<2x128xf32>
    %419 = arith.select %416, %417, %418 : vector<2x128xi1>, vector<2x128xf32>
    %420 = vector.extract_strided_slice %393 {offsets = [0, 12], sizes = [2, 1], strides = [1, 1]} : vector<2x128xf32> to vector<2x1xf32>
    %cst_93 = arith.constant 1.000000e+00 : f32
    %421 = vector.broadcast %cst_93 : f32 to vector<2x1xf32>
    %422 = arith.subf %421, %420 : vector<2x1xf32>
    %423 = vector.broadcast %422 : vector<2x1xf32> to vector<2x128xf32>
    %424 = arith.mulf %419, %423 : vector<2x128xf32>
    %425 = arith.maximumf %393, %424 : vector<2x128xf32>
    %426 = vector.extract_strided_slice %2 {offsets = [0, 13], sizes = [2, 1], strides = [1, 1]} : vector<2x128xf32> to vector<2x1xf32>
    %427 = vector.extract_strided_slice %4 {offsets = [0, 13], sizes = [2, 1], strides = [1, 1]} : vector<2x128xf32> to vector<2x1xf32>
    %428 = arith.subf %427, %426 : vector<2x1xf32>
    %cst_94 = arith.constant 1.000000e+00 : f32
    %429 = vector.broadcast %cst_94 : f32 to vector<2x1xf32>
    %430 = arith.addf %428, %429 : vector<2x1xf32>
    %431 = vector.broadcast %427 : vector<2x1xf32> to vector<2x128xf32>
    %432 = arith.minimumf %4, %431 : vector<2x128xf32>
    %433 = vector.broadcast %426 : vector<2x1xf32> to vector<2x128xf32>
    %434 = arith.maximumf %2, %433 : vector<2x128xf32>
    %435 = arith.subf %432, %434 : vector<2x128xf32>
    %cst_95 = arith.constant 1.000000e+00 : f32
    %436 = vector.broadcast %cst_95 : f32 to vector<2x128xf32>
    %437 = arith.addf %435, %436 : vector<2x128xf32>
    %cst_96 = arith.constant 0.000000e+00 : f32
    %438 = vector.broadcast %cst_96 : f32 to vector<2x128xf32>
    %439 = arith.maximumf %438, %437 : vector<2x128xf32>
    %440 = vector.broadcast %430 : vector<2x1xf32> to vector<2x128xf32>
    %441 = arith.addf %7, %440 : vector<2x128xf32>
    %442 = arith.subf %441, %439 : vector<2x128xf32>
    %cst_97 = arith.constant 0.699999988 : f32
    %443 = vector.broadcast %cst_97 : f32 to vector<2x128xf32>
    %444 = arith.mulf %443, %442 : vector<2x128xf32>
    %445 = arith.cmpf ogt, %439, %444 : vector<2x128xf32>
    %c13_i32 = arith.constant 13 : i32
    %446 = vector.broadcast %c13_i32 : i32 to vector<2x128xi32>
    %447 = arith.cmpi sgt, %8, %446 : vector<2x128xi32>
    %448 = arith.andi %445, %447 : vector<2x128xi1>
    %cst_98 = arith.constant 1.000000e+00 : f32
    %cst_99 = arith.constant 0.000000e+00 : f32
    %449 = vector.broadcast %cst_98 : f32 to vector<2x128xf32>
    %450 = vector.broadcast %cst_99 : f32 to vector<2x128xf32>
    %451 = arith.select %448, %449, %450 : vector<2x128xi1>, vector<2x128xf32>
    %452 = vector.extract_strided_slice %425 {offsets = [0, 13], sizes = [2, 1], strides = [1, 1]} : vector<2x128xf32> to vector<2x1xf32>
    %cst_100 = arith.constant 1.000000e+00 : f32
    %453 = vector.broadcast %cst_100 : f32 to vector<2x1xf32>
    %454 = arith.subf %453, %452 : vector<2x1xf32>
    %455 = vector.broadcast %454 : vector<2x1xf32> to vector<2x128xf32>
    %456 = arith.mulf %451, %455 : vector<2x128xf32>
    %457 = arith.maximumf %425, %456 : vector<2x128xf32>
    %458 = vector.extract_strided_slice %2 {offsets = [0, 14], sizes = [2, 1], strides = [1, 1]} : vector<2x128xf32> to vector<2x1xf32>
    %459 = vector.extract_strided_slice %4 {offsets = [0, 14], sizes = [2, 1], strides = [1, 1]} : vector<2x128xf32> to vector<2x1xf32>
    %460 = arith.subf %459, %458 : vector<2x1xf32>
    %cst_101 = arith.constant 1.000000e+00 : f32
    %461 = vector.broadcast %cst_101 : f32 to vector<2x1xf32>
    %462 = arith.addf %460, %461 : vector<2x1xf32>
    %463 = vector.broadcast %459 : vector<2x1xf32> to vector<2x128xf32>
    %464 = arith.minimumf %4, %463 : vector<2x128xf32>
    %465 = vector.broadcast %458 : vector<2x1xf32> to vector<2x128xf32>
    %466 = arith.maximumf %2, %465 : vector<2x128xf32>
    %467 = arith.subf %464, %466 : vector<2x128xf32>
    %cst_102 = arith.constant 1.000000e+00 : f32
    %468 = vector.broadcast %cst_102 : f32 to vector<2x128xf32>
    %469 = arith.addf %467, %468 : vector<2x128xf32>
    %cst_103 = arith.constant 0.000000e+00 : f32
    %470 = vector.broadcast %cst_103 : f32 to vector<2x128xf32>
    %471 = arith.maximumf %470, %469 : vector<2x128xf32>
    %472 = vector.broadcast %462 : vector<2x1xf32> to vector<2x128xf32>
    %473 = arith.addf %7, %472 : vector<2x128xf32>
    %474 = arith.subf %473, %471 : vector<2x128xf32>
    %cst_104 = arith.constant 0.699999988 : f32
    %475 = vector.broadcast %cst_104 : f32 to vector<2x128xf32>
    %476 = arith.mulf %475, %474 : vector<2x128xf32>
    %477 = arith.cmpf ogt, %471, %476 : vector<2x128xf32>
    %c14_i32 = arith.constant 14 : i32
    %478 = vector.broadcast %c14_i32 : i32 to vector<2x128xi32>
    %479 = arith.cmpi sgt, %8, %478 : vector<2x128xi32>
    %480 = arith.andi %477, %479 : vector<2x128xi1>
    %cst_105 = arith.constant 1.000000e+00 : f32
    %cst_106 = arith.constant 0.000000e+00 : f32
    %481 = vector.broadcast %cst_105 : f32 to vector<2x128xf32>
    %482 = vector.broadcast %cst_106 : f32 to vector<2x128xf32>
    %483 = arith.select %480, %481, %482 : vector<2x128xi1>, vector<2x128xf32>
    %484 = vector.extract_strided_slice %457 {offsets = [0, 14], sizes = [2, 1], strides = [1, 1]} : vector<2x128xf32> to vector<2x1xf32>
    %cst_107 = arith.constant 1.000000e+00 : f32
    %485 = vector.broadcast %cst_107 : f32 to vector<2x1xf32>
    %486 = arith.subf %485, %484 : vector<2x1xf32>
    %487 = vector.broadcast %486 : vector<2x1xf32> to vector<2x128xf32>
    %488 = arith.mulf %483, %487 : vector<2x128xf32>
    %489 = arith.maximumf %457, %488 : vector<2x128xf32>
    %490 = vector.extract_strided_slice %2 {offsets = [0, 15], sizes = [2, 1], strides = [1, 1]} : vector<2x128xf32> to vector<2x1xf32>
    %491 = vector.extract_strided_slice %4 {offsets = [0, 15], sizes = [2, 1], strides = [1, 1]} : vector<2x128xf32> to vector<2x1xf32>
    %492 = arith.subf %491, %490 : vector<2x1xf32>
    %cst_108 = arith.constant 1.000000e+00 : f32
    %493 = vector.broadcast %cst_108 : f32 to vector<2x1xf32>
    %494 = arith.addf %492, %493 : vector<2x1xf32>
    %495 = vector.broadcast %491 : vector<2x1xf32> to vector<2x128xf32>
    %496 = arith.minimumf %4, %495 : vector<2x128xf32>
    %497 = vector.broadcast %490 : vector<2x1xf32> to vector<2x128xf32>
    %498 = arith.maximumf %2, %497 : vector<2x128xf32>
    %499 = arith.subf %496, %498 : vector<2x128xf32>
    %cst_109 = arith.constant 1.000000e+00 : f32
    %500 = vector.broadcast %cst_109 : f32 to vector<2x128xf32>
    %501 = arith.addf %499, %500 : vector<2x128xf32>
    %cst_110 = arith.constant 0.000000e+00 : f32
    %502 = vector.broadcast %cst_110 : f32 to vector<2x128xf32>
    %503 = arith.maximumf %502, %501 : vector<2x128xf32>
    %504 = vector.broadcast %494 : vector<2x1xf32> to vector<2x128xf32>
    %505 = arith.addf %7, %504 : vector<2x128xf32>
    %506 = arith.subf %505, %503 : vector<2x128xf32>
    %cst_111 = arith.constant 0.699999988 : f32
    %507 = vector.broadcast %cst_111 : f32 to vector<2x128xf32>
    %508 = arith.mulf %507, %506 : vector<2x128xf32>
    %509 = arith.cmpf ogt, %503, %508 : vector<2x128xf32>
    %c15_i32 = arith.constant 15 : i32
    %510 = vector.broadcast %c15_i32 : i32 to vector<2x128xi32>
    %511 = arith.cmpi sgt, %8, %510 : vector<2x128xi32>
    %512 = arith.andi %509, %511 : vector<2x128xi1>
    %cst_112 = arith.constant 1.000000e+00 : f32
    %cst_113 = arith.constant 0.000000e+00 : f32
    %513 = vector.broadcast %cst_112 : f32 to vector<2x128xf32>
    %514 = vector.broadcast %cst_113 : f32 to vector<2x128xf32>
    %515 = arith.select %512, %513, %514 : vector<2x128xi1>, vector<2x128xf32>
    %516 = vector.extract_strided_slice %489 {offsets = [0, 15], sizes = [2, 1], strides = [1, 1]} : vector<2x128xf32> to vector<2x1xf32>
    %cst_114 = arith.constant 1.000000e+00 : f32
    %517 = vector.broadcast %cst_114 : f32 to vector<2x1xf32>
    %518 = arith.subf %517, %516 : vector<2x1xf32>
    %519 = vector.broadcast %518 : vector<2x1xf32> to vector<2x128xf32>
    %520 = arith.mulf %515, %519 : vector<2x128xf32>
    %521 = arith.maximumf %489, %520 : vector<2x128xf32>
    %522 = vector.extract_strided_slice %2 {offsets = [0, 16], sizes = [2, 1], strides = [1, 1]} : vector<2x128xf32> to vector<2x1xf32>
    %523 = vector.extract_strided_slice %4 {offsets = [0, 16], sizes = [2, 1], strides = [1, 1]} : vector<2x128xf32> to vector<2x1xf32>
    %524 = arith.subf %523, %522 : vector<2x1xf32>
    %cst_115 = arith.constant 1.000000e+00 : f32
    %525 = vector.broadcast %cst_115 : f32 to vector<2x1xf32>
    %526 = arith.addf %524, %525 : vector<2x1xf32>
    %527 = vector.broadcast %523 : vector<2x1xf32> to vector<2x128xf32>
    %528 = arith.minimumf %4, %527 : vector<2x128xf32>
    %529 = vector.broadcast %522 : vector<2x1xf32> to vector<2x128xf32>
    %530 = arith.maximumf %2, %529 : vector<2x128xf32>
    %531 = arith.subf %528, %530 : vector<2x128xf32>
    %cst_116 = arith.constant 1.000000e+00 : f32
    %532 = vector.broadcast %cst_116 : f32 to vector<2x128xf32>
    %533 = arith.addf %531, %532 : vector<2x128xf32>
    %cst_117 = arith.constant 0.000000e+00 : f32
    %534 = vector.broadcast %cst_117 : f32 to vector<2x128xf32>
    %535 = arith.maximumf %534, %533 : vector<2x128xf32>
    %536 = vector.broadcast %526 : vector<2x1xf32> to vector<2x128xf32>
    %537 = arith.addf %7, %536 : vector<2x128xf32>
    %538 = arith.subf %537, %535 : vector<2x128xf32>
    %cst_118 = arith.constant 0.699999988 : f32
    %539 = vector.broadcast %cst_118 : f32 to vector<2x128xf32>
    %540 = arith.mulf %539, %538 : vector<2x128xf32>
    %541 = arith.cmpf ogt, %535, %540 : vector<2x128xf32>
    %c16_i32 = arith.constant 16 : i32
    %542 = vector.broadcast %c16_i32 : i32 to vector<2x128xi32>
    %543 = arith.cmpi sgt, %8, %542 : vector<2x128xi32>
    %544 = arith.andi %541, %543 : vector<2x128xi1>
    %cst_119 = arith.constant 1.000000e+00 : f32
    %cst_120 = arith.constant 0.000000e+00 : f32
    %545 = vector.broadcast %cst_119 : f32 to vector<2x128xf32>
    %546 = vector.broadcast %cst_120 : f32 to vector<2x128xf32>
    %547 = arith.select %544, %545, %546 : vector<2x128xi1>, vector<2x128xf32>
    %548 = vector.extract_strided_slice %521 {offsets = [0, 16], sizes = [2, 1], strides = [1, 1]} : vector<2x128xf32> to vector<2x1xf32>
    %cst_121 = arith.constant 1.000000e+00 : f32
    %549 = vector.broadcast %cst_121 : f32 to vector<2x1xf32>
    %550 = arith.subf %549, %548 : vector<2x1xf32>
    %551 = vector.broadcast %550 : vector<2x1xf32> to vector<2x128xf32>
    %552 = arith.mulf %547, %551 : vector<2x128xf32>
    %553 = arith.maximumf %521, %552 : vector<2x128xf32>
    %554 = vector.extract_strided_slice %2 {offsets = [0, 17], sizes = [2, 1], strides = [1, 1]} : vector<2x128xf32> to vector<2x1xf32>
    %555 = vector.extract_strided_slice %4 {offsets = [0, 17], sizes = [2, 1], strides = [1, 1]} : vector<2x128xf32> to vector<2x1xf32>
    %556 = arith.subf %555, %554 : vector<2x1xf32>
    %cst_122 = arith.constant 1.000000e+00 : f32
    %557 = vector.broadcast %cst_122 : f32 to vector<2x1xf32>
    %558 = arith.addf %556, %557 : vector<2x1xf32>
    %559 = vector.broadcast %555 : vector<2x1xf32> to vector<2x128xf32>
    %560 = arith.minimumf %4, %559 : vector<2x128xf32>
    %561 = vector.broadcast %554 : vector<2x1xf32> to vector<2x128xf32>
    %562 = arith.maximumf %2, %561 : vector<2x128xf32>
    %563 = arith.subf %560, %562 : vector<2x128xf32>
    %cst_123 = arith.constant 1.000000e+00 : f32
    %564 = vector.broadcast %cst_123 : f32 to vector<2x128xf32>
    %565 = arith.addf %563, %564 : vector<2x128xf32>
    %cst_124 = arith.constant 0.000000e+00 : f32
    %566 = vector.broadcast %cst_124 : f32 to vector<2x128xf32>
    %567 = arith.maximumf %566, %565 : vector<2x128xf32>
    %568 = vector.broadcast %558 : vector<2x1xf32> to vector<2x128xf32>
    %569 = arith.addf %7, %568 : vector<2x128xf32>
    %570 = arith.subf %569, %567 : vector<2x128xf32>
    %cst_125 = arith.constant 0.699999988 : f32
    %571 = vector.broadcast %cst_125 : f32 to vector<2x128xf32>
    %572 = arith.mulf %571, %570 : vector<2x128xf32>
    %573 = arith.cmpf ogt, %567, %572 : vector<2x128xf32>
    %c17_i32 = arith.constant 17 : i32
    %574 = vector.broadcast %c17_i32 : i32 to vector<2x128xi32>
    %575 = arith.cmpi sgt, %8, %574 : vector<2x128xi32>
    %576 = arith.andi %573, %575 : vector<2x128xi1>
    %cst_126 = arith.constant 1.000000e+00 : f32
    %cst_127 = arith.constant 0.000000e+00 : f32
    %577 = vector.broadcast %cst_126 : f32 to vector<2x128xf32>
    %578 = vector.broadcast %cst_127 : f32 to vector<2x128xf32>
    %579 = arith.select %576, %577, %578 : vector<2x128xi1>, vector<2x128xf32>
    %580 = vector.extract_strided_slice %553 {offsets = [0, 17], sizes = [2, 1], strides = [1, 1]} : vector<2x128xf32> to vector<2x1xf32>
    %cst_128 = arith.constant 1.000000e+00 : f32
    %581 = vector.broadcast %cst_128 : f32 to vector<2x1xf32>
    %582 = arith.subf %581, %580 : vector<2x1xf32>
    %583 = vector.broadcast %582 : vector<2x1xf32> to vector<2x128xf32>
    %584 = arith.mulf %579, %583 : vector<2x128xf32>
    %585 = arith.maximumf %553, %584 : vector<2x128xf32>
    %586 = vector.extract_strided_slice %2 {offsets = [0, 18], sizes = [2, 1], strides = [1, 1]} : vector<2x128xf32> to vector<2x1xf32>
    %587 = vector.extract_strided_slice %4 {offsets = [0, 18], sizes = [2, 1], strides = [1, 1]} : vector<2x128xf32> to vector<2x1xf32>
    %588 = arith.subf %587, %586 : vector<2x1xf32>
    %cst_129 = arith.constant 1.000000e+00 : f32
    %589 = vector.broadcast %cst_129 : f32 to vector<2x1xf32>
    %590 = arith.addf %588, %589 : vector<2x1xf32>
    %591 = vector.broadcast %587 : vector<2x1xf32> to vector<2x128xf32>
    %592 = arith.minimumf %4, %591 : vector<2x128xf32>
    %593 = vector.broadcast %586 : vector<2x1xf32> to vector<2x128xf32>
    %594 = arith.maximumf %2, %593 : vector<2x128xf32>
    %595 = arith.subf %592, %594 : vector<2x128xf32>
    %cst_130 = arith.constant 1.000000e+00 : f32
    %596 = vector.broadcast %cst_130 : f32 to vector<2x128xf32>
    %597 = arith.addf %595, %596 : vector<2x128xf32>
    %cst_131 = arith.constant 0.000000e+00 : f32
    %598 = vector.broadcast %cst_131 : f32 to vector<2x128xf32>
    %599 = arith.maximumf %598, %597 : vector<2x128xf32>
    %600 = vector.broadcast %590 : vector<2x1xf32> to vector<2x128xf32>
    %601 = arith.addf %7, %600 : vector<2x128xf32>
    %602 = arith.subf %601, %599 : vector<2x128xf32>
    %cst_132 = arith.constant 0.699999988 : f32
    %603 = vector.broadcast %cst_132 : f32 to vector<2x128xf32>
    %604 = arith.mulf %603, %602 : vector<2x128xf32>
    %605 = arith.cmpf ogt, %599, %604 : vector<2x128xf32>
    %c18_i32 = arith.constant 18 : i32
    %606 = vector.broadcast %c18_i32 : i32 to vector<2x128xi32>
    %607 = arith.cmpi sgt, %8, %606 : vector<2x128xi32>
    %608 = arith.andi %605, %607 : vector<2x128xi1>
    %cst_133 = arith.constant 1.000000e+00 : f32
    %cst_134 = arith.constant 0.000000e+00 : f32
    %609 = vector.broadcast %cst_133 : f32 to vector<2x128xf32>
    %610 = vector.broadcast %cst_134 : f32 to vector<2x128xf32>
    %611 = arith.select %608, %609, %610 : vector<2x128xi1>, vector<2x128xf32>
    %612 = vector.extract_strided_slice %585 {offsets = [0, 18], sizes = [2, 1], strides = [1, 1]} : vector<2x128xf32> to vector<2x1xf32>
    %cst_135 = arith.constant 1.000000e+00 : f32
    %613 = vector.broadcast %cst_135 : f32 to vector<2x1xf32>
    %614 = arith.subf %613, %612 : vector<2x1xf32>
    %615 = vector.broadcast %614 : vector<2x1xf32> to vector<2x128xf32>
    %616 = arith.mulf %611, %615 : vector<2x128xf32>
    %617 = arith.maximumf %585, %616 : vector<2x128xf32>
    %618 = vector.extract_strided_slice %2 {offsets = [0, 19], sizes = [2, 1], strides = [1, 1]} : vector<2x128xf32> to vector<2x1xf32>
    %619 = vector.extract_strided_slice %4 {offsets = [0, 19], sizes = [2, 1], strides = [1, 1]} : vector<2x128xf32> to vector<2x1xf32>
    %620 = arith.subf %619, %618 : vector<2x1xf32>
    %cst_136 = arith.constant 1.000000e+00 : f32
    %621 = vector.broadcast %cst_136 : f32 to vector<2x1xf32>
    %622 = arith.addf %620, %621 : vector<2x1xf32>
    %623 = vector.broadcast %619 : vector<2x1xf32> to vector<2x128xf32>
    %624 = arith.minimumf %4, %623 : vector<2x128xf32>
    %625 = vector.broadcast %618 : vector<2x1xf32> to vector<2x128xf32>
    %626 = arith.maximumf %2, %625 : vector<2x128xf32>
    %627 = arith.subf %624, %626 : vector<2x128xf32>
    %cst_137 = arith.constant 1.000000e+00 : f32
    %628 = vector.broadcast %cst_137 : f32 to vector<2x128xf32>
    %629 = arith.addf %627, %628 : vector<2x128xf32>
    %cst_138 = arith.constant 0.000000e+00 : f32
    %630 = vector.broadcast %cst_138 : f32 to vector<2x128xf32>
    %631 = arith.maximumf %630, %629 : vector<2x128xf32>
    %632 = vector.broadcast %622 : vector<2x1xf32> to vector<2x128xf32>
    %633 = arith.addf %7, %632 : vector<2x128xf32>
    %634 = arith.subf %633, %631 : vector<2x128xf32>
    %cst_139 = arith.constant 0.699999988 : f32
    %635 = vector.broadcast %cst_139 : f32 to vector<2x128xf32>
    %636 = arith.mulf %635, %634 : vector<2x128xf32>
    %637 = arith.cmpf ogt, %631, %636 : vector<2x128xf32>
    %c19_i32 = arith.constant 19 : i32
    %638 = vector.broadcast %c19_i32 : i32 to vector<2x128xi32>
    %639 = arith.cmpi sgt, %8, %638 : vector<2x128xi32>
    %640 = arith.andi %637, %639 : vector<2x128xi1>
    %cst_140 = arith.constant 1.000000e+00 : f32
    %cst_141 = arith.constant 0.000000e+00 : f32
    %641 = vector.broadcast %cst_140 : f32 to vector<2x128xf32>
    %642 = vector.broadcast %cst_141 : f32 to vector<2x128xf32>
    %643 = arith.select %640, %641, %642 : vector<2x128xi1>, vector<2x128xf32>
    %644 = vector.extract_strided_slice %617 {offsets = [0, 19], sizes = [2, 1], strides = [1, 1]} : vector<2x128xf32> to vector<2x1xf32>
    %cst_142 = arith.constant 1.000000e+00 : f32
    %645 = vector.broadcast %cst_142 : f32 to vector<2x1xf32>
    %646 = arith.subf %645, %644 : vector<2x1xf32>
    %647 = vector.broadcast %646 : vector<2x1xf32> to vector<2x128xf32>
    %648 = arith.mulf %643, %647 : vector<2x128xf32>
    %649 = arith.maximumf %617, %648 : vector<2x128xf32>
    %650 = vector.extract_strided_slice %2 {offsets = [0, 20], sizes = [2, 1], strides = [1, 1]} : vector<2x128xf32> to vector<2x1xf32>
    %651 = vector.extract_strided_slice %4 {offsets = [0, 20], sizes = [2, 1], strides = [1, 1]} : vector<2x128xf32> to vector<2x1xf32>
    %652 = arith.subf %651, %650 : vector<2x1xf32>
    %cst_143 = arith.constant 1.000000e+00 : f32
    %653 = vector.broadcast %cst_143 : f32 to vector<2x1xf32>
    %654 = arith.addf %652, %653 : vector<2x1xf32>
    %655 = vector.broadcast %651 : vector<2x1xf32> to vector<2x128xf32>
    %656 = arith.minimumf %4, %655 : vector<2x128xf32>
    %657 = vector.broadcast %650 : vector<2x1xf32> to vector<2x128xf32>
    %658 = arith.maximumf %2, %657 : vector<2x128xf32>
    %659 = arith.subf %656, %658 : vector<2x128xf32>
    %cst_144 = arith.constant 1.000000e+00 : f32
    %660 = vector.broadcast %cst_144 : f32 to vector<2x128xf32>
    %661 = arith.addf %659, %660 : vector<2x128xf32>
    %cst_145 = arith.constant 0.000000e+00 : f32
    %662 = vector.broadcast %cst_145 : f32 to vector<2x128xf32>
    %663 = arith.maximumf %662, %661 : vector<2x128xf32>
    %664 = vector.broadcast %654 : vector<2x1xf32> to vector<2x128xf32>
    %665 = arith.addf %7, %664 : vector<2x128xf32>
    %666 = arith.subf %665, %663 : vector<2x128xf32>
    %cst_146 = arith.constant 0.699999988 : f32
    %667 = vector.broadcast %cst_146 : f32 to vector<2x128xf32>
    %668 = arith.mulf %667, %666 : vector<2x128xf32>
    %669 = arith.cmpf ogt, %663, %668 : vector<2x128xf32>
    %c20_i32 = arith.constant 20 : i32
    %670 = vector.broadcast %c20_i32 : i32 to vector<2x128xi32>
    %671 = arith.cmpi sgt, %8, %670 : vector<2x128xi32>
    %672 = arith.andi %669, %671 : vector<2x128xi1>
    %cst_147 = arith.constant 1.000000e+00 : f32
    %cst_148 = arith.constant 0.000000e+00 : f32
    %673 = vector.broadcast %cst_147 : f32 to vector<2x128xf32>
    %674 = vector.broadcast %cst_148 : f32 to vector<2x128xf32>
    %675 = arith.select %672, %673, %674 : vector<2x128xi1>, vector<2x128xf32>
    %676 = vector.extract_strided_slice %649 {offsets = [0, 20], sizes = [2, 1], strides = [1, 1]} : vector<2x128xf32> to vector<2x1xf32>
    %cst_149 = arith.constant 1.000000e+00 : f32
    %677 = vector.broadcast %cst_149 : f32 to vector<2x1xf32>
    %678 = arith.subf %677, %676 : vector<2x1xf32>
    %679 = vector.broadcast %678 : vector<2x1xf32> to vector<2x128xf32>
    %680 = arith.mulf %675, %679 : vector<2x128xf32>
    %681 = arith.maximumf %649, %680 : vector<2x128xf32>
    %682 = vector.extract_strided_slice %2 {offsets = [0, 21], sizes = [2, 1], strides = [1, 1]} : vector<2x128xf32> to vector<2x1xf32>
    %683 = vector.extract_strided_slice %4 {offsets = [0, 21], sizes = [2, 1], strides = [1, 1]} : vector<2x128xf32> to vector<2x1xf32>
    %684 = arith.subf %683, %682 : vector<2x1xf32>
    %cst_150 = arith.constant 1.000000e+00 : f32
    %685 = vector.broadcast %cst_150 : f32 to vector<2x1xf32>
    %686 = arith.addf %684, %685 : vector<2x1xf32>
    %687 = vector.broadcast %683 : vector<2x1xf32> to vector<2x128xf32>
    %688 = arith.minimumf %4, %687 : vector<2x128xf32>
    %689 = vector.broadcast %682 : vector<2x1xf32> to vector<2x128xf32>
    %690 = arith.maximumf %2, %689 : vector<2x128xf32>
    %691 = arith.subf %688, %690 : vector<2x128xf32>
    %cst_151 = arith.constant 1.000000e+00 : f32
    %692 = vector.broadcast %cst_151 : f32 to vector<2x128xf32>
    %693 = arith.addf %691, %692 : vector<2x128xf32>
    %cst_152 = arith.constant 0.000000e+00 : f32
    %694 = vector.broadcast %cst_152 : f32 to vector<2x128xf32>
    %695 = arith.maximumf %694, %693 : vector<2x128xf32>
    %696 = vector.broadcast %686 : vector<2x1xf32> to vector<2x128xf32>
    %697 = arith.addf %7, %696 : vector<2x128xf32>
    %698 = arith.subf %697, %695 : vector<2x128xf32>
    %cst_153 = arith.constant 0.699999988 : f32
    %699 = vector.broadcast %cst_153 : f32 to vector<2x128xf32>
    %700 = arith.mulf %699, %698 : vector<2x128xf32>
    %701 = arith.cmpf ogt, %695, %700 : vector<2x128xf32>
    %c21_i32 = arith.constant 21 : i32
    %702 = vector.broadcast %c21_i32 : i32 to vector<2x128xi32>
    %703 = arith.cmpi sgt, %8, %702 : vector<2x128xi32>
    %704 = arith.andi %701, %703 : vector<2x128xi1>
    %cst_154 = arith.constant 1.000000e+00 : f32
    %cst_155 = arith.constant 0.000000e+00 : f32
    %705 = vector.broadcast %cst_154 : f32 to vector<2x128xf32>
    %706 = vector.broadcast %cst_155 : f32 to vector<2x128xf32>
    %707 = arith.select %704, %705, %706 : vector<2x128xi1>, vector<2x128xf32>
    %708 = vector.extract_strided_slice %681 {offsets = [0, 21], sizes = [2, 1], strides = [1, 1]} : vector<2x128xf32> to vector<2x1xf32>
    %cst_156 = arith.constant 1.000000e+00 : f32
    %709 = vector.broadcast %cst_156 : f32 to vector<2x1xf32>
    %710 = arith.subf %709, %708 : vector<2x1xf32>
    %711 = vector.broadcast %710 : vector<2x1xf32> to vector<2x128xf32>
    %712 = arith.mulf %707, %711 : vector<2x128xf32>
    %713 = arith.maximumf %681, %712 : vector<2x128xf32>
    %714 = vector.extract_strided_slice %2 {offsets = [0, 22], sizes = [2, 1], strides = [1, 1]} : vector<2x128xf32> to vector<2x1xf32>
    %715 = vector.extract_strided_slice %4 {offsets = [0, 22], sizes = [2, 1], strides = [1, 1]} : vector<2x128xf32> to vector<2x1xf32>
    %716 = arith.subf %715, %714 : vector<2x1xf32>
    %cst_157 = arith.constant 1.000000e+00 : f32
    %717 = vector.broadcast %cst_157 : f32 to vector<2x1xf32>
    %718 = arith.addf %716, %717 : vector<2x1xf32>
    %719 = vector.broadcast %715 : vector<2x1xf32> to vector<2x128xf32>
    %720 = arith.minimumf %4, %719 : vector<2x128xf32>
    %721 = vector.broadcast %714 : vector<2x1xf32> to vector<2x128xf32>
    %722 = arith.maximumf %2, %721 : vector<2x128xf32>
    %723 = arith.subf %720, %722 : vector<2x128xf32>
    %cst_158 = arith.constant 1.000000e+00 : f32
    %724 = vector.broadcast %cst_158 : f32 to vector<2x128xf32>
    %725 = arith.addf %723, %724 : vector<2x128xf32>
    %cst_159 = arith.constant 0.000000e+00 : f32
    %726 = vector.broadcast %cst_159 : f32 to vector<2x128xf32>
    %727 = arith.maximumf %726, %725 : vector<2x128xf32>
    %728 = vector.broadcast %718 : vector<2x1xf32> to vector<2x128xf32>
    %729 = arith.addf %7, %728 : vector<2x128xf32>
    %730 = arith.subf %729, %727 : vector<2x128xf32>
    %cst_160 = arith.constant 0.699999988 : f32
    %731 = vector.broadcast %cst_160 : f32 to vector<2x128xf32>
    %732 = arith.mulf %731, %730 : vector<2x128xf32>
    %733 = arith.cmpf ogt, %727, %732 : vector<2x128xf32>
    %c22_i32 = arith.constant 22 : i32
    %734 = vector.broadcast %c22_i32 : i32 to vector<2x128xi32>
    %735 = arith.cmpi sgt, %8, %734 : vector<2x128xi32>
    %736 = arith.andi %733, %735 : vector<2x128xi1>
    %cst_161 = arith.constant 1.000000e+00 : f32
    %cst_162 = arith.constant 0.000000e+00 : f32
    %737 = vector.broadcast %cst_161 : f32 to vector<2x128xf32>
    %738 = vector.broadcast %cst_162 : f32 to vector<2x128xf32>
    %739 = arith.select %736, %737, %738 : vector<2x128xi1>, vector<2x128xf32>
    %740 = vector.extract_strided_slice %713 {offsets = [0, 22], sizes = [2, 1], strides = [1, 1]} : vector<2x128xf32> to vector<2x1xf32>
    %cst_163 = arith.constant 1.000000e+00 : f32
    %741 = vector.broadcast %cst_163 : f32 to vector<2x1xf32>
    %742 = arith.subf %741, %740 : vector<2x1xf32>
    %743 = vector.broadcast %742 : vector<2x1xf32> to vector<2x128xf32>
    %744 = arith.mulf %739, %743 : vector<2x128xf32>
    %745 = arith.maximumf %713, %744 : vector<2x128xf32>
    %746 = vector.extract_strided_slice %2 {offsets = [0, 23], sizes = [2, 1], strides = [1, 1]} : vector<2x128xf32> to vector<2x1xf32>
    %747 = vector.extract_strided_slice %4 {offsets = [0, 23], sizes = [2, 1], strides = [1, 1]} : vector<2x128xf32> to vector<2x1xf32>
    %748 = arith.subf %747, %746 : vector<2x1xf32>
    %cst_164 = arith.constant 1.000000e+00 : f32
    %749 = vector.broadcast %cst_164 : f32 to vector<2x1xf32>
    %750 = arith.addf %748, %749 : vector<2x1xf32>
    %751 = vector.broadcast %747 : vector<2x1xf32> to vector<2x128xf32>
    %752 = arith.minimumf %4, %751 : vector<2x128xf32>
    %753 = vector.broadcast %746 : vector<2x1xf32> to vector<2x128xf32>
    %754 = arith.maximumf %2, %753 : vector<2x128xf32>
    %755 = arith.subf %752, %754 : vector<2x128xf32>
    %cst_165 = arith.constant 1.000000e+00 : f32
    %756 = vector.broadcast %cst_165 : f32 to vector<2x128xf32>
    %757 = arith.addf %755, %756 : vector<2x128xf32>
    %cst_166 = arith.constant 0.000000e+00 : f32
    %758 = vector.broadcast %cst_166 : f32 to vector<2x128xf32>
    %759 = arith.maximumf %758, %757 : vector<2x128xf32>
    %760 = vector.broadcast %750 : vector<2x1xf32> to vector<2x128xf32>
    %761 = arith.addf %7, %760 : vector<2x128xf32>
    %762 = arith.subf %761, %759 : vector<2x128xf32>
    %cst_167 = arith.constant 0.699999988 : f32
    %763 = vector.broadcast %cst_167 : f32 to vector<2x128xf32>
    %764 = arith.mulf %763, %762 : vector<2x128xf32>
    %765 = arith.cmpf ogt, %759, %764 : vector<2x128xf32>
    %c23_i32 = arith.constant 23 : i32
    %766 = vector.broadcast %c23_i32 : i32 to vector<2x128xi32>
    %767 = arith.cmpi sgt, %8, %766 : vector<2x128xi32>
    %768 = arith.andi %765, %767 : vector<2x128xi1>
    %cst_168 = arith.constant 1.000000e+00 : f32
    %cst_169 = arith.constant 0.000000e+00 : f32
    %769 = vector.broadcast %cst_168 : f32 to vector<2x128xf32>
    %770 = vector.broadcast %cst_169 : f32 to vector<2x128xf32>
    %771 = arith.select %768, %769, %770 : vector<2x128xi1>, vector<2x128xf32>
    %772 = vector.extract_strided_slice %745 {offsets = [0, 23], sizes = [2, 1], strides = [1, 1]} : vector<2x128xf32> to vector<2x1xf32>
    %cst_170 = arith.constant 1.000000e+00 : f32
    %773 = vector.broadcast %cst_170 : f32 to vector<2x1xf32>
    %774 = arith.subf %773, %772 : vector<2x1xf32>
    %775 = vector.broadcast %774 : vector<2x1xf32> to vector<2x128xf32>
    %776 = arith.mulf %771, %775 : vector<2x128xf32>
    %777 = arith.maximumf %745, %776 : vector<2x128xf32>
    %778 = vector.extract_strided_slice %2 {offsets = [0, 24], sizes = [2, 1], strides = [1, 1]} : vector<2x128xf32> to vector<2x1xf32>
    %779 = vector.extract_strided_slice %4 {offsets = [0, 24], sizes = [2, 1], strides = [1, 1]} : vector<2x128xf32> to vector<2x1xf32>
    %780 = arith.subf %779, %778 : vector<2x1xf32>
    %cst_171 = arith.constant 1.000000e+00 : f32
    %781 = vector.broadcast %cst_171 : f32 to vector<2x1xf32>
    %782 = arith.addf %780, %781 : vector<2x1xf32>
    %783 = vector.broadcast %779 : vector<2x1xf32> to vector<2x128xf32>
    %784 = arith.minimumf %4, %783 : vector<2x128xf32>
    %785 = vector.broadcast %778 : vector<2x1xf32> to vector<2x128xf32>
    %786 = arith.maximumf %2, %785 : vector<2x128xf32>
    %787 = arith.subf %784, %786 : vector<2x128xf32>
    %cst_172 = arith.constant 1.000000e+00 : f32
    %788 = vector.broadcast %cst_172 : f32 to vector<2x128xf32>
    %789 = arith.addf %787, %788 : vector<2x128xf32>
    %cst_173 = arith.constant 0.000000e+00 : f32
    %790 = vector.broadcast %cst_173 : f32 to vector<2x128xf32>
    %791 = arith.maximumf %790, %789 : vector<2x128xf32>
    %792 = vector.broadcast %782 : vector<2x1xf32> to vector<2x128xf32>
    %793 = arith.addf %7, %792 : vector<2x128xf32>
    %794 = arith.subf %793, %791 : vector<2x128xf32>
    %cst_174 = arith.constant 0.699999988 : f32
    %795 = vector.broadcast %cst_174 : f32 to vector<2x128xf32>
    %796 = arith.mulf %795, %794 : vector<2x128xf32>
    %797 = arith.cmpf ogt, %791, %796 : vector<2x128xf32>
    %c24_i32 = arith.constant 24 : i32
    %798 = vector.broadcast %c24_i32 : i32 to vector<2x128xi32>
    %799 = arith.cmpi sgt, %8, %798 : vector<2x128xi32>
    %800 = arith.andi %797, %799 : vector<2x128xi1>
    %cst_175 = arith.constant 1.000000e+00 : f32
    %cst_176 = arith.constant 0.000000e+00 : f32
    %801 = vector.broadcast %cst_175 : f32 to vector<2x128xf32>
    %802 = vector.broadcast %cst_176 : f32 to vector<2x128xf32>
    %803 = arith.select %800, %801, %802 : vector<2x128xi1>, vector<2x128xf32>
    %804 = vector.extract_strided_slice %777 {offsets = [0, 24], sizes = [2, 1], strides = [1, 1]} : vector<2x128xf32> to vector<2x1xf32>
    %cst_177 = arith.constant 1.000000e+00 : f32
    %805 = vector.broadcast %cst_177 : f32 to vector<2x1xf32>
    %806 = arith.subf %805, %804 : vector<2x1xf32>
    %807 = vector.broadcast %806 : vector<2x1xf32> to vector<2x128xf32>
    %808 = arith.mulf %803, %807 : vector<2x128xf32>
    %809 = arith.maximumf %777, %808 : vector<2x128xf32>
    %810 = vector.extract_strided_slice %2 {offsets = [0, 25], sizes = [2, 1], strides = [1, 1]} : vector<2x128xf32> to vector<2x1xf32>
    %811 = vector.extract_strided_slice %4 {offsets = [0, 25], sizes = [2, 1], strides = [1, 1]} : vector<2x128xf32> to vector<2x1xf32>
    %812 = arith.subf %811, %810 : vector<2x1xf32>
    %cst_178 = arith.constant 1.000000e+00 : f32
    %813 = vector.broadcast %cst_178 : f32 to vector<2x1xf32>
    %814 = arith.addf %812, %813 : vector<2x1xf32>
    %815 = vector.broadcast %811 : vector<2x1xf32> to vector<2x128xf32>
    %816 = arith.minimumf %4, %815 : vector<2x128xf32>
    %817 = vector.broadcast %810 : vector<2x1xf32> to vector<2x128xf32>
    %818 = arith.maximumf %2, %817 : vector<2x128xf32>
    %819 = arith.subf %816, %818 : vector<2x128xf32>
    %cst_179 = arith.constant 1.000000e+00 : f32
    %820 = vector.broadcast %cst_179 : f32 to vector<2x128xf32>
    %821 = arith.addf %819, %820 : vector<2x128xf32>
    %cst_180 = arith.constant 0.000000e+00 : f32
    %822 = vector.broadcast %cst_180 : f32 to vector<2x128xf32>
    %823 = arith.maximumf %822, %821 : vector<2x128xf32>
    %824 = vector.broadcast %814 : vector<2x1xf32> to vector<2x128xf32>
    %825 = arith.addf %7, %824 : vector<2x128xf32>
    %826 = arith.subf %825, %823 : vector<2x128xf32>
    %cst_181 = arith.constant 0.699999988 : f32
    %827 = vector.broadcast %cst_181 : f32 to vector<2x128xf32>
    %828 = arith.mulf %827, %826 : vector<2x128xf32>
    %829 = arith.cmpf ogt, %823, %828 : vector<2x128xf32>
    %c25_i32 = arith.constant 25 : i32
    %830 = vector.broadcast %c25_i32 : i32 to vector<2x128xi32>
    %831 = arith.cmpi sgt, %8, %830 : vector<2x128xi32>
    %832 = arith.andi %829, %831 : vector<2x128xi1>
    %cst_182 = arith.constant 1.000000e+00 : f32
    %cst_183 = arith.constant 0.000000e+00 : f32
    %833 = vector.broadcast %cst_182 : f32 to vector<2x128xf32>
    %834 = vector.broadcast %cst_183 : f32 to vector<2x128xf32>
    %835 = arith.select %832, %833, %834 : vector<2x128xi1>, vector<2x128xf32>
    %836 = vector.extract_strided_slice %809 {offsets = [0, 25], sizes = [2, 1], strides = [1, 1]} : vector<2x128xf32> to vector<2x1xf32>
    %cst_184 = arith.constant 1.000000e+00 : f32
    %837 = vector.broadcast %cst_184 : f32 to vector<2x1xf32>
    %838 = arith.subf %837, %836 : vector<2x1xf32>
    %839 = vector.broadcast %838 : vector<2x1xf32> to vector<2x128xf32>
    %840 = arith.mulf %835, %839 : vector<2x128xf32>
    %841 = arith.maximumf %809, %840 : vector<2x128xf32>
    %842 = vector.extract_strided_slice %2 {offsets = [0, 26], sizes = [2, 1], strides = [1, 1]} : vector<2x128xf32> to vector<2x1xf32>
    %843 = vector.extract_strided_slice %4 {offsets = [0, 26], sizes = [2, 1], strides = [1, 1]} : vector<2x128xf32> to vector<2x1xf32>
    %844 = arith.subf %843, %842 : vector<2x1xf32>
    %cst_185 = arith.constant 1.000000e+00 : f32
    %845 = vector.broadcast %cst_185 : f32 to vector<2x1xf32>
    %846 = arith.addf %844, %845 : vector<2x1xf32>
    %847 = vector.broadcast %843 : vector<2x1xf32> to vector<2x128xf32>
    %848 = arith.minimumf %4, %847 : vector<2x128xf32>
    %849 = vector.broadcast %842 : vector<2x1xf32> to vector<2x128xf32>
    %850 = arith.maximumf %2, %849 : vector<2x128xf32>
    %851 = arith.subf %848, %850 : vector<2x128xf32>
    %cst_186 = arith.constant 1.000000e+00 : f32
    %852 = vector.broadcast %cst_186 : f32 to vector<2x128xf32>
    %853 = arith.addf %851, %852 : vector<2x128xf32>
    %cst_187 = arith.constant 0.000000e+00 : f32
    %854 = vector.broadcast %cst_187 : f32 to vector<2x128xf32>
    %855 = arith.maximumf %854, %853 : vector<2x128xf32>
    %856 = vector.broadcast %846 : vector<2x1xf32> to vector<2x128xf32>
    %857 = arith.addf %7, %856 : vector<2x128xf32>
    %858 = arith.subf %857, %855 : vector<2x128xf32>
    %cst_188 = arith.constant 0.699999988 : f32
    %859 = vector.broadcast %cst_188 : f32 to vector<2x128xf32>
    %860 = arith.mulf %859, %858 : vector<2x128xf32>
    %861 = arith.cmpf ogt, %855, %860 : vector<2x128xf32>
    %c26_i32 = arith.constant 26 : i32
    %862 = vector.broadcast %c26_i32 : i32 to vector<2x128xi32>
    %863 = arith.cmpi sgt, %8, %862 : vector<2x128xi32>
    %864 = arith.andi %861, %863 : vector<2x128xi1>
    %cst_189 = arith.constant 1.000000e+00 : f32
    %cst_190 = arith.constant 0.000000e+00 : f32
    %865 = vector.broadcast %cst_189 : f32 to vector<2x128xf32>
    %866 = vector.broadcast %cst_190 : f32 to vector<2x128xf32>
    %867 = arith.select %864, %865, %866 : vector<2x128xi1>, vector<2x128xf32>
    %868 = vector.extract_strided_slice %841 {offsets = [0, 26], sizes = [2, 1], strides = [1, 1]} : vector<2x128xf32> to vector<2x1xf32>
    %cst_191 = arith.constant 1.000000e+00 : f32
    %869 = vector.broadcast %cst_191 : f32 to vector<2x1xf32>
    %870 = arith.subf %869, %868 : vector<2x1xf32>
    %871 = vector.broadcast %870 : vector<2x1xf32> to vector<2x128xf32>
    %872 = arith.mulf %867, %871 : vector<2x128xf32>
    %873 = arith.maximumf %841, %872 : vector<2x128xf32>
    %874 = vector.extract_strided_slice %2 {offsets = [0, 27], sizes = [2, 1], strides = [1, 1]} : vector<2x128xf32> to vector<2x1xf32>
    %875 = vector.extract_strided_slice %4 {offsets = [0, 27], sizes = [2, 1], strides = [1, 1]} : vector<2x128xf32> to vector<2x1xf32>
    %876 = arith.subf %875, %874 : vector<2x1xf32>
    %cst_192 = arith.constant 1.000000e+00 : f32
    %877 = vector.broadcast %cst_192 : f32 to vector<2x1xf32>
    %878 = arith.addf %876, %877 : vector<2x1xf32>
    %879 = vector.broadcast %875 : vector<2x1xf32> to vector<2x128xf32>
    %880 = arith.minimumf %4, %879 : vector<2x128xf32>
    %881 = vector.broadcast %874 : vector<2x1xf32> to vector<2x128xf32>
    %882 = arith.maximumf %2, %881 : vector<2x128xf32>
    %883 = arith.subf %880, %882 : vector<2x128xf32>
    %cst_193 = arith.constant 1.000000e+00 : f32
    %884 = vector.broadcast %cst_193 : f32 to vector<2x128xf32>
    %885 = arith.addf %883, %884 : vector<2x128xf32>
    %cst_194 = arith.constant 0.000000e+00 : f32
    %886 = vector.broadcast %cst_194 : f32 to vector<2x128xf32>
    %887 = arith.maximumf %886, %885 : vector<2x128xf32>
    %888 = vector.broadcast %878 : vector<2x1xf32> to vector<2x128xf32>
    %889 = arith.addf %7, %888 : vector<2x128xf32>
    %890 = arith.subf %889, %887 : vector<2x128xf32>
    %cst_195 = arith.constant 0.699999988 : f32
    %891 = vector.broadcast %cst_195 : f32 to vector<2x128xf32>
    %892 = arith.mulf %891, %890 : vector<2x128xf32>
    %893 = arith.cmpf ogt, %887, %892 : vector<2x128xf32>
    %c27_i32 = arith.constant 27 : i32
    %894 = vector.broadcast %c27_i32 : i32 to vector<2x128xi32>
    %895 = arith.cmpi sgt, %8, %894 : vector<2x128xi32>
    %896 = arith.andi %893, %895 : vector<2x128xi1>
    %cst_196 = arith.constant 1.000000e+00 : f32
    %cst_197 = arith.constant 0.000000e+00 : f32
    %897 = vector.broadcast %cst_196 : f32 to vector<2x128xf32>
    %898 = vector.broadcast %cst_197 : f32 to vector<2x128xf32>
    %899 = arith.select %896, %897, %898 : vector<2x128xi1>, vector<2x128xf32>
    %900 = vector.extract_strided_slice %873 {offsets = [0, 27], sizes = [2, 1], strides = [1, 1]} : vector<2x128xf32> to vector<2x1xf32>
    %cst_198 = arith.constant 1.000000e+00 : f32
    %901 = vector.broadcast %cst_198 : f32 to vector<2x1xf32>
    %902 = arith.subf %901, %900 : vector<2x1xf32>
    %903 = vector.broadcast %902 : vector<2x1xf32> to vector<2x128xf32>
    %904 = arith.mulf %899, %903 : vector<2x128xf32>
    %905 = arith.maximumf %873, %904 : vector<2x128xf32>
    %906 = vector.extract_strided_slice %2 {offsets = [0, 28], sizes = [2, 1], strides = [1, 1]} : vector<2x128xf32> to vector<2x1xf32>
    %907 = vector.extract_strided_slice %4 {offsets = [0, 28], sizes = [2, 1], strides = [1, 1]} : vector<2x128xf32> to vector<2x1xf32>
    %908 = arith.subf %907, %906 : vector<2x1xf32>
    %cst_199 = arith.constant 1.000000e+00 : f32
    %909 = vector.broadcast %cst_199 : f32 to vector<2x1xf32>
    %910 = arith.addf %908, %909 : vector<2x1xf32>
    %911 = vector.broadcast %907 : vector<2x1xf32> to vector<2x128xf32>
    %912 = arith.minimumf %4, %911 : vector<2x128xf32>
    %913 = vector.broadcast %906 : vector<2x1xf32> to vector<2x128xf32>
    %914 = arith.maximumf %2, %913 : vector<2x128xf32>
    %915 = arith.subf %912, %914 : vector<2x128xf32>
    %cst_200 = arith.constant 1.000000e+00 : f32
    %916 = vector.broadcast %cst_200 : f32 to vector<2x128xf32>
    %917 = arith.addf %915, %916 : vector<2x128xf32>
    %cst_201 = arith.constant 0.000000e+00 : f32
    %918 = vector.broadcast %cst_201 : f32 to vector<2x128xf32>
    %919 = arith.maximumf %918, %917 : vector<2x128xf32>
    %920 = vector.broadcast %910 : vector<2x1xf32> to vector<2x128xf32>
    %921 = arith.addf %7, %920 : vector<2x128xf32>
    %922 = arith.subf %921, %919 : vector<2x128xf32>
    %cst_202 = arith.constant 0.699999988 : f32
    %923 = vector.broadcast %cst_202 : f32 to vector<2x128xf32>
    %924 = arith.mulf %923, %922 : vector<2x128xf32>
    %925 = arith.cmpf ogt, %919, %924 : vector<2x128xf32>
    %c28_i32 = arith.constant 28 : i32
    %926 = vector.broadcast %c28_i32 : i32 to vector<2x128xi32>
    %927 = arith.cmpi sgt, %8, %926 : vector<2x128xi32>
    %928 = arith.andi %925, %927 : vector<2x128xi1>
    %cst_203 = arith.constant 1.000000e+00 : f32
    %cst_204 = arith.constant 0.000000e+00 : f32
    %929 = vector.broadcast %cst_203 : f32 to vector<2x128xf32>
    %930 = vector.broadcast %cst_204 : f32 to vector<2x128xf32>
    %931 = arith.select %928, %929, %930 : vector<2x128xi1>, vector<2x128xf32>
    %932 = vector.extract_strided_slice %905 {offsets = [0, 28], sizes = [2, 1], strides = [1, 1]} : vector<2x128xf32> to vector<2x1xf32>
    %cst_205 = arith.constant 1.000000e+00 : f32
    %933 = vector.broadcast %cst_205 : f32 to vector<2x1xf32>
    %934 = arith.subf %933, %932 : vector<2x1xf32>
    %935 = vector.broadcast %934 : vector<2x1xf32> to vector<2x128xf32>
    %936 = arith.mulf %931, %935 : vector<2x128xf32>
    %937 = arith.maximumf %905, %936 : vector<2x128xf32>
    %938 = vector.extract_strided_slice %2 {offsets = [0, 29], sizes = [2, 1], strides = [1, 1]} : vector<2x128xf32> to vector<2x1xf32>
    %939 = vector.extract_strided_slice %4 {offsets = [0, 29], sizes = [2, 1], strides = [1, 1]} : vector<2x128xf32> to vector<2x1xf32>
    %940 = arith.subf %939, %938 : vector<2x1xf32>
    %cst_206 = arith.constant 1.000000e+00 : f32
    %941 = vector.broadcast %cst_206 : f32 to vector<2x1xf32>
    %942 = arith.addf %940, %941 : vector<2x1xf32>
    %943 = vector.broadcast %939 : vector<2x1xf32> to vector<2x128xf32>
    %944 = arith.minimumf %4, %943 : vector<2x128xf32>
    %945 = vector.broadcast %938 : vector<2x1xf32> to vector<2x128xf32>
    %946 = arith.maximumf %2, %945 : vector<2x128xf32>
    %947 = arith.subf %944, %946 : vector<2x128xf32>
    %cst_207 = arith.constant 1.000000e+00 : f32
    %948 = vector.broadcast %cst_207 : f32 to vector<2x128xf32>
    %949 = arith.addf %947, %948 : vector<2x128xf32>
    %cst_208 = arith.constant 0.000000e+00 : f32
    %950 = vector.broadcast %cst_208 : f32 to vector<2x128xf32>
    %951 = arith.maximumf %950, %949 : vector<2x128xf32>
    %952 = vector.broadcast %942 : vector<2x1xf32> to vector<2x128xf32>
    %953 = arith.addf %7, %952 : vector<2x128xf32>
    %954 = arith.subf %953, %951 : vector<2x128xf32>
    %cst_209 = arith.constant 0.699999988 : f32
    %955 = vector.broadcast %cst_209 : f32 to vector<2x128xf32>
    %956 = arith.mulf %955, %954 : vector<2x128xf32>
    %957 = arith.cmpf ogt, %951, %956 : vector<2x128xf32>
    %c29_i32 = arith.constant 29 : i32
    %958 = vector.broadcast %c29_i32 : i32 to vector<2x128xi32>
    %959 = arith.cmpi sgt, %8, %958 : vector<2x128xi32>
    %960 = arith.andi %957, %959 : vector<2x128xi1>
    %cst_210 = arith.constant 1.000000e+00 : f32
    %cst_211 = arith.constant 0.000000e+00 : f32
    %961 = vector.broadcast %cst_210 : f32 to vector<2x128xf32>
    %962 = vector.broadcast %cst_211 : f32 to vector<2x128xf32>
    %963 = arith.select %960, %961, %962 : vector<2x128xi1>, vector<2x128xf32>
    %964 = vector.extract_strided_slice %937 {offsets = [0, 29], sizes = [2, 1], strides = [1, 1]} : vector<2x128xf32> to vector<2x1xf32>
    %cst_212 = arith.constant 1.000000e+00 : f32
    %965 = vector.broadcast %cst_212 : f32 to vector<2x1xf32>
    %966 = arith.subf %965, %964 : vector<2x1xf32>
    %967 = vector.broadcast %966 : vector<2x1xf32> to vector<2x128xf32>
    %968 = arith.mulf %963, %967 : vector<2x128xf32>
    %969 = arith.maximumf %937, %968 : vector<2x128xf32>
    %970 = vector.extract_strided_slice %2 {offsets = [0, 30], sizes = [2, 1], strides = [1, 1]} : vector<2x128xf32> to vector<2x1xf32>
    %971 = vector.extract_strided_slice %4 {offsets = [0, 30], sizes = [2, 1], strides = [1, 1]} : vector<2x128xf32> to vector<2x1xf32>
    %972 = arith.subf %971, %970 : vector<2x1xf32>
    %cst_213 = arith.constant 1.000000e+00 : f32
    %973 = vector.broadcast %cst_213 : f32 to vector<2x1xf32>
    %974 = arith.addf %972, %973 : vector<2x1xf32>
    %975 = vector.broadcast %971 : vector<2x1xf32> to vector<2x128xf32>
    %976 = arith.minimumf %4, %975 : vector<2x128xf32>
    %977 = vector.broadcast %970 : vector<2x1xf32> to vector<2x128xf32>
    %978 = arith.maximumf %2, %977 : vector<2x128xf32>
    %979 = arith.subf %976, %978 : vector<2x128xf32>
    %cst_214 = arith.constant 1.000000e+00 : f32
    %980 = vector.broadcast %cst_214 : f32 to vector<2x128xf32>
    %981 = arith.addf %979, %980 : vector<2x128xf32>
    %cst_215 = arith.constant 0.000000e+00 : f32
    %982 = vector.broadcast %cst_215 : f32 to vector<2x128xf32>
    %983 = arith.maximumf %982, %981 : vector<2x128xf32>
    %984 = vector.broadcast %974 : vector<2x1xf32> to vector<2x128xf32>
    %985 = arith.addf %7, %984 : vector<2x128xf32>
    %986 = arith.subf %985, %983 : vector<2x128xf32>
    %cst_216 = arith.constant 0.699999988 : f32
    %987 = vector.broadcast %cst_216 : f32 to vector<2x128xf32>
    %988 = arith.mulf %987, %986 : vector<2x128xf32>
    %989 = arith.cmpf ogt, %983, %988 : vector<2x128xf32>
    %c30_i32 = arith.constant 30 : i32
    %990 = vector.broadcast %c30_i32 : i32 to vector<2x128xi32>
    %991 = arith.cmpi sgt, %8, %990 : vector<2x128xi32>
    %992 = arith.andi %989, %991 : vector<2x128xi1>
    %cst_217 = arith.constant 1.000000e+00 : f32
    %cst_218 = arith.constant 0.000000e+00 : f32
    %993 = vector.broadcast %cst_217 : f32 to vector<2x128xf32>
    %994 = vector.broadcast %cst_218 : f32 to vector<2x128xf32>
    %995 = arith.select %992, %993, %994 : vector<2x128xi1>, vector<2x128xf32>
    %996 = vector.extract_strided_slice %969 {offsets = [0, 30], sizes = [2, 1], strides = [1, 1]} : vector<2x128xf32> to vector<2x1xf32>
    %cst_219 = arith.constant 1.000000e+00 : f32
    %997 = vector.broadcast %cst_219 : f32 to vector<2x1xf32>
    %998 = arith.subf %997, %996 : vector<2x1xf32>
    %999 = vector.broadcast %998 : vector<2x1xf32> to vector<2x128xf32>
    %1000 = arith.mulf %995, %999 : vector<2x128xf32>
    %1001 = arith.maximumf %969, %1000 : vector<2x128xf32>
    %1002 = vector.extract_strided_slice %2 {offsets = [0, 31], sizes = [2, 1], strides = [1, 1]} : vector<2x128xf32> to vector<2x1xf32>
    %1003 = vector.extract_strided_slice %4 {offsets = [0, 31], sizes = [2, 1], strides = [1, 1]} : vector<2x128xf32> to vector<2x1xf32>
    %1004 = arith.subf %1003, %1002 : vector<2x1xf32>
    %cst_220 = arith.constant 1.000000e+00 : f32
    %1005 = vector.broadcast %cst_220 : f32 to vector<2x1xf32>
    %1006 = arith.addf %1004, %1005 : vector<2x1xf32>
    %1007 = vector.broadcast %1003 : vector<2x1xf32> to vector<2x128xf32>
    %1008 = arith.minimumf %4, %1007 : vector<2x128xf32>
    %1009 = vector.broadcast %1002 : vector<2x1xf32> to vector<2x128xf32>
    %1010 = arith.maximumf %2, %1009 : vector<2x128xf32>
    %1011 = arith.subf %1008, %1010 : vector<2x128xf32>
    %cst_221 = arith.constant 1.000000e+00 : f32
    %1012 = vector.broadcast %cst_221 : f32 to vector<2x128xf32>
    %1013 = arith.addf %1011, %1012 : vector<2x128xf32>
    %cst_222 = arith.constant 0.000000e+00 : f32
    %1014 = vector.broadcast %cst_222 : f32 to vector<2x128xf32>
    %1015 = arith.maximumf %1014, %1013 : vector<2x128xf32>
    %1016 = vector.broadcast %1006 : vector<2x1xf32> to vector<2x128xf32>
    %1017 = arith.addf %7, %1016 : vector<2x128xf32>
    %1018 = arith.subf %1017, %1015 : vector<2x128xf32>
    %cst_223 = arith.constant 0.699999988 : f32
    %1019 = vector.broadcast %cst_223 : f32 to vector<2x128xf32>
    %1020 = arith.mulf %1019, %1018 : vector<2x128xf32>
    %1021 = arith.cmpf ogt, %1015, %1020 : vector<2x128xf32>
    %c31_i32 = arith.constant 31 : i32
    %1022 = vector.broadcast %c31_i32 : i32 to vector<2x128xi32>
    %1023 = arith.cmpi sgt, %8, %1022 : vector<2x128xi32>
    %1024 = arith.andi %1021, %1023 : vector<2x128xi1>
    %cst_224 = arith.constant 1.000000e+00 : f32
    %cst_225 = arith.constant 0.000000e+00 : f32
    %1025 = vector.broadcast %cst_224 : f32 to vector<2x128xf32>
    %1026 = vector.broadcast %cst_225 : f32 to vector<2x128xf32>
    %1027 = arith.select %1024, %1025, %1026 : vector<2x128xi1>, vector<2x128xf32>
    %1028 = vector.extract_strided_slice %1001 {offsets = [0, 31], sizes = [2, 1], strides = [1, 1]} : vector<2x128xf32> to vector<2x1xf32>
    %cst_226 = arith.constant 1.000000e+00 : f32
    %1029 = vector.broadcast %cst_226 : f32 to vector<2x1xf32>
    %1030 = arith.subf %1029, %1028 : vector<2x1xf32>
    %1031 = vector.broadcast %1030 : vector<2x1xf32> to vector<2x128xf32>
    %1032 = arith.mulf %1027, %1031 : vector<2x128xf32>
    %1033 = arith.maximumf %1001, %1032 : vector<2x128xf32>
    %c32_i32 = arith.constant 32 : i32
    %1034 = vector.broadcast %c32_i32 : i32 to vector<2x128xi32>
    %1035 = arith.cmpi slt, %8, %1034 : vector<2x128xi32>
    %cst_227 = arith.constant 1.000000e+00 : f32
    %cst_228 = arith.constant 0.000000e+00 : f32
    %1036 = vector.broadcast %cst_227 : f32 to vector<2x128xf32>
    %1037 = vector.broadcast %cst_228 : f32 to vector<2x128xf32>
    %1038 = arith.select %1035, %1036, %1037 : vector<2x128xi1>, vector<2x128xf32>
    %cst_229 = arith.constant 1.000000e+00 : f32
    %1039 = vector.broadcast %cst_229 : f32 to vector<2x128xf32>
    %1040 = arith.subf %1039, %1033 : vector<2x128xf32>
    %1041 = arith.mulf %1040, %1038 : vector<2x128xf32>
    %1042 = tpu.iota {dimensions = array<i32: 0>} : vector<128x128xi32>
    %1043 = tpu.iota {dimensions = array<i32: 1>} : vector<128x128xi32>
    %1044 = arith.cmpi sle, %1042, %1043 : vector<128x128xi32>
    %cst_230 = arith.constant 1.000000e+00 : f32
    %cst_231 = arith.constant 0.000000e+00 : f32
    %1045 = vector.broadcast %cst_230 : f32 to vector<128x128xf32>
    %1046 = vector.broadcast %cst_231 : f32 to vector<128x128xf32>
    %1047 = arith.select %1044, %1045, %1046 : vector<128x128xi1>, vector<128x128xf32>
    %cst_232 = arith.constant dense<0.000000e+00> : vector<2x128xf32>
    %1048 = tpu.matmul %1041, %1047, %cst_232 {dimension_numbers = #tpu.dot_dimension_numbers<[1], [0], [0], [1], [0, 0, 1, 1], [], []>} : vector<2x128xf32>, vector<128x128xf32>, vector<2x128xf32> -> vector<2x128xf32>
    %cst_233 = arith.constant 1.000000e+00 : f32
    %1049 = vector.broadcast %cst_233 : f32 to vector<2x128xf32>
    %1050 = arith.subf %1048, %1049 : vector<2x128xf32>
    %cst_234 = arith.constant 1.600000e+01 : f32
    %1051 = vector.broadcast %cst_234 : f32 to vector<2x128xf32>
    %1052 = arith.cmpf olt, %1050, %1051 : vector<2x128xf32>
    %cst_235 = arith.constant 1.000000e+00 : f32
    %cst_236 = arith.constant 0.000000e+00 : f32
    %1053 = vector.broadcast %cst_235 : f32 to vector<2x128xf32>
    %1054 = vector.broadcast %cst_236 : f32 to vector<2x128xf32>
    %1055 = arith.select %1052, %1053, %1054 : vector<2x128xi1>, vector<2x128xf32>
    %1056 = arith.mulf %1041, %1055 : vector<2x128xf32>
    %1057 = tpu.iota {dimensions = array<i32: 1>} : vector<2x128x128xi32>
    %1058 = arith.sitofp %1057 : vector<2x128x128xi32> to vector<2x128x128xf32>
    %1059 = vector.shape_cast %1050 : vector<2x128xf32> to vector<2x1x128xf32>
    %1060 = vector.broadcast %1059 : vector<2x1x128xf32> to vector<2x128x128xf32>
    %1061 = arith.cmpf oeq, %1060, %1058 : vector<2x128x128xf32>
    %1062 = vector.shape_cast %1056 : vector<2x128xf32> to vector<2x1x128xf32>
    %cst_237 = arith.constant 5.000000e-01 : f32
    %1063 = vector.broadcast %cst_237 : f32 to vector<2x1x128xf32>
    %1064 = arith.cmpf ogt, %1062, %1063 : vector<2x1x128xf32>
    %1065 = vector.broadcast %1064 : vector<2x1x128xi1> to vector<2x128x128xi1>
    %1066 = arith.andi %1061, %1065 : vector<2x128x128xi1>
    %cst_238 = arith.constant 1.000000e+00 : f32
    %cst_239 = arith.constant 0.000000e+00 : f32
    %1067 = vector.broadcast %cst_238 : f32 to vector<2x128x128xf32>
    %1068 = vector.broadcast %cst_239 : f32 to vector<2x128x128xf32>
    %1069 = arith.select %1066, %1067, %1068 : vector<2x128x128xi1>, vector<2x128x128xf32>
    %1070 = vector.shape_cast %2 : vector<2x128xf32> to vector<2x1x128xf32>
    %1071 = vector.broadcast %1070 : vector<2x1x128xf32> to vector<2x128x128xf32>
    %1072 = arith.mulf %1069, %1071 : vector<2x128x128xf32>
    %cst_240 = arith.constant dense<0.000000e+00> : vector<2x128xf32>
    %1073 = vector.multi_reduction <add>, %1072, %cst_240 [2] : vector<2x128x128xf32> to vector<2x128xf32>
    %1074 = vector.shape_cast %4 : vector<2x128xf32> to vector<2x1x128xf32>
    %1075 = vector.broadcast %1074 : vector<2x1x128xf32> to vector<2x128x128xf32>
    %1076 = arith.mulf %1069, %1075 : vector<2x128x128xf32>
    %cst_241 = arith.constant dense<0.000000e+00> : vector<2x128xf32>
    %1077 = vector.multi_reduction <add>, %1076, %cst_241 [2] : vector<2x128x128xf32> to vector<2x128xf32>
    %1078 = tpu.iota {dimensions = array<i32: 0>} : vector<2x128xi32>
    %1079 = arith.sitofp %1078 : vector<2x128xi32> to vector<2x128xf32>
    %cst_242 = arith.constant 0.000000e+00 : f32
    %1080 = vector.broadcast %cst_242 : f32 to vector<2x5x128xf32>
    %1081 = vector.shape_cast %1079 : vector<2x128xf32> to vector<2x1x128xf32>
    %1082 = vector.shape_cast %1073 : vector<2x128xf32> to vector<2x1x128xf32>
    %1083 = vector.shape_cast %1077 : vector<2x128xf32> to vector<2x1x128xf32>
    %1084 = tpu.concatenate %1081, %1082, %1083, %1080 in 1 : vector<2x1x128xf32>, vector<2x1x128xf32>, vector<2x1x128xf32>, vector<2x5x128xf32> -> vector<2x8x128xf32>
    %c0_243 = arith.constant 0 : index
    %c0_244 = arith.constant 0 : index
    %c0_245 = arith.constant 0 : index
    %1085 = vector.load %arg2[%c0_243, %c0_244, %c0_245] : memref<2x8x128xf32, #tpu.memory_space<vmem>>, vector<2x8x128xf32>
    tpu.vector_store %arg2[%c0_243, %c0_244, %c0_245], %1084 {strides = array<i32>} : memref<2x8x128xf32, #tpu.memory_space<vmem>>, vector<2x8x128xf32>,
    return
  }
  func.func @transform_0(%arg0: i32) -> (i32, i32, i32) {
    %c0_i32 = arith.constant 0 : i32
    %c0_i32_0 = arith.constant 0 : i32
    %c0_i32_1 = arith.constant 0 : i32
    %c0_i32_2 = arith.constant 0 : i32
    return %c0_i32, %c0_i32_0, %c0_i32_1 : i32, i32, i32
  }
  func.func @transform_1(%arg0: i32) -> (i32, i32, i32) {
    %c0_i32 = arith.constant 0 : i32
    %c0_i32_0 = arith.constant 0 : i32
    %c0_i32_1 = arith.constant 0 : i32
    %c0_i32_2 = arith.constant 0 : i32
    return %c0_i32, %c0_i32_0, %c0_i32_1 : i32, i32, i32
  }
}

</mosaic_0001>

<llo_original>
// kernel: proposal_layer_forward.1
$region0: #{proposal_layer_forward.1}
  #allocation0 [shape = 'u32[]', space=smem, size = 0x4, offset = 0x4, fixed_abs, tag = 'smem constant byte address 0x4 - core index']
  #allocation1 [shape = 'u32[144,128]{1,0:T(1,128)}', space=vmem, size = 0x12000, scoped, tag = 'internal scratch']
  %s0 = inlined_call_operand.vmem [shape: f32[2,2,128], index: 0, kind: input, shape index: {}]
  %s1 = inlined_call_operand.vmem [shape: f32[2,8,128], index: 1, kind: output, shape index: {}]
  %s2 = sld [smem:[#allocation0]]
  $region14: #{proposal_layer_forward.1} parent=0
    _
  %s4 = ssub.s32 1, %s2
  %s5 = scalar_select 0, %s4, %s2
  // Predicated region
  $region2: #{proposal_layer_forward.1} parent=0 // pred_check
    _
  $region3: #{proposal_layer_forward.1} parent=0 // pred_check_branch
    %7 = sbr.rel (0) target = $region5
  $region4: #{proposal_layer_forward.1} parent=0 // pred_region
    _
  $region5: #{proposal_layer_forward.1} parent=0 // pred_fallthru
    _
  %v8 = vld [vmem:[%s0] sm:$0x3]
  %v9 = vld [vmem:[%s0 + $0x2] sm:$0x3]
  %v12 = vrot.slane %v8, 7
  %v13 = vrot.slane %v9, 7
  %v16 = vsub.f32 %v8, %v12
  %v17 = vsub.f32 %v9, %v13
  %v18 = vadd.f32 %v16, 1.0
  %v19 = vadd.f32 %v17, 1.0
  %v20 = vlaneseq
  %v21 = vand.u32 %v20, 127
  %22 = vset.pattern.permute.xlu0 0
  %23 = vperm.xlu0 %22, %v8
  %v24 = vpop.permute.xlu0 %23
  %26 = vset.pattern.permute.xlu0 0
  %27 = vperm.xlu0 %26, %v9
  %v28 = vpop.permute.xlu0 %27
  %v30 = vmin.f32 %v8, %v24
  %v31 = vmin.f32 %v9, %v28
  %v32 = vmax.f32 %v8, %v24
  %v33 = vmax.f32 %v9, %v28
  %v36 = vrot.slane %v32, 7
  %v37 = vrot.slane %v33, 7
  %v40 = vsub.f32 %v30, %v36
  %v41 = vsub.f32 %v31, %v37
  %v42 = vadd.f32 %v40, 1.0
  %v43 = vadd.f32 %v41, 1.0
  %v44 = vmax.f32 %v42, 0.0
  %v45 = vmax.f32 %v43, 0.0
  %47 = vset.pattern.permute.xlu0 0
  %48 = vperm.xlu0 %47, %v18
  %v49 = vpop.permute.xlu0 %48
  %52 = vset.pattern.permute.xlu0 0
  %53 = vperm.xlu0 %52, %v19
  %v54 = vpop.permute.xlu0 %53
  %v56 = vadd.f32 %v18, %v49
  %v57 = vadd.f32 %v19, %v54
  %v58 = vsub.f32 %v56, %v44
  %v59 = vsub.f32 %v57, %v45
  %v60 = vmul.f32 %v58, 0.7
  %v61 = vmul.f32 %v59, 0.7
  %vm62 = vcmp.gt.f32.partialorder %v44, %v60
  %vm63 = vcmp.gt.f32.partialorder %v45, %v61
  %vm64 = vcmp.gt.s32.totalorder %v21, 0
  %vm65 = vmand %vm62, %vm64
  %vm66 = vmand %vm63, %vm64
  %v67 = vsel %vm65, 1.0, 0.0
  %v68 = vsel %vm66, 1.0, 0.0
  %v69 = vmax.f32 %v67, 0.0
  %v70 = vmax.f32 %v68, 0.0
  %71 = vset.pattern.permute.xlu0 1
  %72 = vperm.xlu0 %71, %v8
  %v73 = vpop.permute.xlu0 %72
  %75 = vset.pattern.permute.xlu0 1
  %76 = vperm.xlu0 %75, %v9
  %v77 = vpop.permute.xlu0 %76
  %v79 = vmin.f32 %v8, %v73
  %v80 = vmin.f32 %v9, %v77
  %v81 = vmax.f32 %v8, %v73
  %v82 = vmax.f32 %v9, %v77
  %v85 = vrot.slane %v81, 7
  %v86 = vrot.slane %v82, 7
  %v89 = vsub.f32 %v79, %v85
  %v90 = vsub.f32 %v80, %v86
  %v91 = vadd.f32 %v89, 1.0
  %v92 = vadd.f32 %v90, 1.0
  %v93 = vmax.f32 %v91, 0.0
  %v94 = vmax.f32 %v92, 0.0
  %95 = vset.pattern.permute.xlu0 1
  %96 = vperm.xlu0 %95, %v18
  %v97 = vpop.permute.xlu0 %96
  %99 = vset.pattern.permute.xlu0 1
  %100 = vperm.xlu0 %99, %v19
  %v101 = vpop.permute.xlu0 %100
  %v103 = vadd.f32 %v18, %v97
  %v104 = vadd.f32 %v19, %v101
  %v105 = vsub.f32 %v103, %v93
  %v106 = vsub.f32 %v104, %v94
  %v107 = vmul.f32 %v105, 0.7
  %v108 = vmul.f32 %v106, 0.7
  %vm109 = vcmp.gt.f32.partialorder %v93, %v107
  %vm110 = vcmp.gt.f32.partialorder %v94, %v108
  %vm111 = vcmp.gt.s32.totalorder %v21, 1
  %vm112 = vmand %vm109, %vm111
  %vm113 = vmand %vm110, %vm111
  %v114 = vsel %vm112, 1.0, 0.0
  %v115 = vsel %vm113, 1.0, 0.0
  %v116 = vsub.f32 1.0, %v69
  %v117 = vsub.f32 1.0, %v70
  %119 = vset.pattern.permute.xlu0 1
  %120 = vperm.xlu0 %119, %v116
  %v121 = vpop.permute.xlu0 %120
  %124 = vset.pattern.permute.xlu0 1
  %125 = vperm.xlu0 %124, %v117
  %v126 = vpop.permute.xlu0 %125
  %v128 = vmul.f32 %v114, %v121
  %v129 = vmul.f32 %v115, %v126
  %v130 = vmax.f32 %v69, %v128
  %v131 = vmax.f32 %v70, %v129
  %132 = vset.pattern.permute.xlu0 2
  %133 = vperm.xlu0 %132, %v8
  %v134 = vpop.permute.xlu0 %133
  %136 = vset.pattern.permute.xlu0 2
  %137 = vperm.xlu0 %136, %v9
  %v138 = vpop.permute.xlu0 %137
  %v140 = vmin.f32 %v8, %v134
  %v141 = vmin.f32 %v9, %v138
  %v142 = vmax.f32 %v8, %v134
  %v143 = vmax.f32 %v9, %v138
  %v146 = vrot.slane %v142, 7
  %v147 = vrot.slane %v143, 7
  %v150 = vsub.f32 %v140, %v146
  %v151 = vsub.f32 %v141, %v147
  %v152 = vadd.f32 %v150, 1.0
  %v153 = vadd.f32 %v151, 1.0
  %v154 = vmax.f32 %v152, 0.0
  %v155 = vmax.f32 %v153, 0.0
  %156 = vset.pattern.permute.xlu0 2
  %157 = vperm.xlu0 %156, %v18
  %v158 = vpop.permute.xlu0 %157
  %160 = vset.pattern.permute.xlu0 2
  %161 = vperm.xlu0 %160, %v19
  %v162 = vpop.permute.xlu0 %161
  %v164 = vadd.f32 %v18, %v158
  %v165 = vadd.f32 %v19, %v162
  %v166 = vsub.f32 %v164, %v154
  %v167 = vsub.f32 %v165, %v155
  %v168 = vmul.f32 %v166, 0.7
  %v169 = vmul.f32 %v167, 0.7
  %vm170 = vcmp.gt.f32.partialorder %v154, %v168
  %vm171 = vcmp.gt.f32.partialorder %v155, %v169
  %vm172 = vcmp.gt.s32.totalorder %v21, 2
  %vm173 = vmand %vm170, %vm172
  %vm174 = vmand %vm171, %vm172
  %v175 = vsel %vm173, 1.0, 0.0
  %v176 = vsel %vm174, 1.0, 0.0
  %v177 = vsub.f32 1.0, %v130
  %v178 = vsub.f32 1.0, %v131
  %180 = vset.pattern.permute.xlu0 2
  %181 = vperm.xlu0 %180, %v177
  %v182 = vpop.permute.xlu0 %181
  %185 = vset.pattern.permute.xlu0 2
  %186 = vperm.xlu0 %185, %v178
  %v187 = vpop.permute.xlu0 %186
  %v189 = vmul.f32 %v175, %v182
  %v190 = vmul.f32 %v176, %v187
  %v191 = vmax.f32 %v130, %v189
  %v192 = vmax.f32 %v131, %v190
  %193 = vset.pattern.permute.xlu0 3
  %194 = vperm.xlu0 %193, %v8
  %v195 = vpop.permute.xlu0 %194
  %197 = vset.pattern.permute.xlu0 3
  %198 = vperm.xlu0 %197, %v9
  %v199 = vpop.permute.xlu0 %198
  %v201 = vmin.f32 %v8, %v195
  %v202 = vmin.f32 %v9, %v199
  %v203 = vmax.f32 %v8, %v195
  %v204 = vmax.f32 %v9, %v199
  %v207 = vrot.slane %v203, 7
  %v208 = vrot.slane %v204, 7
  %v211 = vsub.f32 %v201, %v207
  %v212 = vsub.f32 %v202, %v208
  %v213 = vadd.f32 %v211, 1.0
  %v214 = vadd.f32 %v212, 1.0
  %v215 = vmax.f32 %v213, 0.0
  %v216 = vmax.f32 %v214, 0.0
  %217 = vset.pattern.permute.xlu0 3
  %218 = vperm.xlu0 %217, %v18
  %v219 = vpop.permute.xlu0 %218
  %221 = vset.pattern.permute.xlu0 3
  %222 = vperm.xlu0 %221, %v19
  %v223 = vpop.permute.xlu0 %222
  %v225 = vadd.f32 %v18, %v219
  %v226 = vadd.f32 %v19, %v223
  %v227 = vsub.f32 %v225, %v215
  %v228 = vsub.f32 %v226, %v216
  %v229 = vmul.f32 %v227, 0.7
  %v230 = vmul.f32 %v228, 0.7
  %vm231 = vcmp.gt.f32.partialorder %v215, %v229
  %vm232 = vcmp.gt.f32.partialorder %v216, %v230
  %vm233 = vcmp.gt.s32.totalorder %v21, 3
  %vm234 = vmand %vm231, %vm233
  %vm235 = vmand %vm232, %vm233
  %v236 = vsel %vm234, 1.0, 0.0
  %v237 = vsel %vm235, 1.0, 0.0
  %v238 = vsub.f32 1.0, %v191
  %v239 = vsub.f32 1.0, %v192
  %241 = vset.pattern.permute.xlu0 3
  %242 = vperm.xlu0 %241, %v238
  %v243 = vpop.permute.xlu0 %242
  %246 = vset.pattern.permute.xlu0 3
  %247 = vperm.xlu0 %246, %v239
  %v248 = vpop.permute.xlu0 %247
  %v250 = vmul.f32 %v236, %v243
  %v251 = vmul.f32 %v237, %v248
  %v252 = vmax.f32 %v191, %v250
  %v253 = vmax.f32 %v192, %v251
  %254 = vset.pattern.permute.xlu0 4
  %255 = vperm.xlu0 %254, %v8
  %v256 = vpop.permute.xlu0 %255
  %258 = vset.pattern.permute.xlu0 4
  %259 = vperm.xlu0 %258, %v9
  %v260 = vpop.permute.xlu0 %259
  %v262 = vmin.f32 %v8, %v256
  %v263 = vmin.f32 %v9, %v260
  %v264 = vmax.f32 %v8, %v256
  %v265 = vmax.f32 %v9, %v260
  %v268 = vrot.slane %v264, 7
  %v269 = vrot.slane %v265, 7
  %v272 = vsub.f32 %v262, %v268
  %v273 = vsub.f32 %v263, %v269
  %v274 = vadd.f32 %v272, 1.0
  %v275 = vadd.f32 %v273, 1.0
  %v276 = vmax.f32 %v274, 0.0
  %v277 = vmax.f32 %v275, 0.0
  %278 = vset.pattern.permute.xlu0 4
  %279 = vperm.xlu0 %278, %v18
  %v280 = vpop.permute.xlu0 %279
  %282 = vset.pattern.permute.xlu0 4
  %283 = vperm.xlu0 %282, %v19
  %v284 = vpop.permute.xlu0 %283
  %v286 = vadd.f32 %v18, %v280
  %v287 = vadd.f32 %v19, %v284
  %v288 = vsub.f32 %v286, %v276
  %v289 = vsub.f32 %v287, %v277
  %v290 = vmul.f32 %v288, 0.7
  %v291 = vmul.f32 %v289, 0.7
  %vm292 = vcmp.gt.f32.partialorder %v276, %v290
  %vm293 = vcmp.gt.f32.partialorder %v277, %v291
  %vm294 = vcmp.gt.s32.totalorder %v21, 4
  %vm295 = vmand %vm292, %vm294
  %vm296 = vmand %vm293, %vm294
  %v297 = vsel %vm295, 1.0, 0.0
  %v298 = vsel %vm296, 1.0, 0.0
  %v299 = vsub.f32 1.0, %v252
  %v300 = vsub.f32 1.0, %v253
  %302 = vset.pattern.permute.xlu0 4
  %303 = vperm.xlu0 %302, %v299
  %v304 = vpop.permute.xlu0 %303
  %307 = vset.pattern.permute.xlu0 4
  %308 = vperm.xlu0 %307, %v300
  %v309 = vpop.permute.xlu0 %308
  %v311 = vmul.f32 %v297, %v304
  %v312 = vmul.f32 %v298, %v309
  %v313 = vmax.f32 %v252, %v311
  %v314 = vmax.f32 %v253, %v312
  %315 = vset.pattern.permute.xlu0 5
  %316 = vperm.xlu0 %315, %v8
  %v317 = vpop.permute.xlu0 %316
  %319 = vset.pattern.permute.xlu0 5
  %320 = vperm.xlu0 %319, %v9
  %v321 = vpop.permute.xlu0 %320
  %v323 = vmin.f32 %v8, %v317
  %v324 = vmin.f32 %v9, %v321
  %v325 = vmax.f32 %v8, %v317
  %v326 = vmax.f32 %v9, %v321
  %v329 = vrot.slane %v325, 7
  %v330 = vrot.slane %v326, 7
  %v333 = vsub.f32 %v323, %v329
  %v334 = vsub.f32 %v324, %v330
  %v335 = vadd.f32 %v333, 1.0
  %v336 = vadd.f32 %v334, 1.0
  %v337 = vmax.f32 %v335, 0.0
  %v338 = vmax.f32 %v336, 0.0
  %339 = vset.pattern.permute.xlu0 5
  %340 = vperm.xlu0 %339, %v18
  %v341 = vpop.permute.xlu0 %340
  %343 = vset.pattern.permute.xlu0 5
  %344 = vperm.xlu0 %343, %v19
  %v345 = vpop.permute.xlu0 %344
  %v347 = vadd.f32 %v18, %v341
  %v348 = vadd.f32 %v19, %v345
  %v349 = vsub.f32 %v347, %v337
  %v350 = vsub.f32 %v348, %v338
  %v351 = vmul.f32 %v349, 0.7
  %v352 = vmul.f32 %v350, 0.7
  %vm353 = vcmp.gt.f32.partialorder %v337, %v351
  %vm354 = vcmp.gt.f32.partialorder %v338, %v352
  %vm355 = vcmp.gt.s32.totalorder %v21, 5
  %vm356 = vmand %vm353, %vm355
  %vm357 = vmand %vm354, %vm355
  %v358 = vsel %vm356, 1.0, 0.0
  %v359 = vsel %vm357, 1.0, 0.0
  %v360 = vsub.f32 1.0, %v313
  %v361 = vsub.f32 1.0, %v314
  %363 = vset.pattern.permute.xlu0 5
  %364 = vperm.xlu0 %363, %v360
  %v365 = vpop.permute.xlu0 %364
  %368 = vset.pattern.permute.xlu0 5
  %369 = vperm.xlu0 %368, %v361
  %v370 = vpop.permute.xlu0 %369
  %v372 = vmul.f32 %v358, %v365
  %v373 = vmul.f32 %v359, %v370
  %v374 = vmax.f32 %v313, %v372
  %v375 = vmax.f32 %v314, %v373
  %376 = vset.pattern.permute.xlu0 6
  %377 = vperm.xlu0 %376, %v8
  %v378 = vpop.permute.xlu0 %377
  %380 = vset.pattern.permute.xlu0 6
  %381 = vperm.xlu0 %380, %v9
  %v382 = vpop.permute.xlu0 %381
  %v384 = vmin.f32 %v8, %v378
  %v385 = vmin.f32 %v9, %v382
  %v386 = vmax.f32 %v8, %v378
  %v387 = vmax.f32 %v9, %v382
  %v390 = vrot.slane %v386, 7
  %v391 = vrot.slane %v387, 7
  %v394 = vsub.f32 %v384, %v390
  %v395 = vsub.f32 %v385, %v391
  %v396 = vadd.f32 %v394, 1.0
  %v397 = vadd.f32 %v395, 1.0
  %v398 = vmax.f32 %v396, 0.0
  %v399 = vmax.f32 %v397, 0.0
  %400 = vset.pattern.permute.xlu0 6
  %401 = vperm.xlu0 %400, %v18
  %v402 = vpop.permute.xlu0 %401
  %404 = vset.pattern.permute.xlu0 6
  %405 = vperm.xlu0 %404, %v19
  %v406 = vpop.permute.xlu0 %405
  %v408 = vadd.f32 %v18, %v402
  %v409 = vadd.f32 %v19, %v406
  %v410 = vsub.f32 %v408, %v398
  %v411 = vsub.f32 %v409, %v399
  %v412 = vmul.f32 %v410, 0.7
  %v413 = vmul.f32 %v411, 0.7
  %vm414 = vcmp.gt.f32.partialorder %v398, %v412
  %vm415 = vcmp.gt.f32.partialorder %v399, %v413
  %vm416 = vcmp.gt.s32.totalorder %v21, 6
  %vm417 = vmand %vm414, %vm416
  %vm418 = vmand %vm415, %vm416
  %v419 = vsel %vm417, 1.0, 0.0
  %v420 = vsel %vm418, 1.0, 0.0
  %v421 = vsub.f32 1.0, %v374
  %v422 = vsub.f32 1.0, %v375
  %424 = vset.pattern.permute.xlu0 6
  %425 = vperm.xlu0 %424, %v421
  %v426 = vpop.permute.xlu0 %425
  %429 = vset.pattern.permute.xlu0 6
  %430 = vperm.xlu0 %429, %v422
  %v431 = vpop.permute.xlu0 %430
  %v433 = vmul.f32 %v419, %v426
  %v434 = vmul.f32 %v420, %v431
  %v435 = vmax.f32 %v374, %v433
  %v436 = vmax.f32 %v375, %v434
  %437 = vset.pattern.permute.xlu0 7
  %438 = vperm.xlu0 %437, %v8
  %v439 = vpop.permute.xlu0 %438
  %441 = vset.pattern.permute.xlu0 7
  %442 = vperm.xlu0 %441, %v9
  %v443 = vpop.permute.xlu0 %442
  %v445 = vmin.f32 %v8, %v439
  %v446 = vmin.f32 %v9, %v443
  %v447 = vmax.f32 %v8, %v439
  %v448 = vmax.f32 %v9, %v443
  %v451 = vrot.slane %v447, 7
  %v452 = vrot.slane %v448, 7
  %v455 = vsub.f32 %v445, %v451
  %v456 = vsub.f32 %v446, %v452
  %v457 = vadd.f32 %v455, 1.0
  %v458 = vadd.f32 %v456, 1.0
  %v459 = vmax.f32 %v457, 0.0
  %v460 = vmax.f32 %v458, 0.0
  %461 = vset.pattern.permute.xlu0 7
  %462 = vperm.xlu0 %461, %v18
  %v463 = vpop.permute.xlu0 %462
  %465 = vset.pattern.permute.xlu0 7
  %466 = vperm.xlu0 %465, %v19
  %v467 = vpop.permute.xlu0 %466
  %v469 = vadd.f32 %v18, %v463
  %v470 = vadd.f32 %v19, %v467
  %v471 = vsub.f32 %v469, %v459
  %v472 = vsub.f32 %v470, %v460
  %v473 = vmul.f32 %v471, 0.7
  %v474 = vmul.f32 %v472, 0.7
  %vm475 = vcmp.gt.f32.partialorder %v459, %v473
  %vm476 = vcmp.gt.f32.partialorder %v460, %v474
  %vm477 = vcmp.gt.s32.totalorder %v21, 7
  %vm478 = vmand %vm475, %vm477
  %vm479 = vmand %vm476, %vm477
  %v480 = vsel %vm478, 1.0, 0.0
  %v481 = vsel %vm479, 1.0, 0.0
  %v482 = vsub.f32 1.0, %v435
  %v483 = vsub.f32 1.0, %v436
  %485 = vset.pattern.permute.xlu0 7
  %486 = vperm.xlu0 %485, %v482
  %v487 = vpop.permute.xlu0 %486
  %490 = vset.pattern.permute.xlu0 7
  %491 = vperm.xlu0 %490, %v483
  %v492 = vpop.permute.xlu0 %491
  %v494 = vmul.f32 %v480, %v487
  %v495 = vmul.f32 %v481, %v492
  %v496 = vmax.f32 %v435, %v494
  %v497 = vmax.f32 %v436, %v495
  %498 = vset.pattern.permute.xlu0 8
  %499 = vperm.xlu0 %498, %v8
  %v500 = vpop.permute.xlu0 %499
  %502 = vset.pattern.permute.xlu0 8
  %503 = vperm.xlu0 %502, %v9
  %v504 = vpop.permute.xlu0 %503
  %v506 = vmin.f32 %v8, %v500
  %v507 = vmin.f32 %v9, %v504
  %v508 = vmax.f32 %v8, %v500
  %v509 = vmax.f32 %v9, %v504
  %v512 = vrot.slane %v508, 7
  %v513 = vrot.slane %v509, 7
  %v516 = vsub.f32 %v506, %v512
  %v517 = vsub.f32 %v507, %v513
  %v518 = vadd.f32 %v516, 1.0
  %v519 = vadd.f32 %v517, 1.0
  %v520 = vmax.f32 %v518, 0.0
  %v521 = vmax.f32 %v519, 0.0
  %522 = vset.pattern.permute.xlu0 8
  %523 = vperm.xlu0 %522, %v18
  %v524 = vpop.permute.xlu0 %523
  %526 = vset.pattern.permute.xlu0 8
  %527 = vperm.xlu0 %526, %v19
  %v528 = vpop.permute.xlu0 %527
  %v530 = vadd.f32 %v18, %v524
  %v531 = vadd.f32 %v19, %v528
  %v532 = vsub.f32 %v530, %v520
  %v533 = vsub.f32 %v531, %v521
  %v534 = vmul.f32 %v532, 0.7
  %v535 = vmul.f32 %v533, 0.7
  %vm536 = vcmp.gt.f32.partialorder %v520, %v534
  %vm537 = vcmp.gt.f32.partialorder %v521, %v535
  %vm538 = vcmp.gt.s32.totalorder %v21, 8
  %vm539 = vmand %vm536, %vm538
  %vm540 = vmand %vm537, %vm538
  %v541 = vsel %vm539, 1.0, 0.0
  %v542 = vsel %vm540, 1.0, 0.0
  %v543 = vsub.f32 1.0, %v496
  %v544 = vsub.f32 1.0, %v497
  %546 = vset.pattern.permute.xlu0 8
  %547 = vperm.xlu0 %546, %v543
  %v548 = vpop.permute.xlu0 %547
  %551 = vset.pattern.permute.xlu0 8
  %552 = vperm.xlu0 %551, %v544
  %v553 = vpop.permute.xlu0 %552
  %v555 = vmul.f32 %v541, %v548
  %v556 = vmul.f32 %v542, %v553
  %v557 = vmax.f32 %v496, %v555
  %v558 = vmax.f32 %v497, %v556
  %559 = vset.pattern.permute.xlu0 9
  %560 = vperm.xlu0 %559, %v8
  %v561 = vpop.permute.xlu0 %560
  %563 = vset.pattern.permute.xlu0 9
  %564 = vperm.xlu0 %563, %v9
  %v565 = vpop.permute.xlu0 %564
  %v567 = vmin.f32 %v8, %v561
  %v568 = vmin.f32 %v9, %v565
  %v569 = vmax.f32 %v8, %v561
  %v570 = vmax.f32 %v9, %v565
  %v573 = vrot.slane %v569, 7
  %v574 = vrot.slane %v570, 7
  %v577 = vsub.f32 %v567, %v573
  %v578 = vsub.f32 %v568, %v574
  %v579 = vadd.f32 %v577, 1.0
  %v580 = vadd.f32 %v578, 1.0
  %v581 = vmax.f32 %v579, 0.0
  %v582 = vmax.f32 %v580, 0.0
  %583 = vset.pattern.permute.xlu0 9
  %584 = vperm.xlu0 %583, %v18
  %v585 = vpop.permute.xlu0 %584
  %587 = vset.pattern.permute.xlu0 9
  %588 = vperm.xlu0 %587, %v19
  %v589 = vpop.permute.xlu0 %588
  %v591 = vadd.f32 %v18, %v585
  %v592 = vadd.f32 %v19, %v589
  %v593 = vsub.f32 %v591, %v581
  %v594 = vsub.f32 %v592, %v582
  %v595 = vmul.f32 %v593, 0.7
  %v596 = vmul.f32 %v594, 0.7
  %vm597 = vcmp.gt.f32.partialorder %v581, %v595
  %vm598 = vcmp.gt.f32.partialorder %v582, %v596
  %vm599 = vcmp.gt.s32.totalorder %v21, 9
  %vm600 = vmand %vm597, %vm599
  %vm601 = vmand %vm598, %vm599
  %v602 = vsel %vm600, 1.0, 0.0
  %v603 = vsel %vm601, 1.0, 0.0
  %v604 = vsub.f32 1.0, %v557
  %v605 = vsub.f32 1.0, %v558
  %607 = vset.pattern.permute.xlu0 9
  %608 = vperm.xlu0 %607, %v604
  %v609 = vpop.permute.xlu0 %608
  %612 = vset.pattern.permute.xlu0 9
  %613 = vperm.xlu0 %612, %v605
  %v614 = vpop.permute.xlu0 %613
  %v616 = vmul.f32 %v602, %v609
  %v617 = vmul.f32 %v603, %v614
  %v618 = vmax.f32 %v557, %v616
  %v619 = vmax.f32 %v558, %v617
  %620 = vset.pattern.permute.xlu0 10
  %621 = vperm.xlu0 %620, %v8
  %v622 = vpop.permute.xlu0 %621
  %624 = vset.pattern.permute.xlu0 10
  %625 = vperm.xlu0 %624, %v9
  %v626 = vpop.permute.xlu0 %625
  %v628 = vmin.f32 %v8, %v622
  %v629 = vmin.f32 %v9, %v626
  %v630 = vmax.f32 %v8, %v622
  %v631 = vmax.f32 %v9, %v626
  %v634 = vrot.slane %v630, 7
  %v635 = vrot.slane %v631, 7
  %v638 = vsub.f32 %v628, %v634
  %v639 = vsub.f32 %v629, %v635
  %v640 = vadd.f32 %v638, 1.0
  %v641 = vadd.f32 %v639, 1.0
  %v642 = vmax.f32 %v640, 0.0
  %v643 = vmax.f32 %v641, 0.0
  %644 = vset.pattern.permute.xlu0 10
  %645 = vperm.xlu0 %644, %v18
  %v646 = vpop.permute.xlu0 %645
  %648 = vset.pattern.permute.xlu0 10
  %649 = vperm.xlu0 %648, %v19
  %v650 = vpop.permute.xlu0 %649
  %v652 = vadd.f32 %v18, %v646
  %v653 = vadd.f32 %v19, %v650
  %v654 = vsub.f32 %v652, %v642
  %v655 = vsub.f32 %v653, %v643
  %v656 = vmul.f32 %v654, 0.7
  %v657 = vmul.f32 %v655, 0.7
  %vm658 = vcmp.gt.f32.partialorder %v642, %v656
  %vm659 = vcmp.gt.f32.partialorder %v643, %v657
  %vm660 = vcmp.gt.s32.totalorder %v21, 10
  %vm661 = vmand %vm658, %vm660
  %vm662 = vmand %vm659, %vm660
  %v663 = vsel %vm661, 1.0, 0.0
  %v664 = vsel %vm662, 1.0, 0.0
  %v665 = vsub.f32 1.0, %v618
  %v666 = vsub.f32 1.0, %v619
  %668 = vset.pattern.permute.xlu0 10
  %669 = vperm.xlu0 %668, %v665
  %v670 = vpop.permute.xlu0 %669
  %673 = vset.pattern.permute.xlu0 10
  %674 = vperm.xlu0 %673, %v666
  %v675 = vpop.permute.xlu0 %674
  %v677 = vmul.f32 %v663, %v670
  %v678 = vmul.f32 %v664, %v675
  %v679 = vmax.f32 %v618, %v677
  %v680 = vmax.f32 %v619, %v678
  %681 = vset.pattern.permute.xlu0 11
  %682 = vperm.xlu0 %681, %v8
  %v683 = vpop.permute.xlu0 %682
  %685 = vset.pattern.permute.xlu0 11
  %686 = vperm.xlu0 %685, %v9
  %v687 = vpop.permute.xlu0 %686
  %v689 = vmin.f32 %v8, %v683
  %v690 = vmin.f32 %v9, %v687
  %v691 = vmax.f32 %v8, %v683
  %v692 = vmax.f32 %v9, %v687
  %v695 = vrot.slane %v691, 7
  %v696 = vrot.slane %v692, 7
  %v699 = vsub.f32 %v689, %v695
  %v700 = vsub.f32 %v690, %v696
  %v701 = vadd.f32 %v699, 1.0
  %v702 = vadd.f32 %v700, 1.0
  %v703 = vmax.f32 %v701, 0.0
  %v704 = vmax.f32 %v702, 0.0
  %705 = vset.pattern.permute.xlu0 11
  %706 = vperm.xlu0 %705, %v18
  %v707 = vpop.permute.xlu0 %706
  %709 = vset.pattern.permute.xlu0 11
  %710 = vperm.xlu0 %709, %v19
  %v711 = vpop.permute.xlu0 %710
  %v713 = vadd.f32 %v18, %v707
  %v714 = vadd.f32 %v19, %v711
  %v715 = vsub.f32 %v713, %v703
  %v716 = vsub.f32 %v714, %v704
  %v717 = vmul.f32 %v715, 0.7
  %v718 = vmul.f32 %v716, 0.7
  %vm719 = vcmp.gt.f32.partialorder %v703, %v717
  %vm720 = vcmp.gt.f32.partialorder %v704, %v718
  %vm721 = vcmp.gt.s32.totalorder %v21, 11
  %vm722 = vmand %vm719, %vm721
  %vm723 = vmand %vm720, %vm721
  %v724 = vsel %vm722, 1.0, 0.0
  %v725 = vsel %vm723, 1.0, 0.0
  %v726 = vsub.f32 1.0, %v679
  %v727 = vsub.f32 1.0, %v680
  %729 = vset.pattern.permute.xlu0 11
  %730 = vperm.xlu0 %729, %v726
  %v731 = vpop.permute.xlu0 %730
  %734 = vset.pattern.permute.xlu0 11
  %735 = vperm.xlu0 %734, %v727
  %v736 = vpop.permute.xlu0 %735
  %v738 = vmul.f32 %v724, %v731
  %v739 = vmul.f32 %v725, %v736
  %v740 = vmax.f32 %v679, %v738
  %v741 = vmax.f32 %v680, %v739
  %742 = vset.pattern.permute.xlu0 12
  %743 = vperm.xlu0 %742, %v8
  %v744 = vpop.permute.xlu0 %743
  %746 = vset.pattern.permute.xlu0 12
  %747 = vperm.xlu0 %746, %v9
  %v748 = vpop.permute.xlu0 %747
  %v750 = vmin.f32 %v8, %v744
  %v751 = vmin.f32 %v9, %v748
  %v752 = vmax.f32 %v8, %v744
  %v753 = vmax.f32 %v9, %v748
  %v756 = vrot.slane %v752, 7
  %v757 = vrot.slane %v753, 7
  %v760 = vsub.f32 %v750, %v756
  %v761 = vsub.f32 %v751, %v757
  %v762 = vadd.f32 %v760, 1.0
  %v763 = vadd.f32 %v761, 1.0
  %v764 = vmax.f32 %v762, 0.0
  %v765 = vmax.f32 %v763, 0.0
  %766 = vset.pattern.permute.xlu0 12
  %767 = vperm.xlu0 %766, %v18
  %v768 = vpop.permute.xlu0 %767
  %770 = vset.pattern.permute.xlu0 12
  %771 = vperm.xlu0 %770, %v19
  %v772 = vpop.permute.xlu0 %771
  %v774 = vadd.f32 %v18, %v768
  %v775 = vadd.f32 %v19, %v772
  %v776 = vsub.f32 %v774, %v764
  %v777 = vsub.f32 %v775, %v765
  %v778 = vmul.f32 %v776, 0.7
  %v779 = vmul.f32 %v777, 0.7
  %vm780 = vcmp.gt.f32.partialorder %v764, %v778
  %vm781 = vcmp.gt.f32.partialorder %v765, %v779
  %vm782 = vcmp.gt.s32.totalorder %v21, 12
  %vm783 = vmand %vm780, %vm782
  %vm784 = vmand %vm781, %vm782
  %v785 = vsel %vm783, 1.0, 0.0
  %v786 = vsel %vm784, 1.0, 0.0
  %v787 = vsub.f32 1.0, %v740
  %v788 = vsub.f32 1.0, %v741
  %790 = vset.pattern.permute.xlu0 12
  %791 = vperm.xlu0 %790, %v787
  %v792 = vpop.permute.xlu0 %791
  %795 = vset.pattern.permute.xlu0 12
  %796 = vperm.xlu0 %795, %v788
  %v797 = vpop.permute.xlu0 %796
  %v799 = vmul.f32 %v785, %v792
  %v800 = vmul.f32 %v786, %v797
  %v801 = vmax.f32 %v740, %v799
  %v802 = vmax.f32 %v741, %v800
  %803 = vset.pattern.permute.xlu0 13
  %804 = vperm.xlu0 %803, %v8
  %v805 = vpop.permute.xlu0 %804
  %807 = vset.pattern.permute.xlu0 13
  %808 = vperm.xlu0 %807, %v9
  %v809 = vpop.permute.xlu0 %808
  %v811 = vmin.f32 %v8, %v805
  %v812 = vmin.f32 %v9, %v809
  %v813 = vmax.f32 %v8, %v805
  %v814 = vmax.f32 %v9, %v809
  %v817 = vrot.slane %v813, 7
  %v818 = vrot.slane %v814, 7
  %v821 = vsub.f32 %v811, %v817
  %v822 = vsub.f32 %v812, %v818
  %v823 = vadd.f32 %v821, 1.0
  %v824 = vadd.f32 %v822, 1.0
  %v825 = vmax.f32 %v823, 0.0
  %v826 = vmax.f32 %v824, 0.0
  %827 = vset.pattern.permute.xlu0 13
  %828 = vperm.xlu0 %827, %v18
  %v829 = vpop.permute.xlu0 %828
  %831 = vset.pattern.permute.xlu0 13
  %832 = vperm.xlu0 %831, %v19
  %v833 = vpop.permute.xlu0 %832
  %v835 = vadd.f32 %v18, %v829
  %v836 = vadd.f32 %v19, %v833
  %v837 = vsub.f32 %v835, %v825
  %v838 = vsub.f32 %v836, %v826
  %v839 = vmul.f32 %v837, 0.7
  %v840 = vmul.f32 %v838, 0.7
  %vm841 = vcmp.gt.f32.partialorder %v825, %v839
  %vm842 = vcmp.gt.f32.partialorder %v826, %v840
  %vm843 = vcmp.gt.s32.totalorder %v21, 13
  %vm844 = vmand %vm841, %vm843
  %vm845 = vmand %vm842, %vm843
  %v846 = vsel %vm844, 1.0, 0.0
  %v847 = vsel %vm845, 1.0, 0.0
  %v848 = vsub.f32 1.0, %v801
  %v849 = vsub.f32 1.0, %v802
  %851 = vset.pattern.permute.xlu0 13
  %852 = vperm.xlu0 %851, %v848
  %v853 = vpop.permute.xlu0 %852
  %856 = vset.pattern.permute.xlu0 13
  %857 = vperm.xlu0 %856, %v849
  %v858 = vpop.permute.xlu0 %857
  %v860 = vmul.f32 %v846, %v853
  %v861 = vmul.f32 %v847, %v858
  %v862 = vmax.f32 %v801, %v860
  %v863 = vmax.f32 %v802, %v861
  %864 = vset.pattern.permute.xlu0 14
  %865 = vperm.xlu0 %864, %v8
  %v866 = vpop.permute.xlu0 %865
  %868 = vset.pattern.permute.xlu0 14
  %869 = vperm.xlu0 %868, %v9
  %v870 = vpop.permute.xlu0 %869
  %v872 = vmin.f32 %v8, %v866
  %v873 = vmin.f32 %v9, %v870
  %v874 = vmax.f32 %v8, %v866
  %v875 = vmax.f32 %v9, %v870
  %v878 = vrot.slane %v874, 7
  %v879 = vrot.slane %v875, 7
  %v882 = vsub.f32 %v872, %v878
  %v883 = vsub.f32 %v873, %v879
  %v884 = vadd.f32 %v882, 1.0
  %v885 = vadd.f32 %v883, 1.0
  %v886 = vmax.f32 %v884, 0.0
  %v887 = vmax.f32 %v885, 0.0
  %888 = vset.pattern.permute.xlu0 14
  %889 = vperm.xlu0 %888, %v18
  %v890 = vpop.permute.xlu0 %889
  %892 = vset.pattern.permute.xlu0 14
  %893 = vperm.xlu0 %892, %v19
  %v894 = vpop.permute.xlu0 %893
  %v896 = vadd.f32 %v18, %v890
  %v897 = vadd.f32 %v19, %v894
  %v898 = vsub.f32 %v896, %v886
  %v899 = vsub.f32 %v897, %v887
  %v900 = vmul.f32 %v898, 0.7
  %v901 = vmul.f32 %v899, 0.7
  %vm902 = vcmp.gt.f32.partialorder %v886, %v900
  %vm903 = vcmp.gt.f32.partialorder %v887, %v901
  %vm904 = vcmp.gt.s32.totalorder %v21, 14
  %vm905 = vmand %vm902, %vm904
  %vm906 = vmand %vm903, %vm904
  %v907 = vsel %vm905, 1.0, 0.0
  %v908 = vsel %vm906, 1.0, 0.0
  %v909 = vsub.f32 1.0, %v862
  %v910 = vsub.f32 1.0, %v863
  %912 = vset.pattern.permute.xlu0 14
  %913 = vperm.xlu0 %912, %v909
  %v914 = vpop.permute.xlu0 %913
  %917 = vset.pattern.permute.xlu0 14
  %918 = vperm.xlu0 %917, %v910
  %v919 = vpop.permute.xlu0 %918
  %v921 = vmul.f32 %v907, %v914
  %v922 = vmul.f32 %v908, %v919
  %v923 = vmax.f32 %v862, %v921
  %v924 = vmax.f32 %v863, %v922
  %925 = vset.pattern.permute.xlu0 15
  %926 = vperm.xlu0 %925, %v8
  %v927 = vpop.permute.xlu0 %926
  %929 = vset.pattern.permute.xlu0 15
  %930 = vperm.xlu0 %929, %v9
  %v931 = vpop.permute.xlu0 %930
  %v933 = vmin.f32 %v8, %v927
  %v934 = vmin.f32 %v9, %v931
  %v935 = vmax.f32 %v8, %v927
  %v936 = vmax.f32 %v9, %v931
  %v939 = vrot.slane %v935, 7
  %v940 = vrot.slane %v936, 7
  %v943 = vsub.f32 %v933, %v939
  %v944 = vsub.f32 %v934, %v940
  %v945 = vadd.f32 %v943, 1.0
  %v946 = vadd.f32 %v944, 1.0
  %v947 = vmax.f32 %v945, 0.0
  %v948 = vmax.f32 %v946, 0.0
  %949 = vset.pattern.permute.xlu0 15
  %950 = vperm.xlu0 %949, %v18
  %v951 = vpop.permute.xlu0 %950
  %953 = vset.pattern.permute.xlu0 15
  %954 = vperm.xlu0 %953, %v19
  %v955 = vpop.permute.xlu0 %954
  %v957 = vadd.f32 %v18, %v951
  %v958 = vadd.f32 %v19, %v955
  %v959 = vsub.f32 %v957, %v947
  %v960 = vsub.f32 %v958, %v948
  %v961 = vmul.f32 %v959, 0.7
  %v962 = vmul.f32 %v960, 0.7
  %vm963 = vcmp.gt.f32.partialorder %v947, %v961
  %vm964 = vcmp.gt.f32.partialorder %v948, %v962
  %vm965 = vcmp.gt.s32.totalorder %v21, 15
  %vm966 = vmand %vm963, %vm965
  %vm967 = vmand %vm964, %vm965
  %v968 = vsel %vm966, 1.0, 0.0
  %v969 = vsel %vm967, 1.0, 0.0
  %v970 = vsub.f32 1.0, %v923
  %v971 = vsub.f32 1.0, %v924
  %973 = vset.pattern.permute.xlu0 15
  %974 = vperm.xlu0 %973, %v970
  %v975 = vpop.permute.xlu0 %974
  %978 = vset.pattern.permute.xlu0 15
  %979 = vperm.xlu0 %978, %v971
  %v980 = vpop.permute.xlu0 %979
  %v982 = vmul.f32 %v968, %v975
  %v983 = vmul.f32 %v969, %v980
  %v984 = vmax.f32 %v923, %v982
  %v985 = vmax.f32 %v924, %v983
  %986 = vset.pattern.permute.xlu0 16
  %987 = vperm.xlu0 %986, %v8
  %v988 = vpop.permute.xlu0 %987
  %990 = vset.pattern.permute.xlu0 16
  %991 = vperm.xlu0 %990, %v9
  %v992 = vpop.permute.xlu0 %991
  %v994 = vmin.f32 %v8, %v988
  %v995 = vmin.f32 %v9, %v992
  %v996 = vmax.f32 %v8, %v988
  %v997 = vmax.f32 %v9, %v992
  %v1000 = vrot.slane %v996, 7
  %v1001 = vrot.slane %v997, 7
  %v1004 = vsub.f32 %v994, %v1000
  %v1005 = vsub.f32 %v995, %v1001
  %v1006 = vadd.f32 %v1004, 1.0
  %v1007 = vadd.f32 %v1005, 1.0
  %v1008 = vmax.f32 %v1006, 0.0
  %v1009 = vmax.f32 %v1007, 0.0
  %1010 = vset.pattern.permute.xlu0 16
  %1011 = vperm.xlu0 %1010, %v18
  %v1012 = vpop.permute.xlu0 %1011
  %1014 = vset.pattern.permute.xlu0 16
  %1015 = vperm.xlu0 %1014, %v19
  %v1016 = vpop.permute.xlu0 %1015
  %v1018 = vadd.f32 %v18, %v1012
  %v1019 = vadd.f32 %v19, %v1016
  %v1020 = vsub.f32 %v1018, %v1008
  %v1021 = vsub.f32 %v1019, %v1009
  %v1022 = vmul.f32 %v1020, 0.7
  %v1023 = vmul.f32 %v1021, 0.7
  %vm1024 = vcmp.gt.f32.partialorder %v1008, %v1022
  %vm1025 = vcmp.gt.f32.partialorder %v1009, %v1023
  %vm1026 = vcmp.gt.s32.totalorder %v21, 16
  %vm1027 = vmand %vm1024, %vm1026
  %vm1028 = vmand %vm1025, %vm1026
  %v1029 = vsel %vm1027, 1.0, 0.0
  %v1030 = vsel %vm1028, 1.0, 0.0
  %v1031 = vsub.f32 1.0, %v984
  %v1032 = vsub.f32 1.0, %v985
  %1034 = vset.pattern.permute.xlu0 16
  %1035 = vperm.xlu0 %1034, %v1031
  %v1036 = vpop.permute.xlu0 %1035
  %1039 = vset.pattern.permute.xlu0 16
  %1040 = vperm.xlu0 %1039, %v1032
  %v1041 = vpop.permute.xlu0 %1040
  %v1043 = vmul.f32 %v1029, %v1036
  %v1044 = vmul.f32 %v1030, %v1041
  %v1045 = vmax.f32 %v984, %v1043
  %v1046 = vmax.f32 %v985, %v1044
  %1047 = vset.pattern.permute.xlu0 17
  %1048 = vperm.xlu0 %1047, %v8
  %v1049 = vpop.permute.xlu0 %1048
  %1051 = vset.pattern.permute.xlu0 17
  %1052 = vperm.xlu0 %1051, %v9
  %v1053 = vpop.permute.xlu0 %1052
  %v1055 = vmin.f32 %v8, %v1049
  %v1056 = vmin.f32 %v9, %v1053
  %v1057 = vmax.f32 %v8, %v1049
  %v1058 = vmax.f32 %v9, %v1053
  %v1061 = vrot.slane %v1057, 7
  %v1062 = vrot.slane %v1058, 7
  %v1065 = vsub.f32 %v1055, %v1061
  %v1066 = vsub.f32 %v1056, %v1062
  %v1067 = vadd.f32 %v1065, 1.0
  %v1068 = vadd.f32 %v1066, 1.0
  %v1069 = vmax.f32 %v1067, 0.0
  %v1070 = vmax.f32 %v1068, 0.0
  %1071 = vset.pattern.permute.xlu0 17
  %1072 = vperm.xlu0 %1071, %v18
  %v1073 = vpop.permute.xlu0 %1072
  %1075 = vset.pattern.permute.xlu0 17
  %1076 = vperm.xlu0 %1075, %v19
  %v1077 = vpop.permute.xlu0 %1076
  %v1079 = vadd.f32 %v18, %v1073
  %v1080 = vadd.f32 %v19, %v1077
  %v1081 = vsub.f32 %v1079, %v1069
  %v1082 = vsub.f32 %v1080, %v1070
  %v1083 = vmul.f32 %v1081, 0.7
  %v1084 = vmul.f32 %v1082, 0.7
  %vm1085 = vcmp.gt.f32.partialorder %v1069, %v1083
  %vm1086 = vcmp.gt.f32.partialorder %v1070, %v1084
  %vm1087 = vcmp.gt.s32.totalorder %v21, 17
  %vm1088 = vmand %vm1085, %vm1087
  %vm1089 = vmand %vm1086, %vm1087
  %v1090 = vsel %vm1088, 1.0, 0.0
  %v1091 = vsel %vm1089, 1.0, 0.0
  %v1092 = vsub.f32 1.0, %v1045
  %v1093 = vsub.f32 1.0, %v1046
  %1095 = vset.pattern.permute.xlu0 17
  %1096 = vperm.xlu0 %1095, %v1092
  %v1097 = vpop.permute.xlu0 %1096
  %1100 = vset.pattern.permute.xlu0 17
  %1101 = vperm.xlu0 %1100, %v1093
  %v1102 = vpop.permute.xlu0 %1101
  %v1104 = vmul.f32 %v1090, %v1097
  %v1105 = vmul.f32 %v1091, %v1102
  %v1106 = vmax.f32 %v1045, %v1104
  %v1107 = vmax.f32 %v1046, %v1105
  %1108 = vset.pattern.permute.xlu0 18
  %1109 = vperm.xlu0 %1108, %v8
  %v1110 = vpop.permute.xlu0 %1109
  %1112 = vset.pattern.permute.xlu0 18
  %1113 = vperm.xlu0 %1112, %v9
  %v1114 = vpop.permute.xlu0 %1113
  %v1116 = vmin.f32 %v8, %v1110
  %v1117 = vmin.f32 %v9, %v1114
  %v1118 = vmax.f32 %v8, %v1110
  %v1119 = vmax.f32 %v9, %v1114
  %v1122 = vrot.slane %v1118, 7
  %v1123 = vrot.slane %v1119, 7
  %v1126 = vsub.f32 %v1116, %v1122
  %v1127 = vsub.f32 %v1117, %v1123
  %v1128 = vadd.f32 %v1126, 1.0
  %v1129 = vadd.f32 %v1127, 1.0
  %v1130 = vmax.f32 %v1128, 0.0
  %v1131 = vmax.f32 %v1129, 0.0
  %1132 = vset.pattern.permute.xlu0 18
  %1133 = vperm.xlu0 %1132, %v18
  %v1134 = vpop.permute.xlu0 %1133
  %1136 = vset.pattern.permute.xlu0 18
  %1137 = vperm.xlu0 %1136, %v19
  %v1138 = vpop.permute.xlu0 %1137
  %v1140 = vadd.f32 %v18, %v1134
  %v1141 = vadd.f32 %v19, %v1138
  %v1142 = vsub.f32 %v1140, %v1130
  %v1143 = vsub.f32 %v1141, %v1131
  %v1144 = vmul.f32 %v1142, 0.7
  %v1145 = vmul.f32 %v1143, 0.7
  %vm1146 = vcmp.gt.f32.partialorder %v1130, %v1144
  %vm1147 = vcmp.gt.f32.partialorder %v1131, %v1145
  %vm1148 = vcmp.gt.s32.totalorder %v21, 18
  %vm1149 = vmand %vm1146, %vm1148
  %vm1150 = vmand %vm1147, %vm1148
  %v1151 = vsel %vm1149, 1.0, 0.0
  %v1152 = vsel %vm1150, 1.0, 0.0
  %v1153 = vsub.f32 1.0, %v1106
  %v1154 = vsub.f32 1.0, %v1107
  %1156 = vset.pattern.permute.xlu0 18
  %1157 = vperm.xlu0 %1156, %v1153
  %v1158 = vpop.permute.xlu0 %1157
  %1161 = vset.pattern.permute.xlu0 18
  %1162 = vperm.xlu0 %1161, %v1154
  %v1163 = vpop.permute.xlu0 %1162
  %v1165 = vmul.f32 %v1151, %v1158
  %v1166 = vmul.f32 %v1152, %v1163
  %v1167 = vmax.f32 %v1106, %v1165
  %v1168 = vmax.f32 %v1107, %v1166
  %1169 = vset.pattern.permute.xlu0 19
  %1170 = vperm.xlu0 %1169, %v8
  %v1171 = vpop.permute.xlu0 %1170
  %1173 = vset.pattern.permute.xlu0 19
  %1174 = vperm.xlu0 %1173, %v9
  %v1175 = vpop.permute.xlu0 %1174
  %v1177 = vmin.f32 %v8, %v1171
  %v1178 = vmin.f32 %v9, %v1175
  %v1179 = vmax.f32 %v8, %v1171
  %v1180 = vmax.f32 %v9, %v1175
  %v1183 = vrot.slane %v1179, 7
  %v1184 = vrot.slane %v1180, 7
  %v1187 = vsub.f32 %v1177, %v1183
  %v1188 = vsub.f32 %v1178, %v1184
  %v1189 = vadd.f32 %v1187, 1.0
  %v1190 = vadd.f32 %v1188, 1.0
  %v1191 = vmax.f32 %v1189, 0.0
  %v1192 = vmax.f32 %v1190, 0.0
  %1193 = vset.pattern.permute.xlu0 19
  %1194 = vperm.xlu0 %1193, %v18
  %v1195 = vpop.permute.xlu0 %1194
  %1197 = vset.pattern.permute.xlu0 19
  %1198 = vperm.xlu0 %1197, %v19
  %v1199 = vpop.permute.xlu0 %1198
  %v1201 = vadd.f32 %v18, %v1195
  %v1202 = vadd.f32 %v19, %v1199
  %v1203 = vsub.f32 %v1201, %v1191
  %v1204 = vsub.f32 %v1202, %v1192
  %v1205 = vmul.f32 %v1203, 0.7
  %v1206 = vmul.f32 %v1204, 0.7
  %vm1207 = vcmp.gt.f32.partialorder %v1191, %v1205
  %vm1208 = vcmp.gt.f32.partialorder %v1192, %v1206
  %vm1209 = vcmp.gt.s32.totalorder %v21, 19
  %vm1210 = vmand %vm1207, %vm1209
  %vm1211 = vmand %vm1208, %vm1209
  %v1212 = vsel %vm1210, 1.0, 0.0
  %v1213 = vsel %vm1211, 1.0, 0.0
  %v1214 = vsub.f32 1.0, %v1167
  %v1215 = vsub.f32 1.0, %v1168
  %1217 = vset.pattern.permute.xlu0 19
  %1218 = vperm.xlu0 %1217, %v1214
  %v1219 = vpop.permute.xlu0 %1218
  %1222 = vset.pattern.permute.xlu0 19
  %1223 = vperm.xlu0 %1222, %v1215
  %v1224 = vpop.permute.xlu0 %1223
  %v1226 = vmul.f32 %v1212, %v1219
  %v1227 = vmul.f32 %v1213, %v1224
  %v1228 = vmax.f32 %v1167, %v1226
  %v1229 = vmax.f32 %v1168, %v1227
  %1230 = vset.pattern.permute.xlu0 20
  %1231 = vperm.xlu0 %1230, %v8
  %v1232 = vpop.permute.xlu0 %1231
  %1234 = vset.pattern.permute.xlu0 20
  %1235 = vperm.xlu0 %1234, %v9
  %v1236 = vpop.permute.xlu0 %1235
  %v1238 = vmin.f32 %v8, %v1232
  %v1239 = vmin.f32 %v9, %v1236
  %v1240 = vmax.f32 %v8, %v1232
  %v1241 = vmax.f32 %v9, %v1236
  %v1244 = vrot.slane %v1240, 7
  %v1245 = vrot.slane %v1241, 7
  %v1248 = vsub.f32 %v1238, %v1244
  %v1249 = vsub.f32 %v1239, %v1245
  %v1250 = vadd.f32 %v1248, 1.0
  %v1251 = vadd.f32 %v1249, 1.0
  %v1252 = vmax.f32 %v1250, 0.0
  %v1253 = vmax.f32 %v1251, 0.0
  %1254 = vset.pattern.permute.xlu0 20
  %1255 = vperm.xlu0 %1254, %v18
  %v1256 = vpop.permute.xlu0 %1255
  %1258 = vset.pattern.permute.xlu0 20
  %1259 = vperm.xlu0 %1258, %v19
  %v1260 = vpop.permute.xlu0 %1259
  %v1262 = vadd.f32 %v18, %v1256
  %v1263 = vadd.f32 %v19, %v1260
  %v1264 = vsub.f32 %v1262, %v1252
  %v1265 = vsub.f32 %v1263, %v1253
  %v1266 = vmul.f32 %v1264, 0.7
  %v1267 = vmul.f32 %v1265, 0.7
  %vm1268 = vcmp.gt.f32.partialorder %v1252, %v1266
  %vm1269 = vcmp.gt.f32.partialorder %v1253, %v1267
  %vm1270 = vcmp.gt.s32.totalorder %v21, 20
  %vm1271 = vmand %vm1268, %vm1270
  %vm1272 = vmand %vm1269, %vm1270
  %v1273 = vsel %vm1271, 1.0, 0.0
  %v1274 = vsel %vm1272, 1.0, 0.0
  %v1275 = vsub.f32 1.0, %v1228
  %v1276 = vsub.f32 1.0, %v1229
  %1278 = vset.pattern.permute.xlu0 20
  %1279 = vperm.xlu0 %1278, %v1275
  %v1280 = vpop.permute.xlu0 %1279
  %1283 = vset.pattern.permute.xlu0 20
  %1284 = vperm.xlu0 %1283, %v1276
  %v1285 = vpop.permute.xlu0 %1284
  %v1287 = vmul.f32 %v1273, %v1280
  %v1288 = vmul.f32 %v1274, %v1285
  %v1289 = vmax.f32 %v1228, %v1287
  %v1290 = vmax.f32 %v1229, %v1288
  %1291 = vset.pattern.permute.xlu0 21
  %1292 = vperm.xlu0 %1291, %v8
  %v1293 = vpop.permute.xlu0 %1292
  %1295 = vset.pattern.permute.xlu0 21
  %1296 = vperm.xlu0 %1295, %v9
  %v1297 = vpop.permute.xlu0 %1296
  %v1299 = vmin.f32 %v8, %v1293
  %v1300 = vmin.f32 %v9, %v1297
  %v1301 = vmax.f32 %v8, %v1293
  %v1302 = vmax.f32 %v9, %v1297
  %v1305 = vrot.slane %v1301, 7
  %v1306 = vrot.slane %v1302, 7
  %v1309 = vsub.f32 %v1299, %v1305
  %v1310 = vsub.f32 %v1300, %v1306
  %v1311 = vadd.f32 %v1309, 1.0
  %v1312 = vadd.f32 %v1310, 1.0
  %v1313 = vmax.f32 %v1311, 0.0
  %v1314 = vmax.f32 %v1312, 0.0
  %1315 = vset.pattern.permute.xlu0 21
  %1316 = vperm.xlu0 %1315, %v18
  %v1317 = vpop.permute.xlu0 %1316
  %1319 = vset.pattern.permute.xlu0 21
  %1320 = vperm.xlu0 %1319, %v19
  %v1321 = vpop.permute.xlu0 %1320
  %v1323 = vadd.f32 %v18, %v1317
  %v1324 = vadd.f32 %v19, %v1321
  %v1325 = vsub.f32 %v1323, %v1313
  %v1326 = vsub.f32 %v1324, %v1314
  %v1327 = vmul.f32 %v1325, 0.7
  %v1328 = vmul.f32 %v1326, 0.7
  %vm1329 = vcmp.gt.f32.partialorder %v1313, %v1327
  %vm1330 = vcmp.gt.f32.partialorder %v1314, %v1328
  %vm1331 = vcmp.gt.s32.totalorder %v21, 21
  %vm1332 = vmand %vm1329, %vm1331
  %vm1333 = vmand %vm1330, %vm1331
  %v1334 = vsel %vm1332, 1.0, 0.0
  %v1335 = vsel %vm1333, 1.0, 0.0
  %v1336 = vsub.f32 1.0, %v1289
  %v1337 = vsub.f32 1.0, %v1290
  %1339 = vset.pattern.permute.xlu0 21
  %1340 = vperm.xlu0 %1339, %v1336
  %v1341 = vpop.permute.xlu0 %1340
  %1344 = vset.pattern.permute.xlu0 21
  %1345 = vperm.xlu0 %1344, %v1337
  %v1346 = vpop.permute.xlu0 %1345
  %v1348 = vmul.f32 %v1334, %v1341
  %v1349 = vmul.f32 %v1335, %v1346
  %v1350 = vmax.f32 %v1289, %v1348
  %v1351 = vmax.f32 %v1290, %v1349
  %1352 = vset.pattern.permute.xlu0 22
  %1353 = vperm.xlu0 %1352, %v8
  %v1354 = vpop.permute.xlu0 %1353
  %1356 = vset.pattern.permute.xlu0 22
  %1357 = vperm.xlu0 %1356, %v9
  %v1358 = vpop.permute.xlu0 %1357
  %v1360 = vmin.f32 %v8, %v1354
  %v1361 = vmin.f32 %v9, %v1358
  %v1362 = vmax.f32 %v8, %v1354
  %v1363 = vmax.f32 %v9, %v1358
  %v1366 = vrot.slane %v1362, 7
  %v1367 = vrot.slane %v1363, 7
  %v1370 = vsub.f32 %v1360, %v1366
  %v1371 = vsub.f32 %v1361, %v1367
  %v1372 = vadd.f32 %v1370, 1.0
  %v1373 = vadd.f32 %v1371, 1.0
  %v1374 = vmax.f32 %v1372, 0.0
  %v1375 = vmax.f32 %v1373, 0.0
  %1376 = vset.pattern.permute.xlu0 22
  %1377 = vperm.xlu0 %1376, %v18
  %v1378 = vpop.permute.xlu0 %1377
  %1380 = vset.pattern.permute.xlu0 22
  %1381 = vperm.xlu0 %1380, %v19
  %v1382 = vpop.permute.xlu0 %1381
  %v1384 = vadd.f32 %v18, %v1378
  %v1385 = vadd.f32 %v19, %v1382
  %v1386 = vsub.f32 %v1384, %v1374
  %v1387 = vsub.f32 %v1385, %v1375
  %v1388 = vmul.f32 %v1386, 0.7
  %v1389 = vmul.f32 %v1387, 0.7
  %vm1390 = vcmp.gt.f32.partialorder %v1374, %v1388
  %vm1391 = vcmp.gt.f32.partialorder %v1375, %v1389
  %vm1392 = vcmp.gt.s32.totalorder %v21, 22
  %vm1393 = vmand %vm1390, %vm1392
  %vm1394 = vmand %vm1391, %vm1392
  %v1395 = vsel %vm1393, 1.0, 0.0
  %v1396 = vsel %vm1394, 1.0, 0.0
  %v1397 = vsub.f32 1.0, %v1350
  %v1398 = vsub.f32 1.0, %v1351
  %1400 = vset.pattern.permute.xlu0 22
  %1401 = vperm.xlu0 %1400, %v1397
  %v1402 = vpop.permute.xlu0 %1401
  %1405 = vset.pattern.permute.xlu0 22
  %1406 = vperm.xlu0 %1405, %v1398
  %v1407 = vpop.permute.xlu0 %1406
  %v1409 = vmul.f32 %v1395, %v1402
  %v1410 = vmul.f32 %v1396, %v1407
  %v1411 = vmax.f32 %v1350, %v1409
  %v1412 = vmax.f32 %v1351, %v1410
  %1413 = vset.pattern.permute.xlu0 23
  %1414 = vperm.xlu0 %1413, %v8
  %v1415 = vpop.permute.xlu0 %1414
  %1417 = vset.pattern.permute.xlu0 23
  %1418 = vperm.xlu0 %1417, %v9
  %v1419 = vpop.permute.xlu0 %1418
  %v1421 = vmin.f32 %v8, %v1415
  %v1422 = vmin.f32 %v9, %v1419
  %v1423 = vmax.f32 %v8, %v1415
  %v1424 = vmax.f32 %v9, %v1419
  %v1427 = vrot.slane %v1423, 7
  %v1428 = vrot.slane %v1424, 7
  %v1431 = vsub.f32 %v1421, %v1427
  %v1432 = vsub.f32 %v1422, %v1428
  %v1433 = vadd.f32 %v1431, 1.0
  %v1434 = vadd.f32 %v1432, 1.0
  %v1435 = vmax.f32 %v1433, 0.0
  %v1436 = vmax.f32 %v1434, 0.0
  %1437 = vset.pattern.permute.xlu0 23
  %1438 = vperm.xlu0 %1437, %v18
  %v1439 = vpop.permute.xlu0 %1438
  %1441 = vset.pattern.permute.xlu0 23
  %1442 = vperm.xlu0 %1441, %v19
  %v1443 = vpop.permute.xlu0 %1442
  %v1445 = vadd.f32 %v18, %v1439
  %v1446 = vadd.f32 %v19, %v1443
  %v1447 = vsub.f32 %v1445, %v1435
  %v1448 = vsub.f32 %v1446, %v1436
  %v1449 = vmul.f32 %v1447, 0.7
  %v1450 = vmul.f32 %v1448, 0.7
  %vm1451 = vcmp.gt.f32.partialorder %v1435, %v1449
  %vm1452 = vcmp.gt.f32.partialorder %v1436, %v1450
  %vm1453 = vcmp.gt.s32.totalorder %v21, 23
  %vm1454 = vmand %vm1451, %vm1453
  %vm1455 = vmand %vm1452, %vm1453
  %v1456 = vsel %vm1454, 1.0, 0.0
  %v1457 = vsel %vm1455, 1.0, 0.0
  %v1458 = vsub.f32 1.0, %v1411
  %v1459 = vsub.f32 1.0, %v1412
  %1461 = vset.pattern.permute.xlu0 23
  %1462 = vperm.xlu0 %1461, %v1458
  %v1463 = vpop.permute.xlu0 %1462
  %1466 = vset.pattern.permute.xlu0 23
  %1467 = vperm.xlu0 %1466, %v1459
  %v1468 = vpop.permute.xlu0 %1467
  %v1470 = vmul.f32 %v1456, %v1463
  %v1471 = vmul.f32 %v1457, %v1468
  %v1472 = vmax.f32 %v1411, %v1470
  %v1473 = vmax.f32 %v1412, %v1471
  %1474 = vset.pattern.permute.xlu0 24
  %1475 = vperm.xlu0 %1474, %v8
  %v1476 = vpop.permute.xlu0 %1475
  %1478 = vset.pattern.permute.xlu0 24
  %1479 = vperm.xlu0 %1478, %v9
  %v1480 = vpop.permute.xlu0 %1479
  %v1482 = vmin.f32 %v8, %v1476
  %v1483 = vmin.f32 %v9, %v1480
  %v1484 = vmax.f32 %v8, %v1476
  %v1485 = vmax.f32 %v9, %v1480
  %v1488 = vrot.slane %v1484, 7
  %v1489 = vrot.slane %v1485, 7
  %v1492 = vsub.f32 %v1482, %v1488
  %v1493 = vsub.f32 %v1483, %v1489
  %v1494 = vadd.f32 %v1492, 1.0
  %v1495 = vadd.f32 %v1493, 1.0
  %v1496 = vmax.f32 %v1494, 0.0
  %v1497 = vmax.f32 %v1495, 0.0
  %1498 = vset.pattern.permute.xlu0 24
  %1499 = vperm.xlu0 %1498, %v18
  %v1500 = vpop.permute.xlu0 %1499
  %1502 = vset.pattern.permute.xlu0 24
  %1503 = vperm.xlu0 %1502, %v19
  %v1504 = vpop.permute.xlu0 %1503
  %v1506 = vadd.f32 %v18, %v1500
  %v1507 = vadd.f32 %v19, %v1504
  %v1508 = vsub.f32 %v1506, %v1496
  %v1509 = vsub.f32 %v1507, %v1497
  %v1510 = vmul.f32 %v1508, 0.7
  %v1511 = vmul.f32 %v1509, 0.7
  %vm1512 = vcmp.gt.f32.partialorder %v1496, %v1510
  %vm1513 = vcmp.gt.f32.partialorder %v1497, %v1511
  %vm1514 = vcmp.gt.s32.totalorder %v21, 24
  %vm1515 = vmand %vm1512, %vm1514
  %vm1516 = vmand %vm1513, %vm1514
  %v1517 = vsel %vm1515, 1.0, 0.0
  %v1518 = vsel %vm1516, 1.0, 0.0
  %v1519 = vsub.f32 1.0, %v1472
  %v1520 = vsub.f32 1.0, %v1473
  %1522 = vset.pattern.permute.xlu0 24
  %1523 = vperm.xlu0 %1522, %v1519
  %v1524 = vpop.permute.xlu0 %1523
  %1527 = vset.pattern.permute.xlu0 24
  %1528 = vperm.xlu0 %1527, %v1520
  %v1529 = vpop.permute.xlu0 %1528
  %v1531 = vmul.f32 %v1517, %v1524
  %v1532 = vmul.f32 %v1518, %v1529
  %v1533 = vmax.f32 %v1472, %v1531
  %v1534 = vmax.f32 %v1473, %v1532
  %1535 = vset.pattern.permute.xlu0 25
  %1536 = vperm.xlu0 %1535, %v8
  %v1537 = vpop.permute.xlu0 %1536
  %1539 = vset.pattern.permute.xlu0 25
  %1540 = vperm.xlu0 %1539, %v9
  %v1541 = vpop.permute.xlu0 %1540
  %v1543 = vmin.f32 %v8, %v1537
  %v1544 = vmin.f32 %v9, %v1541
  %v1545 = vmax.f32 %v8, %v1537
  %v1546 = vmax.f32 %v9, %v1541
  %v1549 = vrot.slane %v1545, 7
  %v1550 = vrot.slane %v1546, 7
  %v1553 = vsub.f32 %v1543, %v1549
  %v1554 = vsub.f32 %v1544, %v1550
  %v1555 = vadd.f32 %v1553, 1.0
  %v1556 = vadd.f32 %v1554, 1.0
  %v1557 = vmax.f32 %v1555, 0.0
  %v1558 = vmax.f32 %v1556, 0.0
  %1559 = vset.pattern.permute.xlu0 25
  %1560 = vperm.xlu0 %1559, %v18
  %v1561 = vpop.permute.xlu0 %1560
  %1563 = vset.pattern.permute.xlu0 25
  %1564 = vperm.xlu0 %1563, %v19
  %v1565 = vpop.permute.xlu0 %1564
  %v1567 = vadd.f32 %v18, %v1561
  %v1568 = vadd.f32 %v19, %v1565
  %v1569 = vsub.f32 %v1567, %v1557
  %v1570 = vsub.f32 %v1568, %v1558
  %v1571 = vmul.f32 %v1569, 0.7
  %v1572 = vmul.f32 %v1570, 0.7
  %vm1573 = vcmp.gt.f32.partialorder %v1557, %v1571
  %vm1574 = vcmp.gt.f32.partialorder %v1558, %v1572
  %vm1575 = vcmp.gt.s32.totalorder %v21, 25
  %vm1576 = vmand %vm1573, %vm1575
  %vm1577 = vmand %vm1574, %vm1575
  %v1578 = vsel %vm1576, 1.0, 0.0
  %v1579 = vsel %vm1577, 1.0, 0.0
  %v1580 = vsub.f32 1.0, %v1533
  %v1581 = vsub.f32 1.0, %v1534
  %1583 = vset.pattern.permute.xlu0 25
  %1584 = vperm.xlu0 %1583, %v1580
  %v1585 = vpop.permute.xlu0 %1584
  %1588 = vset.pattern.permute.xlu0 25
  %1589 = vperm.xlu0 %1588, %v1581
  %v1590 = vpop.permute.xlu0 %1589
  %v1592 = vmul.f32 %v1578, %v1585
  %v1593 = vmul.f32 %v1579, %v1590
  %v1594 = vmax.f32 %v1533, %v1592
  %v1595 = vmax.f32 %v1534, %v1593
  %1596 = vset.pattern.permute.xlu0 26
  %1597 = vperm.xlu0 %1596, %v8
  %v1598 = vpop.permute.xlu0 %1597
  %1600 = vset.pattern.permute.xlu0 26
  %1601 = vperm.xlu0 %1600, %v9
  %v1602 = vpop.permute.xlu0 %1601
  %v1604 = vmin.f32 %v8, %v1598
  %v1605 = vmin.f32 %v9, %v1602
  %v1606 = vmax.f32 %v8, %v1598
  %v1607 = vmax.f32 %v9, %v1602
  %v1610 = vrot.slane %v1606, 7
  %v1611 = vrot.slane %v1607, 7
  %v1614 = vsub.f32 %v1604, %v1610
  %v1615 = vsub.f32 %v1605, %v1611
  %v1616 = vadd.f32 %v1614, 1.0
  %v1617 = vadd.f32 %v1615, 1.0
  %v1618 = vmax.f32 %v1616, 0.0
  %v1619 = vmax.f32 %v1617, 0.0
  %1620 = vset.pattern.permute.xlu0 26
  %1621 = vperm.xlu0 %1620, %v18
  %v1622 = vpop.permute.xlu0 %1621
  %1624 = vset.pattern.permute.xlu0 26
  %1625 = vperm.xlu0 %1624, %v19
  %v1626 = vpop.permute.xlu0 %1625
  %v1628 = vadd.f32 %v18, %v1622
  %v1629 = vadd.f32 %v19, %v1626
  %v1630 = vsub.f32 %v1628, %v1618
  %v1631 = vsub.f32 %v1629, %v1619
  %v1632 = vmul.f32 %v1630, 0.7
  %v1633 = vmul.f32 %v1631, 0.7
  %vm1634 = vcmp.gt.f32.partialorder %v1618, %v1632
  %vm1635 = vcmp.gt.f32.partialorder %v1619, %v1633
  %vm1636 = vcmp.gt.s32.totalorder %v21, 26
  %vm1637 = vmand %vm1634, %vm1636
  %vm1638 = vmand %vm1635, %vm1636
  %v1639 = vsel %vm1637, 1.0, 0.0
  %v1640 = vsel %vm1638, 1.0, 0.0
  %v1641 = vsub.f32 1.0, %v1594
  %v1642 = vsub.f32 1.0, %v1595
  %1644 = vset.pattern.permute.xlu0 26
  %1645 = vperm.xlu0 %1644, %v1641
  %v1646 = vpop.permute.xlu0 %1645
  %1649 = vset.pattern.permute.xlu0 26
  %1650 = vperm.xlu0 %1649, %v1642
  %v1651 = vpop.permute.xlu0 %1650
  %v1653 = vmul.f32 %v1639, %v1646
  %v1654 = vmul.f32 %v1640, %v1651
  %v1655 = vmax.f32 %v1594, %v1653
  %v1656 = vmax.f32 %v1595, %v1654
  %1657 = vset.pattern.permute.xlu0 27
  %1658 = vperm.xlu0 %1657, %v8
  %v1659 = vpop.permute.xlu0 %1658
  %1661 = vset.pattern.permute.xlu0 27
  %1662 = vperm.xlu0 %1661, %v9
  %v1663 = vpop.permute.xlu0 %1662
  %v1665 = vmin.f32 %v8, %v1659
  %v1666 = vmin.f32 %v9, %v1663
  %v1667 = vmax.f32 %v8, %v1659
  %v1668 = vmax.f32 %v9, %v1663
  %v1671 = vrot.slane %v1667, 7
  %v1672 = vrot.slane %v1668, 7
  %v1675 = vsub.f32 %v1665, %v1671
  %v1676 = vsub.f32 %v1666, %v1672
  %v1677 = vadd.f32 %v1675, 1.0
  %v1678 = vadd.f32 %v1676, 1.0
  %v1679 = vmax.f32 %v1677, 0.0
  %v1680 = vmax.f32 %v1678, 0.0
  %1681 = vset.pattern.permute.xlu0 27
  %1682 = vperm.xlu0 %1681, %v18
  %v1683 = vpop.permute.xlu0 %1682
  %1685 = vset.pattern.permute.xlu0 27
  %1686 = vperm.xlu0 %1685, %v19
  %v1687 = vpop.permute.xlu0 %1686
  %v1689 = vadd.f32 %v18, %v1683
  %v1690 = vadd.f32 %v19, %v1687
  %v1691 = vsub.f32 %v1689, %v1679
  %v1692 = vsub.f32 %v1690, %v1680
  %v1693 = vmul.f32 %v1691, 0.7
  %v1694 = vmul.f32 %v1692, 0.7
  %vm1695 = vcmp.gt.f32.partialorder %v1679, %v1693
  %vm1696 = vcmp.gt.f32.partialorder %v1680, %v1694
  %vm1697 = vcmp.gt.s32.totalorder %v21, 27
  %vm1698 = vmand %vm1695, %vm1697
  %vm1699 = vmand %vm1696, %vm1697
  %v1700 = vsel %vm1698, 1.0, 0.0
  %v1701 = vsel %vm1699, 1.0, 0.0
  %v1702 = vsub.f32 1.0, %v1655
  %v1703 = vsub.f32 1.0, %v1656
  %1705 = vset.pattern.permute.xlu0 27
  %1706 = vperm.xlu0 %1705, %v1702
  %v1707 = vpop.permute.xlu0 %1706
  %1710 = vset.pattern.permute.xlu0 27
  %1711 = vperm.xlu0 %1710, %v1703
  %v1712 = vpop.permute.xlu0 %1711
  %v1714 = vmul.f32 %v1700, %v1707
  %v1715 = vmul.f32 %v1701, %v1712
  %v1716 = vmax.f32 %v1655, %v1714
  %v1717 = vmax.f32 %v1656, %v1715
  %1718 = vset.pattern.permute.xlu0 28
  %1719 = vperm.xlu0 %1718, %v8
  %v1720 = vpop.permute.xlu0 %1719
  %1722 = vset.pattern.permute.xlu0 28
  %1723 = vperm.xlu0 %1722, %v9
  %v1724 = vpop.permute.xlu0 %1723
  %v1726 = vmin.f32 %v8, %v1720
  %v1727 = vmin.f32 %v9, %v1724
  %v1728 = vmax.f32 %v8, %v1720
  %v1729 = vmax.f32 %v9, %v1724
  %v1732 = vrot.slane %v1728, 7
  %v1733 = vrot.slane %v1729, 7
  %v1736 = vsub.f32 %v1726, %v1732
  %v1737 = vsub.f32 %v1727, %v1733
  %v1738 = vadd.f32 %v1736, 1.0
  %v1739 = vadd.f32 %v1737, 1.0
  %v1740 = vmax.f32 %v1738, 0.0
  %v1741 = vmax.f32 %v1739, 0.0
  %1742 = vset.pattern.permute.xlu0 28
  %1743 = vperm.xlu0 %1742, %v18
  %v1744 = vpop.permute.xlu0 %1743
  %1746 = vset.pattern.permute.xlu0 28
  %1747 = vperm.xlu0 %1746, %v19
  %v1748 = vpop.permute.xlu0 %1747
  %v1750 = vadd.f32 %v18, %v1744
  %v1751 = vadd.f32 %v19, %v1748
  %v1752 = vsub.f32 %v1750, %v1740
  %v1753 = vsub.f32 %v1751, %v1741
  %v1754 = vmul.f32 %v1752, 0.7
  %v1755 = vmul.f32 %v1753, 0.7
  %vm1756 = vcmp.gt.f32.partialorder %v1740, %v1754
  %vm1757 = vcmp.gt.f32.partialorder %v1741, %v1755
  %vm1758 = vcmp.gt.s32.totalorder %v21, 28
  %vm1759 = vmand %vm1756, %vm1758
  %vm1760 = vmand %vm1757, %vm1758
  %v1761 = vsel %vm1759, 1.0, 0.0
  %v1762 = vsel %vm1760, 1.0, 0.0
  %v1763 = vsub.f32 1.0, %v1716
  %v1764 = vsub.f32 1.0, %v1717
  %1766 = vset.pattern.permute.xlu0 28
  %1767 = vperm.xlu0 %1766, %v1763
  %v1768 = vpop.permute.xlu0 %1767
  %1771 = vset.pattern.permute.xlu0 28
  %1772 = vperm.xlu0 %1771, %v1764
  %v1773 = vpop.permute.xlu0 %1772
  %v1775 = vmul.f32 %v1761, %v1768
  %v1776 = vmul.f32 %v1762, %v1773
  %v1777 = vmax.f32 %v1716, %v1775
  %v1778 = vmax.f32 %v1717, %v1776
  %1779 = vset.pattern.permute.xlu0 29
  %1780 = vperm.xlu0 %1779, %v8
  %v1781 = vpop.permute.xlu0 %1780
  %1783 = vset.pattern.permute.xlu0 29
  %1784 = vperm.xlu0 %1783, %v9
  %v1785 = vpop.permute.xlu0 %1784
  %v1787 = vmin.f32 %v8, %v1781
  %v1788 = vmin.f32 %v9, %v1785
  %v1789 = vmax.f32 %v8, %v1781
  %v1790 = vmax.f32 %v9, %v1785
  %v1793 = vrot.slane %v1789, 7
  %v1794 = vrot.slane %v1790, 7
  %v1797 = vsub.f32 %v1787, %v1793
  %v1798 = vsub.f32 %v1788, %v1794
  %v1799 = vadd.f32 %v1797, 1.0
  %v1800 = vadd.f32 %v1798, 1.0
  %v1801 = vmax.f32 %v1799, 0.0
  %v1802 = vmax.f32 %v1800, 0.0
  %1803 = vset.pattern.permute.xlu0 29
  %1804 = vperm.xlu0 %1803, %v18
  %v1805 = vpop.permute.xlu0 %1804
  %1807 = vset.pattern.permute.xlu0 29
  %1808 = vperm.xlu0 %1807, %v19
  %v1809 = vpop.permute.xlu0 %1808
  %v1811 = vadd.f32 %v18, %v1805
  %v1812 = vadd.f32 %v19, %v1809
  %v1813 = vsub.f32 %v1811, %v1801
  %v1814 = vsub.f32 %v1812, %v1802
  %v1815 = vmul.f32 %v1813, 0.7
  %v1816 = vmul.f32 %v1814, 0.7
  %vm1817 = vcmp.gt.f32.partialorder %v1801, %v1815
  %vm1818 = vcmp.gt.f32.partialorder %v1802, %v1816
  %vm1819 = vcmp.gt.s32.totalorder %v21, 29
  %vm1820 = vmand %vm1817, %vm1819
  %vm1821 = vmand %vm1818, %vm1819
  %v1822 = vsel %vm1820, 1.0, 0.0
  %v1823 = vsel %vm1821, 1.0, 0.0
  %v1824 = vsub.f32 1.0, %v1777
  %v1825 = vsub.f32 1.0, %v1778
  %1827 = vset.pattern.permute.xlu0 29
  %1828 = vperm.xlu0 %1827, %v1824
  %v1829 = vpop.permute.xlu0 %1828
  %1832 = vset.pattern.permute.xlu0 29
  %1833 = vperm.xlu0 %1832, %v1825
  %v1834 = vpop.permute.xlu0 %1833
  %v1836 = vmul.f32 %v1822, %v1829
  %v1837 = vmul.f32 %v1823, %v1834
  %v1838 = vmax.f32 %v1777, %v1836
  %v1839 = vmax.f32 %v1778, %v1837
  %1840 = vset.pattern.permute.xlu0 30
  %1841 = vperm.xlu0 %1840, %v8
  %v1842 = vpop.permute.xlu0 %1841
  %1844 = vset.pattern.permute.xlu0 30
  %1845 = vperm.xlu0 %1844, %v9
  %v1846 = vpop.permute.xlu0 %1845
  %v1848 = vmin.f32 %v8, %v1842
  %v1849 = vmin.f32 %v9, %v1846
  %v1850 = vmax.f32 %v8, %v1842
  %v1851 = vmax.f32 %v9, %v1846
  %v1854 = vrot.slane %v1850, 7
  %v1855 = vrot.slane %v1851, 7
  %v1858 = vsub.f32 %v1848, %v1854
  %v1859 = vsub.f32 %v1849, %v1855
  %v1860 = vadd.f32 %v1858, 1.0
  %v1861 = vadd.f32 %v1859, 1.0
  %v1862 = vmax.f32 %v1860, 0.0
  %v1863 = vmax.f32 %v1861, 0.0
  %1864 = vset.pattern.permute.xlu0 30
  %1865 = vperm.xlu0 %1864, %v18
  %v1866 = vpop.permute.xlu0 %1865
  %1868 = vset.pattern.permute.xlu0 30
  %1869 = vperm.xlu0 %1868, %v19
  %v1870 = vpop.permute.xlu0 %1869
  %v1872 = vadd.f32 %v18, %v1866
  %v1873 = vadd.f32 %v19, %v1870
  %v1874 = vsub.f32 %v1872, %v1862
  %v1875 = vsub.f32 %v1873, %v1863
  %v1876 = vmul.f32 %v1874, 0.7
  %v1877 = vmul.f32 %v1875, 0.7
  %vm1878 = vcmp.gt.f32.partialorder %v1862, %v1876
  %vm1879 = vcmp.gt.f32.partialorder %v1863, %v1877
  %vm1880 = vcmp.gt.s32.totalorder %v21, 30
  %vm1881 = vmand %vm1878, %vm1880
  %vm1882 = vmand %vm1879, %vm1880
  %v1883 = vsel %vm1881, 1.0, 0.0
  %v1884 = vsel %vm1882, 1.0, 0.0
  %v1885 = vsub.f32 1.0, %v1838
  %v1886 = vsub.f32 1.0, %v1839
  %1888 = vset.pattern.permute.xlu0 30
  %1889 = vperm.xlu0 %1888, %v1885
  %v1890 = vpop.permute.xlu0 %1889
  %1893 = vset.pattern.permute.xlu0 30
  %1894 = vperm.xlu0 %1893, %v1886
  %v1895 = vpop.permute.xlu0 %1894
  %v1897 = vmul.f32 %v1883, %v1890
  %v1898 = vmul.f32 %v1884, %v1895
  %v1899 = vmax.f32 %v1838, %v1897
  %v1900 = vmax.f32 %v1839, %v1898
  %1901 = vset.pattern.permute.xlu0 31
  %1902 = vperm.xlu0 %1901, %v8
  %v1903 = vpop.permute.xlu0 %1902
  %1905 = vset.pattern.permute.xlu0 31
  %1906 = vperm.xlu0 %1905, %v9
  %v1907 = vpop.permute.xlu0 %1906
  %v1909 = vmin.f32 %v8, %v1903
  %v1910 = vmin.f32 %v9, %v1907
  %v1911 = vmax.f32 %v8, %v1903
  %v1912 = vmax.f32 %v9, %v1907
  %v1915 = vrot.slane %v1911, 7
  %v1916 = vrot.slane %v1912, 7
  %v1919 = vsub.f32 %v1909, %v1915
  %v1920 = vsub.f32 %v1910, %v1916
  %v1921 = vadd.f32 %v1919, 1.0
  %v1922 = vadd.f32 %v1920, 1.0
  %v1923 = vmax.f32 %v1921, 0.0
  %v1924 = vmax.f32 %v1922, 0.0
  %1925 = vset.pattern.permute.xlu0 31
  %1926 = vperm.xlu0 %1925, %v18
  %v1927 = vpop.permute.xlu0 %1926
  %1929 = vset.pattern.permute.xlu0 31
  %1930 = vperm.xlu0 %1929, %v19
  %v1931 = vpop.permute.xlu0 %1930
  %v1933 = vadd.f32 %v18, %v1927
  %v1934 = vadd.f32 %v19, %v1931
  %v1935 = vsub.f32 %v1933, %v1923
  %v1936 = vsub.f32 %v1934, %v1924
  %v1937 = vmul.f32 %v1935, 0.7
  %v1938 = vmul.f32 %v1936, 0.7
  %vm1939 = vcmp.gt.f32.partialorder %v1923, %v1937
  %vm1940 = vcmp.gt.f32.partialorder %v1924, %v1938
  %vm1941 = vcmp.gt.s32.totalorder %v21, 31
  %vm1942 = vmand %vm1939, %vm1941
  %vm1943 = vmand %vm1940, %vm1941
  %v1944 = vsel %vm1942, 1.0, 0.0
  %v1945 = vsel %vm1943, 1.0, 0.0
  %v1946 = vsub.f32 1.0, %v1899
  %v1947 = vsub.f32 1.0, %v1900
  %1949 = vset.pattern.permute.xlu0 31
  %1950 = vperm.xlu0 %1949, %v1946
  %v1951 = vpop.permute.xlu0 %1950
  %1954 = vset.pattern.permute.xlu0 31
  %1955 = vperm.xlu0 %1954, %v1947
  %v1956 = vpop.permute.xlu0 %1955
  %v1958 = vmul.f32 %v1944, %v1951
  %v1959 = vmul.f32 %v1945, %v1956
  %v1960 = vmax.f32 %v1899, %v1958
  %v1961 = vmax.f32 %v1900, %v1959
  %vm1962 = vcmp.lt.s32.totalorder %v21, 32
  %v1963 = vsel %vm1962, 1.0, 0.0
  %v1964 = vsub.f32 1.0, %v1960
  %v1965 = vsub.f32 1.0, %v1961
  %v1966 = vmul.f32 %v1964, %v1963
  %v1967 = vmul.f32 %v1965, %v1963
  %v1968 = vlaneseq
  %v1969 = vshrl.u32 %v1968, 7
  %v1970 = vadd.s32 %v1969, 8
  %v1971 = vadd.s32 %v1969, 16
  %v1972 = vadd.s32 %v1969, 24
  %v1973 = vadd.s32 %v1969, 32
  %v1974 = vadd.s32 %v1969, 40
  %v1975 = vadd.s32 %v1969, 48
  %v1976 = vadd.s32 %v1969, 56
  %v1977 = vadd.s32 %v1969, 64
  %v1978 = vadd.s32 %v1969, 72
  %v1979 = vadd.s32 %v1969, 80
  %v1980 = vadd.s32 %v1969, 88
  %v1981 = vadd.s32 %v1969, 96
  %v1982 = vadd.s32 %v1969, 104
  %v1983 = vadd.s32 %v1969, 112
  %v1984 = vadd.s32 %v1969, 120
  %vm1985 = vcmp.le.s32.totalorder %v1969, %v21
  %vm1986 = vcmp.le.s32.totalorder %v1970, %v21
  %vm1987 = vcmp.le.s32.totalorder %v1971, %v21
  %vm1988 = vcmp.le.s32.totalorder %v1972, %v21
  %vm1989 = vcmp.le.s32.totalorder %v1973, %v21
  %vm1990 = vcmp.le.s32.totalorder %v1974, %v21
  %vm1991 = vcmp.le.s32.totalorder %v1975, %v21
  %vm1992 = vcmp.le.s32.totalorder %v1976, %v21
  %vm1993 = vcmp.le.s32.totalorder %v1977, %v21
  %vm1994 = vcmp.le.s32.totalorder %v1978, %v21
  %vm1995 = vcmp.le.s32.totalorder %v1979, %v21
  %vm1996 = vcmp.le.s32.totalorder %v1980, %v21
  %vm1997 = vcmp.le.s32.totalorder %v1981, %v21
  %vm1998 = vcmp.le.s32.totalorder %v1982, %v21
  %vm1999 = vcmp.le.s32.totalorder %v1983, %v21
  %vm2000 = vcmp.le.s32.totalorder %v1984, %v21
  %v2001 = vsel %vm1985, 1.0, 0.0
  %v2002 = vsel %vm1986, 1.0, 0.0
  %v2003 = vsel %vm1987, 1.0, 0.0
  %v2004 = vsel %vm1988, 1.0, 0.0
  %v2005 = vsel %vm1989, 1.0, 0.0
  %v2006 = vsel %vm1990, 1.0, 0.0
  %v2007 = vsel %vm1991, 1.0, 0.0
  %v2008 = vsel %vm1992, 1.0, 0.0
  %v2009 = vsel %vm1993, 1.0, 0.0
  %v2010 = vsel %vm1994, 1.0, 0.0
  %v2011 = vsel %vm1995, 1.0, 0.0
  %v2012 = vsel %vm1996, 1.0, 0.0
  %v2013 = vsel %vm1997, 1.0, 0.0
  %v2014 = vsel %vm1998, 1.0, 0.0
  %v2015 = vsel %vm1999, 1.0, 0.0
  %v2016 = vsel %vm2000, 1.0, 0.0
  %v2019 = vrot.slane %v1966, 1
  %vm2020 = vcmask 1041409
  %v2021 = vsel %vm2020, %v1967, %v2019
  %2023 = vmatprep.subr.mxu0 0.0
  %2024 = vmatpush1.msra.mxu0 %v2016
  %2025 = vmatprep.subr.mxu0 0.0
  %2026 = vmatpush1.msra.mxu0 %v2015
  %2027 = vmatprep.subr.mxu0 0.0
  %2028 = vmatpush1.msra.mxu0 %v2014
  %2029 = vmatprep.subr.mxu0 0.0
  %2030 = vmatpush1.msra.mxu0 %v2013
  %2031 = vmatprep.subr.mxu0 0.0
  %2032 = vmatpush1.msra.mxu0 %v2012
  %2033 = vmatprep.subr.mxu0 0.0
  %2034 = vmatpush1.msra.mxu0 %v2011
  %2035 = vmatprep.subr.mxu0 0.0
  %2036 = vmatpush1.msra.mxu0 %v2010
  %2037 = vmatprep.subr.mxu0 0.0
  %2038 = vmatpush1.msra.mxu0 %v2009
  %2039 = vmatprep.subr.mxu0 0.0
  %2040 = vmatpush1.msra.mxu0 %v2008
  %2041 = vmatprep.subr.mxu0 0.0
  %2042 = vmatpush1.msra.mxu0 %v2007
  %2043 = vmatprep.subr.mxu0 0.0
  %2044 = vmatpush1.msra.mxu0 %v2006
  %2045 = vmatprep.subr.mxu0 0.0
  %2046 = vmatpush1.msra.mxu0 %v2005
  %2047 = vmatprep.subr.mxu0 0.0
  %2048 = vmatpush1.msra.mxu0 %v2004
  %2049 = vmatprep.subr.mxu0 0.0
  %2050 = vmatpush1.msra.mxu0 %v2003
  %2051 = vmatprep.subr.mxu0 0.0
  %2052 = vmatpush1.msra.mxu0 %v2002
  %2053 = vmatprep.subr.mxu0 0.0
  %2054 = vmatpush1.msra.mxu0 %v2001
  %2055 = vmatprep.subr.mxu0 0.0
  %2056 = vmatpush2.msra.mxu0 0.0
  %2057 = vmatprep.subr.mxu0 0.0
  %2058 = vmatpush2.msra.mxu0 0.0
  %2059 = vmatprep.subr.mxu0 0.0
  %2060 = vmatpush2.msra.mxu0 0.0
  %2061 = vmatprep.subr.mxu0 0.0
  %2062 = vmatpush2.msra.mxu0 0.0
  %2063 = vmatprep.subr.mxu0 0.0
  %2064 = vmatpush2.msra.mxu0 0.0
  %2065 = vmatprep.subr.mxu0 0.0
  %2066 = vmatpush2.msra.mxu0 0.0
  %2067 = vmatprep.subr.mxu0 0.0
  %2068 = vmatpush2.msra.mxu0 0.0
  %2069 = vmatprep.subr.mxu0 0.0
  %2070 = vmatpush2.msra.mxu0 0.0
  %2071 = vmatprep.subr.mxu0 0.0
  %2072 = vmatpush2.msra.mxu0 0.0
  %2073 = vmatprep.subr.mxu0 0.0
  %2074 = vmatpush2.msra.mxu0 0.0
  %2075 = vmatprep.subr.mxu0 0.0
  %2076 = vmatpush2.msra.mxu0 0.0
  %2077 = vmatprep.subr.mxu0 0.0
  %2078 = vmatpush2.msra.mxu0 0.0
  %2079 = vmatprep.subr.mxu0 0.0
  %2080 = vmatpush2.msra.mxu0 0.0
  %2081 = vmatprep.subr.mxu0 0.0
  %2082 = vmatpush2.msra.mxu0 0.0
  %2083 = vmatprep.subr.mxu0 0.0
  %2084 = vmatpush2.msra.mxu0 0.0
  %2085 = vmatprep.subr.mxu0 0.0
  %2086 = vmatpush2.msra.mxu0 0.0
  %2087 = vmatprep.mubr.f32.mxu0 0.0
  %2088 = vmatmul.mubr.f32.gmra.mxu0 %v2021
  %v2089 = vpop.f32.mrf.mxu0
  %v2090 = vadd.f32 0.0, %v2089
  %v2091 = vpop.f32.mrf.mxu0
  %2092 = vdwg.mxu0
  %v2093 = vsub.f32 %v2090, 1.0
  %vm2094 = vcmp.lt.f32.partialorder %v2093, 16.0
  %v2095 = vsel %vm2094, 1.0, 0.0
  %v2097 = vrot.slane %v2095, 7
  %v2100 = vmul.f32 %v1966, %v2097
  %v2101 = vmul.f32 %v1967, %v2095
  %v2102 = vcvt.s32.f32 %v1969
  %v2103 = vcvt.s32.f32 %v1970
  %v2104 = vcvt.s32.f32 %v1971
  %v2105 = vcvt.s32.f32 %v1972
  %v2106 = vcvt.s32.f32 %v1973
  %v2107 = vcvt.s32.f32 %v1974
  %v2108 = vcvt.s32.f32 %v1975
  %v2109 = vcvt.s32.f32 %v1976
  %v2110 = vcvt.s32.f32 %v1977
  %v2111 = vcvt.s32.f32 %v1978
  %v2112 = vcvt.s32.f32 %v1979
  %v2113 = vcvt.s32.f32 %v1980
  %v2114 = vcvt.s32.f32 %v1981
  %v2115 = vcvt.s32.f32 %v1982
  %v2116 = vcvt.s32.f32 %v1983
  %v2117 = vcvt.s32.f32 %v1984
  %v2120 = vunpack.c.l.s4 1966171168
  %v2121 = vunpack.c.0.s8 %v2120
  %v2122 = vlaneseq
  %v2123 = vshrl.u32 %v2122, 7
  %v2124 = vsub.s32 %v2121, %v2123
  %v2125 = vrot.slane %v2093, %v2124
  %v2126 = vcombine.high %v2125, %v2125
  %v2128 = vunpack.c.l.s4 1966171168
  %v2129 = vunpack.c.0.s8 %v2128
  %v2130 = vlaneseq
  %v2131 = vshrl.u32 %v2130, 7
  %v2132 = vsub.s32 %v2129, %v2131
  %v2133 = vrot.slane %v2125, %v2132
  %v2135 = vunpack.c.l.s4 1966171168
  %v2136 = vunpack.c.0.s8 %v2135
  %v2137 = vlaneseq
  %v2138 = vshrl.u32 %v2137, 7
  %v2139 = vsub.s32 %v2136, %v2138
  %v2140 = vrot.slane %v2126, %v2139
  %v2141 = vlaneseq
  %v2142 = vshrl.u32 %v2141, 7
  %v2143 = vsub.s32 0, %v2142
  %v2144 = vrot.slane %v2133, %v2143
  %v2145 = vlaneseq
  %v2146 = vshrl.u32 %v2145, 7
  %v2147 = vsub.s32 0, %v2146
  %v2148 = vrot.slane %v2140, %v2147
  %vm2151 = vcmp.eq.f32.partialorder %v2144, %v2102
  %vm2152 = vcmp.eq.f32.partialorder %v2144, %v2103
  %vm2153 = vcmp.eq.f32.partialorder %v2144, %v2104
  %vm2154 = vcmp.eq.f32.partialorder %v2144, %v2105
  %vm2155 = vcmp.eq.f32.partialorder %v2144, %v2106
  %vm2156 = vcmp.eq.f32.partialorder %v2144, %v2107
  %vm2157 = vcmp.eq.f32.partialorder %v2144, %v2108
  %vm2158 = vcmp.eq.f32.partialorder %v2144, %v2109
  %vm2159 = vcmp.eq.f32.partialorder %v2144, %v2110
  %vm2160 = vcmp.eq.f32.partialorder %v2144, %v2111
  %vm2161 = vcmp.eq.f32.partialorder %v2144, %v2112
  %vm2162 = vcmp.eq.f32.partialorder %v2144, %v2113
  %vm2163 = vcmp.eq.f32.partialorder %v2144, %v2114
  %vm2164 = vcmp.eq.f32.partialorder %v2144, %v2115
  %vm2165 = vcmp.eq.f32.partialorder %v2144, %v2116
  %vm2166 = vcmp.eq.f32.partialorder %v2144, %v2117
  %vm2167 = vcmp.eq.f32.partialorder %v2148, %v2102
  %vm2168 = vcmp.eq.f32.partialorder %v2148, %v2103
  %vm2169 = vcmp.eq.f32.partialorder %v2148, %v2104
  %vm2170 = vcmp.eq.f32.partialorder %v2148, %v2105
  %vm2171 = vcmp.eq.f32.partialorder %v2148, %v2106
  %vm2172 = vcmp.eq.f32.partialorder %v2148, %v2107
  %vm2173 = vcmp.eq.f32.partialorder %v2148, %v2108
  %vm2174 = vcmp.eq.f32.partialorder %v2148, %v2109
  %vm2175 = vcmp.eq.f32.partialorder %v2148, %v2110
  %vm2176 = vcmp.eq.f32.partialorder %v2148, %v2111
  %vm2177 = vcmp.eq.f32.partialorder %v2148, %v2112
  %vm2178 = vcmp.eq.f32.partialorder %v2148, %v2113
  %vm2179 = vcmp.eq.f32.partialorder %v2148, %v2114
  %vm2180 = vcmp.eq.f32.partialorder %v2148, %v2115
  %vm2181 = vcmp.eq.f32.partialorder %v2148, %v2116
  %vm2182 = vcmp.eq.f32.partialorder %v2148, %v2117
  %vm2183 = vcmp.gt.f32.partialorder %v2100, 0.5
  %vm2184 = vcmp.gt.f32.partialorder %v2101, 0.5
  %v2185 = vsel %vm2183, 1, 0
  %v2186 = vsel %vm2184, 1, 0
  %v2187 = vlaneseq
  %v2188 = vshrl.u32 %v2187, 7
  %v2189 = vsub.s32 1, %v2188
  %v2190 = vrot.slane %v2185, %v2189
  %v2191 = vlaneseq
  %v2192 = vshrl.u32 %v2191, 7
  %v2193 = vsub.s32 1, %v2192
  %v2194 = vrot.slane %v2186, %v2193
  %vm2195 = vcmp.eq.s32.totalorder %v2190, 1
  %vm2196 = vcmp.eq.s32.totalorder %v2194, 1
  %vm2197 = vmand %vm2151, %vm2195
  %vm2198 = vmand %vm2152, %vm2195
  %vm2199 = vmand %vm2153, %vm2195
  %vm2200 = vmand %vm2154, %vm2195
  %vm2201 = vmand %vm2155, %vm2195
  %vm2202 = vmand %vm2156, %vm2195
  %vm2203 = vmand %vm2157, %vm2195
  %vm2204 = vmand %vm2158, %vm2195
  %vm2205 = vmand %vm2159, %vm2195
  %vm2206 = vmand %vm2160, %vm2195
  %vm2207 = vmand %vm2161, %vm2195
  %vm2208 = vmand %vm2162, %vm2195
  %vm2209 = vmand %vm2163, %vm2195
  %vm2210 = vmand %vm2164, %vm2195
  %vm2211 = vmand %vm2165, %vm2195
  %vm2212 = vmand %vm2166, %vm2195
  %vm2213 = vmand %vm2167, %vm2196
  %vm2214 = vmand %vm2168, %vm2196
  %vm2215 = vmand %vm2169, %vm2196
  %vm2216 = vmand %vm2170, %vm2196
  %vm2217 = vmand %vm2171, %vm2196
  %vm2218 = vmand %vm2172, %vm2196
  %vm2219 = vmand %vm2173, %vm2196
  %vm2220 = vmand %vm2174, %vm2196
  %vm2221 = vmand %vm2175, %vm2196
  %vm2222 = vmand %vm2176, %vm2196
  %vm2223 = vmand %vm2177, %vm2196
  %vm2224 = vmand %vm2178, %vm2196
  %vm2225 = vmand %vm2179, %vm2196
  %vm2226 = vmand %vm2180, %vm2196
  %vm2227 = vmand %vm2181, %vm2196
  %vm2228 = vmand %vm2182, %vm2196
  %v2229 = vsel %vm2197, 1.0, 0.0
  %v2230 = vsel %vm2198, 1.0, 0.0
  %v2231 = vsel %vm2199, 1.0, 0.0
  %v2232 = vsel %vm2200, 1.0, 0.0
  %v2233 = vsel %vm2201, 1.0, 0.0
  %v2234 = vsel %vm2202, 1.0, 0.0
  %v2235 = vsel %vm2203, 1.0, 0.0
  %v2236 = vsel %vm2204, 1.0, 0.0
  %v2237 = vsel %vm2205, 1.0, 0.0
  %v2238 = vsel %vm2206, 1.0, 0.0
  %v2239 = vsel %vm2207, 1.0, 0.0
  %v2240 = vsel %vm2208, 1.0, 0.0
  %v2241 = vsel %vm2209, 1.0, 0.0
  %v2242 = vsel %vm2210, 1.0, 0.0
  %v2243 = vsel %vm2211, 1.0, 0.0
  %v2244 = vsel %vm2212, 1.0, 0.0
  %v2245 = vsel %vm2213, 1.0, 0.0
  %v2246 = vsel %vm2214, 1.0, 0.0
  %v2247 = vsel %vm2215, 1.0, 0.0
  %v2248 = vsel %vm2216, 1.0, 0.0
  %v2249 = vsel %vm2217, 1.0, 0.0
  %v2250 = vsel %vm2218, 1.0, 0.0
  %v2251 = vsel %vm2219, 1.0, 0.0
  %v2252 = vsel %vm2220, 1.0, 0.0
  %v2253 = vsel %vm2221, 1.0, 0.0
  %v2254 = vsel %vm2222, 1.0, 0.0
  %v2255 = vsel %vm2223, 1.0, 0.0
  %v2256 = vsel %vm2224, 1.0, 0.0
  %v2257 = vsel %vm2225, 1.0, 0.0
  %v2258 = vsel %vm2226, 1.0, 0.0
  %v2259 = vsel %vm2227, 1.0, 0.0
  %v2260 = vsel %vm2228, 1.0, 0.0
  %v2261 = vlaneseq
  %v2262 = vshrl.u32 %v2261, 7
  %v2263 = vsub.s32 0, %v2262
  %v2264 = vrot.slane %v8, %v2263
  %v2265 = vlaneseq
  %v2266 = vshrl.u32 %v2265, 7
  %v2267 = vsub.s32 0, %v2266
  %v2268 = vrot.slane %v9, %v2267
  %v2269 = vmul.f32 %v2229, %v2264
  %v2270 = vmul.f32 %v2230, %v2264
  %v2271 = vmul.f32 %v2231, %v2264
  %v2272 = vmul.f32 %v2232, %v2264
  %v2273 = vmul.f32 %v2233, %v2264
  %v2274 = vmul.f32 %v2234, %v2264
  %v2275 = vmul.f32 %v2235, %v2264
  %v2276 = vmul.f32 %v2236, %v2264
  %v2277 = vmul.f32 %v2237, %v2264
  %v2278 = vmul.f32 %v2238, %v2264
  %v2279 = vmul.f32 %v2239, %v2264
  %v2280 = vmul.f32 %v2240, %v2264
  %v2281 = vmul.f32 %v2241, %v2264
  %v2282 = vmul.f32 %v2242, %v2264
  %v2283 = vmul.f32 %v2243, %v2264
  %v2284 = vmul.f32 %v2244, %v2264
  %v2285 = vmul.f32 %v2245, %v2268
  %v2286 = vmul.f32 %v2246, %v2268
  %v2287 = vmul.f32 %v2247, %v2268
  %v2288 = vmul.f32 %v2248, %v2268
  %v2289 = vmul.f32 %v2249, %v2268
  %v2290 = vmul.f32 %v2250, %v2268
  %v2291 = vmul.f32 %v2251, %v2268
  %v2292 = vmul.f32 %v2252, %v2268
  %v2293 = vmul.f32 %v2253, %v2268
  %v2294 = vmul.f32 %v2254, %v2268
  %v2295 = vmul.f32 %v2255, %v2268
  %v2296 = vmul.f32 %v2256, %v2268
  %v2297 = vmul.f32 %v2257, %v2268
  %v2298 = vmul.f32 %v2258, %v2268
  %v2299 = vmul.f32 %v2259, %v2268
  %v2300 = vmul.f32 %v2260, %v2268
  %2301 = vadd.xlane.f32.xlu0 %v2269
  %v2302 = vpop.xlane.xlu0 %2301
  %2303 = vadd.xlane.f32.xlu0 %v2270
  %v2304 = vpop.xlane.xlu0 %2303
  %2305 = vadd.xlane.f32.xlu0 %v2271
  %v2306 = vpop.xlane.xlu0 %2305
  %2307 = vadd.xlane.f32.xlu0 %v2272
  %v2308 = vpop.xlane.xlu0 %2307
  %2309 = vadd.xlane.f32.xlu0 %v2273
  %v2310 = vpop.xlane.xlu0 %2309
  %2311 = vadd.xlane.f32.xlu0 %v2274
  %v2312 = vpop.xlane.xlu0 %2311
  %2313 = vadd.xlane.f32.xlu0 %v2275
  %v2314 = vpop.xlane.xlu0 %2313
  %2315 = vadd.xlane.f32.xlu0 %v2276
  %v2316 = vpop.xlane.xlu0 %2315
  %2317 = vadd.xlane.f32.xlu0 %v2277
  %v2318 = vpop.xlane.xlu0 %2317
  %2319 = vadd.xlane.f32.xlu0 %v2278
  %v2320 = vpop.xlane.xlu0 %2319
  %2321 = vadd.xlane.f32.xlu0 %v2279
  %v2322 = vpop.xlane.xlu0 %2321
  %2323 = vadd.xlane.f32.xlu0 %v2280
  %v2324 = vpop.xlane.xlu0 %2323
  %2325 = vadd.xlane.f32.xlu0 %v2281
  %v2326 = vpop.xlane.xlu0 %2325
  %2327 = vadd.xlane.f32.xlu0 %v2282
  %v2328 = vpop.xlane.xlu0 %2327
  %2329 = vadd.xlane.f32.xlu0 %v2283
  %v2330 = vpop.xlane.xlu0 %2329
  %2331 = vadd.xlane.f32.xlu0 %v2284
  %v2332 = vpop.xlane.xlu0 %2331
  %2333 = vadd.xlane.f32.xlu0 %v2285
  %v2334 = vpop.xlane.xlu0 %2333
  %2335 = vadd.xlane.f32.xlu0 %v2286
  %v2336 = vpop.xlane.xlu0 %2335
  %2337 = vadd.xlane.f32.xlu0 %v2287
  %v2338 = vpop.xlane.xlu0 %2337
  %2339 = vadd.xlane.f32.xlu0 %v2288
  %v2340 = vpop.xlane.xlu0 %2339
  %2341 = vadd.xlane.f32.xlu0 %v2289
  %v2342 = vpop.xlane.xlu0 %2341
  %2343 = vadd.xlane.f32.xlu0 %v2290
  %v2344 = vpop.xlane.xlu0 %2343
  %2345 = vadd.xlane.f32.xlu0 %v2291
  %v2346 = vpop.xlane.xlu0 %2345
  %2347 = vadd.xlane.f32.xlu0 %v2292
  %v2348 = vpop.xlane.xlu0 %2347
  %2349 = vadd.xlane.f32.xlu0 %v2293
  %v2350 = vpop.xlane.xlu0 %2349
  %2351 = vadd.xlane.f32.xlu0 %v2294
  %v2352 = vpop.xlane.xlu0 %2351
  %2353 = vadd.xlane.f32.xlu0 %v2295
  %v2354 = vpop.xlane.xlu0 %2353
  %2355 = vadd.xlane.f32.xlu0 %v2296
  %v2356 = vpop.xlane.xlu0 %2355
  %2357 = vadd.xlane.f32.xlu0 %v2297
  %v2358 = vpop.xlane.xlu0 %2357
  %2359 = vadd.xlane.f32.xlu0 %v2298
  %v2360 = vpop.xlane.xlu0 %2359
  %2361 = vadd.xlane.f32.xlu0 %v2299
  %v2362 = vpop.xlane.xlu0 %2361
  %2363 = vadd.xlane.f32.xlu0 %v2300
  %v2364 = vpop.xlane.xlu0 %2363
  %v2365 = vlaneseq
  %v2366 = vshrl.u32 %v2365, 7
  %v2367 = vsub.s32 1, %v2366
  %v2368 = vrot.slane %v8, %v2367
  %v2369 = vlaneseq
  %v2370 = vshrl.u32 %v2369, 7
  %v2371 = vsub.s32 1, %v2370
  %v2372 = vrot.slane %v9, %v2371
  %v2373 = vmul.f32 %v2229, %v2368
  %v2374 = vmul.f32 %v2230, %v2368
  %v2375 = vmul.f32 %v2231, %v2368
  %v2376 = vmul.f32 %v2232, %v2368
  %v2377 = vmul.f32 %v2233, %v2368
  %v2378 = vmul.f32 %v2234, %v2368
  %v2379 = vmul.f32 %v2235, %v2368
  %v2380 = vmul.f32 %v2236, %v2368
  %v2381 = vmul.f32 %v2237, %v2368
  %v2382 = vmul.f32 %v2238, %v2368
  %v2383 = vmul.f32 %v2239, %v2368
  %v2384 = vmul.f32 %v2240, %v2368
  %v2385 = vmul.f32 %v2241, %v2368
  %v2386 = vmul.f32 %v2242, %v2368
  %v2387 = vmul.f32 %v2243, %v2368
  %v2388 = vmul.f32 %v2244, %v2368
  %v2389 = vmul.f32 %v2245, %v2372
  %v2390 = vmul.f32 %v2246, %v2372
  %v2391 = vmul.f32 %v2247, %v2372
  %v2392 = vmul.f32 %v2248, %v2372
  %v2393 = vmul.f32 %v2249, %v2372
  %v2394 = vmul.f32 %v2250, %v2372
  %v2395 = vmul.f32 %v2251, %v2372
  %v2396 = vmul.f32 %v2252, %v2372
  %v2397 = vmul.f32 %v2253, %v2372
  %v2398 = vmul.f32 %v2254, %v2372
  %v2399 = vmul.f32 %v2255, %v2372
  %v2400 = vmul.f32 %v2256, %v2372
  %v2401 = vmul.f32 %v2257, %v2372
  %v2402 = vmul.f32 %v2258, %v2372
  %v2403 = vmul.f32 %v2259, %v2372
  %v2404 = vmul.f32 %v2260, %v2372
  %2405 = vadd.xlane.f32.xlu0 %v2373
  %v2406 = vpop.xlane.xlu0 %2405
  %2407 = vadd.xlane.f32.xlu0 %v2374
  %v2408 = vpop.xlane.xlu0 %2407
  %2409 = vadd.xlane.f32.xlu0 %v2375
  %v2410 = vpop.xlane.xlu0 %2409
  %2411 = vadd.xlane.f32.xlu0 %v2376
  %v2412 = vpop.xlane.xlu0 %2411
  %2413 = vadd.xlane.f32.xlu0 %v2377
  %v2414 = vpop.xlane.xlu0 %2413
  %2415 = vadd.xlane.f32.xlu0 %v2378
  %v2416 = vpop.xlane.xlu0 %2415
  %2417 = vadd.xlane.f32.xlu0 %v2379
  %v2418 = vpop.xlane.xlu0 %2417
  %2419 = vadd.xlane.f32.xlu0 %v2380
  %v2420 = vpop.xlane.xlu0 %2419
  %2421 = vadd.xlane.f32.xlu0 %v2381
  %v2422 = vpop.xlane.xlu0 %2421
  %2423 = vadd.xlane.f32.xlu0 %v2382
  %v2424 = vpop.xlane.xlu0 %2423
  %2425 = vadd.xlane.f32.xlu0 %v2383
  %v2426 = vpop.xlane.xlu0 %2425
  %2427 = vadd.xlane.f32.xlu0 %v2384
  %v2428 = vpop.xlane.xlu0 %2427
  %2429 = vadd.xlane.f32.xlu0 %v2385
  %v2430 = vpop.xlane.xlu0 %2429
  %2431 = vadd.xlane.f32.xlu0 %v2386
  %v2432 = vpop.xlane.xlu0 %2431
  %2433 = vadd.xlane.f32.xlu0 %v2387
  %v2434 = vpop.xlane.xlu0 %2433
  %2435 = vadd.xlane.f32.xlu0 %v2388
  %v2436 = vpop.xlane.xlu0 %2435
  %2437 = vadd.xlane.f32.xlu0 %v2389
  %v2438 = vpop.xlane.xlu0 %2437
  %2439 = vadd.xlane.f32.xlu0 %v2390
  %v2440 = vpop.xlane.xlu0 %2439
  %2441 = vadd.xlane.f32.xlu0 %v2391
  %v2442 = vpop.xlane.xlu0 %2441
  %2443 = vadd.xlane.f32.xlu0 %v2392
  %v2444 = vpop.xlane.xlu0 %2443
  %2445 = vadd.xlane.f32.xlu0 %v2393
  %v2446 = vpop.xlane.xlu0 %2445
  %2447 = vadd.xlane.f32.xlu0 %v2394
  %v2448 = vpop.xlane.xlu0 %2447
  %2449 = vadd.xlane.f32.xlu0 %v2395
  %v2450 = vpop.xlane.xlu0 %2449
  %2451 = vadd.xlane.f32.xlu0 %v2396
  %v2452 = vpop.xlane.xlu0 %2451
  %2453 = vadd.xlane.f32.xlu0 %v2397
  %v2454 = vpop.xlane.xlu0 %2453
  %2455 = vadd.xlane.f32.xlu0 %v2398
  %v2456 = vpop.xlane.xlu0 %2455
  %2457 = vadd.xlane.f32.xlu0 %v2399
  %v2458 = vpop.xlane.xlu0 %2457
  %2459 = vadd.xlane.f32.xlu0 %v2400
  %v2460 = vpop.xlane.xlu0 %2459
  %2461 = vadd.xlane.f32.xlu0 %v2401
  %v2462 = vpop.xlane.xlu0 %2461
  %2463 = vadd.xlane.f32.xlu0 %v2402
  %v2464 = vpop.xlane.xlu0 %2463
  %2465 = vadd.xlane.f32.xlu0 %v2403
  %v2466 = vpop.xlane.xlu0 %2465
  %2467 = vadd.xlane.f32.xlu0 %v2404
  %v2468 = vpop.xlane.xlu0 %2467
  %v2470 = vlaneseq
  %v2471 = vshrl.u32 %v2470, 7
  %v2472 = vsub.s32 0, %v2471
  %v2473 = vrot.slane %v2102, %v2472
  %v2474 = vlaneseq
  %v2475 = vshrl.u32 %v2474, 7
  %v2476 = vsub.s32 1, %v2475
  %v2477 = vrot.slane %v2102, %v2476
  %v2512 = vlaneseq
  %v2513 = vshrl.u32 %v2512, 7
  %v2514 = vsub.s32 %v21, %v2513
  %v2515 = vrot.slane %v2302, %v2514
  %v2516 = vadd.s32 %v21, 4294967288
  %v2517 = vlaneseq
  %v2518 = vshrl.u32 %v2517, 7
  %v2519 = vsub.s32 %v2516, %v2518
  %v2520 = vrot.slane %v2304, %v2519
  %vm2521 = vcmask 130112
  %v2522 = vsel %vm2521, %v2520, %v2515
  %v2523 = vadd.s32 %v21, 4294967280
  %v2524 = vlaneseq
  %v2525 = vshrl.u32 %v2524, 7
  %v2526 = vsub.s32 %v2523, %v2525
  %v2527 = vrot.slane %v2306, %v2526
  %vm2528 = vcmask 195712
  %v2529 = vsel %vm2528, %v2527, %v2522
  %v2530 = vadd.s32 %v21, 4294967272
  %v2531 = vlaneseq
  %v2532 = vshrl.u32 %v2531, 7
  %v2533 = vsub.s32 %v2530, %v2532
  %v2534 = vrot.slane %v2308, %v2533
  %vm2535 = vcmask 261312
  %v2536 = vsel %vm2535, %v2534, %v2529
  %v2537 = vadd.s32 %v21, 4294967264
  %v2538 = vlaneseq
  %v2539 = vshrl.u32 %v2538, 7
  %v2540 = vsub.s32 %v2537, %v2539
  %v2541 = vrot.slane %v2310, %v2540
  %vm2542 = vcmask 326912
  %v2543 = vsel %vm2542, %v2541, %v2536
  %v2544 = vadd.s32 %v21, 4294967256
  %v2545 = vlaneseq
  %v2546 = vshrl.u32 %v2545, 7
  %v2547 = vsub.s32 %v2544, %v2546
  %v2548 = vrot.slane %v2312, %v2547
  %vm2549 = vcmask 392512
  %v2550 = vsel %vm2549, %v2548, %v2543
  %v2551 = vadd.s32 %v21, 4294967248
  %v2552 = vlaneseq
  %v2553 = vshrl.u32 %v2552, 7
  %v2554 = vsub.s32 %v2551, %v2553
  %v2555 = vrot.slane %v2314, %v2554
  %vm2556 = vcmask 458112
  %v2557 = vsel %vm2556, %v2555, %v2550
  %v2558 = vadd.s32 %v21, 4294967240
  %v2559 = vlaneseq
  %v2560 = vshrl.u32 %v2559, 7
  %v2561 = vsub.s32 %v2558, %v2560
  %v2562 = vrot.slane %v2316, %v2561
  %vm2563 = vcmask 523712
  %v2564 = vsel %vm2563, %v2562, %v2557
  %v2565 = vadd.s32 %v21, 4294967232
  %v2566 = vlaneseq
  %v2567 = vshrl.u32 %v2566, 7
  %v2568 = vsub.s32 %v2565, %v2567
  %v2569 = vrot.slane %v2318, %v2568
  %vm2570 = vcmask 589312
  %v2571 = vsel %vm2570, %v2569, %v2564
  %v2572 = vadd.s32 %v21, 4294967224
  %v2573 = vlaneseq
  %v2574 = vshrl.u32 %v2573, 7
  %v2575 = vsub.s32 %v2572, %v2574
  %v2576 = vrot.slane %v2320, %v2575
  %vm2577 = vcmask 654912
  %v2578 = vsel %vm2577, %v2576, %v2571
  %v2579 = vadd.s32 %v21, 4294967216
  %v2580 = vlaneseq
  %v2581 = vshrl.u32 %v2580, 7
  %v2582 = vsub.s32 %v2579, %v2581
  %v2583 = vrot.slane %v2322, %v2582
  %vm2584 = vcmask 720512
  %v2585 = vsel %vm2584, %v2583, %v2578
  %v2586 = vadd.s32 %v21, 4294967208
  %v2587 = vlaneseq
  %v2588 = vshrl.u32 %v2587, 7
  %v2589 = vsub.s32 %v2586, %v2588
  %v2590 = vrot.slane %v2324, %v2589
  %vm2591 = vcmask 786112
  %v2592 = vsel %vm2591, %v2590, %v2585
  %v2593 = vadd.s32 %v21, 4294967200
  %v2594 = vlaneseq
  %v2595 = vshrl.u32 %v2594, 7
  %v2596 = vsub.s32 %v2593, %v2595
  %v2597 = vrot.slane %v2326, %v2596
  %vm2598 = vcmask 851712
  %v2599 = vsel %vm2598, %v2597, %v2592
  %v2600 = vadd.s32 %v21, 4294967192
  %v2601 = vlaneseq
  %v2602 = vshrl.u32 %v2601, 7
  %v2603 = vsub.s32 %v2600, %v2602
  %v2604 = vrot.slane %v2328, %v2603
  %vm2605 = vcmask 917312
  %v2606 = vsel %vm2605, %v2604, %v2599
  %v2607 = vadd.s32 %v21, 4294967184
  %v2608 = vlaneseq
  %v2609 = vshrl.u32 %v2608, 7
  %v2610 = vsub.s32 %v2607, %v2609
  %v2611 = vrot.slane %v2330, %v2610
  %vm2612 = vcmask 982912
  %v2613 = vsel %vm2612, %v2611, %v2606
  %v2614 = vadd.s32 %v21, 4294967176
  %v2615 = vlaneseq
  %v2616 = vshrl.u32 %v2615, 7
  %v2617 = vsub.s32 %v2614, %v2616
  %v2618 = vrot.slane %v2332, %v2617
  %vm2619 = vcmask 1048512
  %v2620 = vsel %vm2619, %v2618, %v2613
  %v2621 = vlaneseq
  %v2622 = vshrl.u32 %v2621, 7
  %v2623 = vsub.s32 %v21, %v2622
  %v2624 = vrot.slane %v2334, %v2623
  %v2625 = vlaneseq
  %v2626 = vshrl.u32 %v2625, 7
  %v2627 = vsub.s32 %v2516, %v2626
  %v2628 = vrot.slane %v2336, %v2627
  %v2629 = vsel %vm2521, %v2628, %v2624
  %v2630 = vlaneseq
  %v2631 = vshrl.u32 %v2630, 7
  %v2632 = vsub.s32 %v2523, %v2631
  %v2633 = vrot.slane %v2338, %v2632
  %v2634 = vsel %vm2528, %v2633, %v2629
  %v2635 = vlaneseq
  %v2636 = vshrl.u32 %v2635, 7
  %v2637 = vsub.s32 %v2530, %v2636
  %v2638 = vrot.slane %v2340, %v2637
  %v2639 = vsel %vm2535, %v2638, %v2634
  %v2640 = vlaneseq
  %v2641 = vshrl.u32 %v2640, 7
  %v2642 = vsub.s32 %v2537, %v2641
  %v2643 = vrot.slane %v2342, %v2642
  %v2644 = vsel %vm2542, %v2643, %v2639
  %v2645 = vlaneseq
  %v2646 = vshrl.u32 %v2645, 7
  %v2647 = vsub.s32 %v2544, %v2646
  %v2648 = vrot.slane %v2344, %v2647
  %v2649 = vsel %vm2549, %v2648, %v2644
  %v2650 = vlaneseq
  %v2651 = vshrl.u32 %v2650, 7
  %v2652 = vsub.s32 %v2551, %v2651
  %v2653 = vrot.slane %v2346, %v2652
  %v2654 = vsel %vm2556, %v2653, %v2649
  %v2655 = vlaneseq
  %v2656 = vshrl.u32 %v2655, 7
  %v2657 = vsub.s32 %v2558, %v2656
  %v2658 = vrot.slane %v2348, %v2657
  %v2659 = vsel %vm2563, %v2658, %v2654
  %v2660 = vlaneseq
  %v2661 = vshrl.u32 %v2660, 7
  %v2662 = vsub.s32 %v2565, %v2661
  %v2663 = vrot.slane %v2350, %v2662
  %v2664 = vsel %vm2570, %v2663, %v2659
  %v2665 = vlaneseq
  %v2666 = vshrl.u32 %v2665, 7
  %v2667 = vsub.s32 %v2572, %v2666
  %v2668 = vrot.slane %v2352, %v2667
  %v2669 = vsel %vm2577, %v2668, %v2664
  %v2670 = vlaneseq
  %v2671 = vshrl.u32 %v2670, 7
  %v2672 = vsub.s32 %v2579, %v2671
  %v2673 = vrot.slane %v2354, %v2672
  %v2674 = vsel %vm2584, %v2673, %v2669
  %v2675 = vlaneseq
  %v2676 = vshrl.u32 %v2675, 7
  %v2677 = vsub.s32 %v2586, %v2676
  %v2678 = vrot.slane %v2356, %v2677
  %v2679 = vsel %vm2591, %v2678, %v2674
  %v2680 = vlaneseq
  %v2681 = vshrl.u32 %v2680, 7
  %v2682 = vsub.s32 %v2593, %v2681
  %v2683 = vrot.slane %v2358, %v2682
  %v2684 = vsel %vm2598, %v2683, %v2679
  %v2685 = vlaneseq
  %v2686 = vshrl.u32 %v2685, 7
  %v2687 = vsub.s32 %v2600, %v2686
  %v2688 = vrot.slane %v2360, %v2687
  %v2689 = vsel %vm2605, %v2688, %v2684
  %v2690 = vlaneseq
  %v2691 = vshrl.u32 %v2690, 7
  %v2692 = vsub.s32 %v2607, %v2691
  %v2693 = vrot.slane %v2362, %v2692
  %v2694 = vsel %vm2612, %v2693, %v2689
  %v2695 = vlaneseq
  %v2696 = vshrl.u32 %v2695, 7
  %v2697 = vsub.s32 %v2614, %v2696
  %v2698 = vrot.slane %v2364, %v2697
  %v2699 = vsel %vm2619, %v2698, %v2694
  %v2734 = vlaneseq
  %v2735 = vshrl.u32 %v2734, 7
  %v2736 = vsub.s32 %v21, %v2735
  %v2737 = vrot.slane %v2406, %v2736
  %v2738 = vlaneseq
  %v2739 = vshrl.u32 %v2738, 7
  %v2740 = vsub.s32 %v2516, %v2739
  %v2741 = vrot.slane %v2408, %v2740
  %v2742 = vsel %vm2521, %v2741, %v2737
  %v2743 = vlaneseq
  %v2744 = vshrl.u32 %v2743, 7
  %v2745 = vsub.s32 %v2523, %v2744
  %v2746 = vrot.slane %v2410, %v2745
  %v2747 = vsel %vm2528, %v2746, %v2742
  %v2748 = vlaneseq
  %v2749 = vshrl.u32 %v2748, 7
  %v2750 = vsub.s32 %v2530, %v2749
  %v2751 = vrot.slane %v2412, %v2750
  %v2752 = vsel %vm2535, %v2751, %v2747
  %v2753 = vlaneseq
  %v2754 = vshrl.u32 %v2753, 7
  %v2755 = vsub.s32 %v2537, %v2754
  %v2756 = vrot.slane %v2414, %v2755
  %v2757 = vsel %vm2542, %v2756, %v2752
  %v2758 = vlaneseq
  %v2759 = vshrl.u32 %v2758, 7
  %v2760 = vsub.s32 %v2544, %v2759
  %v2761 = vrot.slane %v2416, %v2760
  %v2762 = vsel %vm2549, %v2761, %v2757
  %v2763 = vlaneseq
  %v2764 = vshrl.u32 %v2763, 7
  %v2765 = vsub.s32 %v2551, %v2764
  %v2766 = vrot.slane %v2418, %v2765
  %v2767 = vsel %vm2556, %v2766, %v2762
  %v2768 = vlaneseq
  %v2769 = vshrl.u32 %v2768, 7
  %v2770 = vsub.s32 %v2558, %v2769
  %v2771 = vrot.slane %v2420, %v2770
  %v2772 = vsel %vm2563, %v2771, %v2767
  %v2773 = vlaneseq
  %v2774 = vshrl.u32 %v2773, 7
  %v2775 = vsub.s32 %v2565, %v2774
  %v2776 = vrot.slane %v2422, %v2775
  %v2777 = vsel %vm2570, %v2776, %v2772
  %v2778 = vlaneseq
  %v2779 = vshrl.u32 %v2778, 7
  %v2780 = vsub.s32 %v2572, %v2779
  %v2781 = vrot.slane %v2424, %v2780
  %v2782 = vsel %vm2577, %v2781, %v2777
  %v2783 = vlaneseq
  %v2784 = vshrl.u32 %v2783, 7
  %v2785 = vsub.s32 %v2579, %v2784
  %v2786 = vrot.slane %v2426, %v2785
  %v2787 = vsel %vm2584, %v2786, %v2782
  %v2788 = vlaneseq
  %v2789 = vshrl.u32 %v2788, 7
  %v2790 = vsub.s32 %v2586, %v2789
  %v2791 = vrot.slane %v2428, %v2790
  %v2792 = vsel %vm2591, %v2791, %v2787
  %v2793 = vlaneseq
  %v2794 = vshrl.u32 %v2793, 7
  %v2795 = vsub.s32 %v2593, %v2794
  %v2796 = vrot.slane %v2430, %v2795
  %v2797 = vsel %vm2598, %v2796, %v2792
  %v2798 = vlaneseq
  %v2799 = vshrl.u32 %v2798, 7
  %v2800 = vsub.s32 %v2600, %v2799
  %v2801 = vrot.slane %v2432, %v2800
  %v2802 = vsel %vm2605, %v2801, %v2797
  %v2803 = vlaneseq
  %v2804 = vshrl.u32 %v2803, 7
  %v2805 = vsub.s32 %v2607, %v2804
  %v2806 = vrot.slane %v2434, %v2805
  %v2807 = vsel %vm2612, %v2806, %v2802
  %v2808 = vlaneseq
  %v2809 = vshrl.u32 %v2808, 7
  %v2810 = vsub.s32 %v2614, %v2809
  %v2811 = vrot.slane %v2436, %v2810
  %v2812 = vsel %vm2619, %v2811, %v2807
  %v2813 = vlaneseq
  %v2814 = vshrl.u32 %v2813, 7
  %v2815 = vsub.s32 %v21, %v2814
  %v2816 = vrot.slane %v2438, %v2815
  %v2817 = vlaneseq
  %v2818 = vshrl.u32 %v2817, 7
  %v2819 = vsub.s32 %v2516, %v2818
  %v2820 = vrot.slane %v2440, %v2819
  %v2821 = vsel %vm2521, %v2820, %v2816
  %v2822 = vlaneseq
  %v2823 = vshrl.u32 %v2822, 7
  %v2824 = vsub.s32 %v2523, %v2823
  %v2825 = vrot.slane %v2442, %v2824
  %v2826 = vsel %vm2528, %v2825, %v2821
  %v2827 = vlaneseq
  %v2828 = vshrl.u32 %v2827, 7
  %v2829 = vsub.s32 %v2530, %v2828
  %v2830 = vrot.slane %v2444, %v2829
  %v2831 = vsel %vm2535, %v2830, %v2826
  %v2832 = vlaneseq
  %v2833 = vshrl.u32 %v2832, 7
  %v2834 = vsub.s32 %v2537, %v2833
  %v2835 = vrot.slane %v2446, %v2834
  %v2836 = vsel %vm2542, %v2835, %v2831
  %v2837 = vlaneseq
  %v2838 = vshrl.u32 %v2837, 7
  %v2839 = vsub.s32 %v2544, %v2838
  %v2840 = vrot.slane %v2448, %v2839
  %v2841 = vsel %vm2549, %v2840, %v2836
  %v2842 = vlaneseq
  %v2843 = vshrl.u32 %v2842, 7
  %v2844 = vsub.s32 %v2551, %v2843
  %v2845 = vrot.slane %v2450, %v2844
  %v2846 = vsel %vm2556, %v2845, %v2841
  %v2847 = vlaneseq
  %v2848 = vshrl.u32 %v2847, 7
  %v2849 = vsub.s32 %v2558, %v2848
  %v2850 = vrot.slane %v2452, %v2849
  %v2851 = vsel %vm2563, %v2850, %v2846
  %v2852 = vlaneseq
  %v2853 = vshrl.u32 %v2852, 7
  %v2854 = vsub.s32 %v2565, %v2853
  %v2855 = vrot.slane %v2454, %v2854
  %v2856 = vsel %vm2570, %v2855, %v2851
  %v2857 = vlaneseq
  %v2858 = vshrl.u32 %v2857, 7
  %v2859 = vsub.s32 %v2572, %v2858
  %v2860 = vrot.slane %v2456, %v2859
  %v2861 = vsel %vm2577, %v2860, %v2856
  %v2862 = vlaneseq
  %v2863 = vshrl.u32 %v2862, 7
  %v2864 = vsub.s32 %v2579, %v2863
  %v2865 = vrot.slane %v2458, %v2864
  %v2866 = vsel %vm2584, %v2865, %v2861
  %v2867 = vlaneseq
  %v2868 = vshrl.u32 %v2867, 7
  %v2869 = vsub.s32 %v2586, %v2868
  %v2870 = vrot.slane %v2460, %v2869
  %v2871 = vsel %vm2591, %v2870, %v2866
  %v2872 = vlaneseq
  %v2873 = vshrl.u32 %v2872, 7
  %v2874 = vsub.s32 %v2593, %v2873
  %v2875 = vrot.slane %v2462, %v2874
  %v2876 = vsel %vm2598, %v2875, %v2871
  %v2877 = vlaneseq
  %v2878 = vshrl.u32 %v2877, 7
  %v2879 = vsub.s32 %v2600, %v2878
  %v2880 = vrot.slane %v2464, %v2879
  %v2881 = vsel %vm2605, %v2880, %v2876
  %v2882 = vlaneseq
  %v2883 = vshrl.u32 %v2882, 7
  %v2884 = vsub.s32 %v2607, %v2883
  %v2885 = vrot.slane %v2466, %v2884
  %v2886 = vsel %vm2612, %v2885, %v2881
  %v2887 = vlaneseq
  %v2888 = vshrl.u32 %v2887, 7
  %v2889 = vsub.s32 %v2614, %v2888
  %v2890 = vrot.slane %v2468, %v2889
  %v2891 = vsel %vm2619, %v2890, %v2886
  %vm2894 = vcmask 1040384
  %v2895 = vsel %vm2894, %v2473, %v2620
  %v2896 = vsel %vm2894, %v2477, %v2699
  %vm2897 = vcmask 1041408
  %v2898 = vsel %vm2897, %v2895, %v2812
  %v2899 = vsel %vm2897, %v2896, %v2891
  %vm2900 = vcmask 1042432
  %v2901 = vsel %vm2900, %v2898, 0.0
  %v2902 = vsel %vm2900, %v2899, 0.0
  %2903 = vst [vmem:[%s1] sm:$0xff] %v2901
  %2904 = vst [vmem:[%s1 + $0x8] sm:$0xff] %v2902
  // Predicated region
  $region6: #{proposal_layer_forward.1} parent=0 // pred_check
    _
  $region7: #{proposal_layer_forward.1} parent=0 // pred_check_branch
    %2906 = sbr.rel (0) target = $region9
  $region8: #{proposal_layer_forward.1} parent=0 // pred_region
    _
  $region9: #{proposal_layer_forward.1} parent=0 // pred_fallthru
    _
  // Predicated region
  $region10: #{proposal_layer_forward.1} parent=0 // pred_check
    _
  $region11: #{proposal_layer_forward.1} parent=0 // pred_check_branch
    %2908 = sbr.rel (0) target = $region13
  $region12: #{proposal_layer_forward.1} parent=0 // pred_region
    _
  $region13: #{proposal_layer_forward.1} parent=0 // pred_fallthru
    _

</llo_original>
